<compile_context>
chip_gen: v7x
topology: tpu7x:2x2x1
jax: 0.10.0
libtpu: 0.0.40
codegen_flags: <defaults>
</compile_context>

<pallas_src>
import numpy as np
import jax
import jax.numpy as jnp
from jax.experimental import pallas as pl
from jax.experimental.pallas import tpu as pltpu

N_BATCH = 2
L_IN = 187              # input length (so flatten size == 1440 == 32*45)
L1 = L_IN - 2           # 185, conv1 output length
P1 = L1 // 2            # 92,  pool1 output length
L2 = P1 - 2             # 90,  conv2 output length
P2 = L2 // 2            # 45,  pool2 output length
NUM_CLASSES = 5
HIDDEN = 500
HID_PAD = 512           # hidden padded to a multiple of 128 lanes
FLAT = 32 * P2          # 1440
FLAT_PAD = 1536         # flatten dim padded to 3 * 512 (lane aligned chunks)
CHUNKS = 3              # fc1 weight is streamed/pipelined in 3 K-chunks
CHUNK_K = FLAT_PAD // CHUNKS    # 512
T_PER_CHUNK = CHUNK_K // 32     # 16 pooled time steps per chunk
NEG_BIG = -1e30         # pad value for fc1 bias -> exp() underflows to 0


def net_kernel(x_ref, w1t_ref, b1_ref, w2cat_ref, b2_ref,
               w3_ref, fb1_ref, w4_ref, fb2_ref, o_ref,
               c1_scr, c2_scr, p2_scr, feat_scr, acc_scr):
    """Grid = (CHUNKS,): step i consumes K-chunk i of the bf16 fc1 weight.

    x_ref     : (N, 187, 1)    time-major input            (pinned, all steps)
    w1t_ref   : (3, 16)        w1t[k, c] = conv1_w[c, 0, k]
    b1_ref    : (1, 16)
    w2cat_ref : (48, 32)       w2cat[k*16+ci, co] = conv2_w[co, ci, k]
    b2_ref    : (1, 32)
    w3_ref    : (512, 512)     bf16 chunk i of the (1536,512) fc1 weight
    fb1_ref   : (1, 512)       fc1 bias, padded with -1e30
    w4_ref    : (512, 5)       fc2_w.T, zero-padded rows
    fb2_ref   : (1, 5)
    o_ref     : (N, 5)
    """
    i = pl.program_id(0)
    n_batch = x_ref.shape[0]

    # ---- step 0: conv/pool feature extraction + accumulator init ----------
    @pl.when(i == 0)
    def _():
        acc_scr[...] = jnp.zeros_like(acc_scr)

        for n in range(n_batch):
            # layer1: Conv1d(1->16, k=3) + ReLU
            c1 = x_ref[n, 0:L1, :] * w1t_ref[0:1, :]
            c1 = c1 + x_ref[n, 1:1 + L1, :] * w1t_ref[1:2, :]
            c1 = c1 + x_ref[n, 2:2 + L1, :] * w1t_ref[2:3, :]
            c1_scr[...] = jnp.maximum(c1 + b1_ref[...], 0.0)          # (185,16)
            # MaxPool1d(2): pairs (2t, 2t+1), trailing odd element dropped
            p1 = jnp.maximum(c1_scr[pl.ds(0, P1, stride=2), :],
                             c1_scr[pl.ds(1, P1, stride=2), :])       # (92,16)

            # layer2: Conv1d(16->32, k=3) as ONE im2col matmul + ReLU
            p1cat = jnp.concatenate(
                [p1[0:L2, :], p1[1:L2 + 1, :], p1[2:L2 + 2, :]], axis=1)  # (90,48)
            c2 = jnp.dot(p1cat, w2cat_ref[...],
                         preferred_element_type=jnp.float32)          # (90,32)
            c2_scr[...] = jnp.maximum(c2 + b2_ref[...], 0.0)
            # MaxPool1d(2): sample n occupies rows [n*45, n*45+45)
            p2_scr[pl.ds(n * P2, P2), :] = jnp.maximum(
                c2_scr[pl.ds(0, P2, stride=2), :],
                c2_scr[pl.ds(1, P2, stride=2), :])                    # (45,32)

        # Flatten to feat[n, t*32+c] (matches pre-permuted w3 row order),
        # split into the CHUNKS K-chunks consumed by the pipelined fc1 dots.
        for t in range(P2):
            c, r = divmod(t, T_PER_CHUNK)
            feat_scr[c, :, pl.ds(r * 32, 32)] = \
                p2_scr[pl.ds(t, n_batch, stride=P2), :]
        # zero the padded tail of the last chunk (w3 pad rows are zero too,
        # but uninitialized VMEM could hold NaNs)
        pad_lo = (P2 - (CHUNKS - 1) * T_PER_CHUNK) * 32                # 416
        feat_scr[CHUNKS - 1, :, pl.ds(pad_lo, CHUNK_K - pad_lo)] = jnp.zeros(
            (n_batch, CHUNK_K - pad_lo), jnp.float32)

    # ---- every step: one wide-K fc1 chunk (bf16 weights, f32 accumulate) ---
    lhs = feat_scr[i].astype(jnp.bfloat16)                             # (N,512)
    acc_scr[...] += jnp.dot(lhs, w3_ref[...],
                            preferred_element_type=jnp.float32)        # (N,512)

    # ---- last step: bias + softmax(dim=1) + fc2 ----------------------------
    @pl.when(i == pl.num_programs(0) - 1)
    def _():
        h = acc_scr[...] + fb1_ref[...]                                # (N,512)
        # padded columns contribute exp(-1e30 - m) == 0 exactly
        m = jnp.max(h, axis=-1, keepdims=True)
        e = jnp.exp(h - m)
        s = e * pl.reciprocal(jnp.sum(e, axis=-1, keepdims=True), approx=True)
        o_ref[...] = jnp.dot(s, w4_ref[...],
                             preferred_element_type=jnp.float32) + fb2_ref[...]


def prepare_params(params):
    """One-time weight permutation / padding / quantization (off the fwd path)."""
    conv1_w, conv1_b, conv2_w, conv2_b, fc1_w, fc1_b, fc2_w, fc2_b = params
    w1t = jnp.transpose(conv1_w[:, 0, :])                             # (3,16)
    b1 = conv1_b.reshape(1, 16)
    w2cat = jnp.transpose(conv2_w, (2, 1, 0)).reshape(3 * 16, 32)     # (48,32)
    b2 = conv2_b.reshape(1, 32)
    # fc1: PyTorch flatten index is c*45 + t; kernel produces t*32 + c.
    w3 = jnp.transpose(fc1_w.reshape(HIDDEN, 32, P2), (2, 1, 0))      # (45,32,500)
    w3 = w3.reshape(FLAT, HIDDEN)                                     # (1440,500)
    w3 = jnp.pad(w3, ((0, FLAT_PAD - FLAT), (0, HID_PAD - HIDDEN)))   # (1536,512)
    w3 = w3.astype(jnp.bfloat16)        # dominant HBM stream stored in bf16
    fb1 = jnp.pad(fc1_b, (0, HID_PAD - HIDDEN),
                  constant_values=NEG_BIG).reshape(1, HID_PAD)
    w4 = jnp.pad(jnp.transpose(fc2_w), ((0, HID_PAD - HIDDEN), (0, 0)))  # (512,5)
    fb2 = fc2_b.reshape(1, NUM_CLASSES)
    return w1t, b1, w2cat, b2, w3, fb1, w4, fb2


@jax.jit
def net_forward(x, prepared):
    """x: (N, 1, 187) float32 (PyTorch NCL).  Returns (N, 5) logits."""
    w1t, b1, w2cat, b2, w3, fb1, w4, fb2 = prepared
    n = x.shape[0]
    x_tlc = x.reshape(n, L_IN, 1)       # NCL with C=1 -> time-major (relabel)

    pin2 = lambda i: (0, 0)
    pin3 = lambda i: (0, 0, 0)

    flops = 2 * n * (L1 * 3 * 16 + L2 * 48 * 32
                     + FLAT_PAD * HID_PAD + HID_PAD * NUM_CLASSES)
    bytes_accessed = (2 * FLAT_PAD * HID_PAD                 # bf16 fc1 weight
                      + 4 * (n * L_IN + 3 * 16 + 16 + 48 * 32 + 32
                             + HID_PAD + HID_PAD * NUM_CLASSES + NUM_CLASSES
                             + n * NUM_CLASSES))

    return pl.pallas_call(
        net_kernel,
        out_shape=jax.ShapeDtypeStruct((n, NUM_CLASSES), jnp.float32),
        grid=(CHUNKS,),
        in_specs=[
            pl.BlockSpec((n, L_IN, 1), pin3),                 # x (pinned)
            pl.BlockSpec((3, 16), pin2),                      # w1t
            pl.BlockSpec((1, 16), pin2),                      # b1
            pl.BlockSpec((3 * 16, 32), pin2),                 # w2cat
            pl.BlockSpec((1, 32), pin2),                      # b2
            pl.BlockSpec((CHUNK_K, HID_PAD), lambda i: (i, 0)),  # w3 (pipelined)
            pl.BlockSpec((1, HID_PAD), pin2),                 # fb1
            pl.BlockSpec((HID_PAD, NUM_CLASSES), pin2),       # w4
            pl.BlockSpec((1, NUM_CLASSES), pin2),             # fb2
        ],
        out_specs=pl.BlockSpec((n, NUM_CLASSES), pin2),
        scratch_shapes=[
            pltpu.VMEM((L1, 16), jnp.float32),                # conv1 activations
            pltpu.VMEM((L2, 32), jnp.float32),                # conv2 activations
            pltpu.VMEM((n * P2, 32), jnp.float32),            # pooled features
            pltpu.VMEM((CHUNKS, n, CHUNK_K), jnp.float32),    # flattened features
            pltpu.VMEM((n, HID_PAD), jnp.float32),            # fc1 accumulator
        ],
        compiler_params=pltpu.CompilerParams(
            dimension_semantics=("arbitrary",)),
        cost_estimate=pl.CostEstimate(flops=flops,
                                      transcendentals=n * HID_PAD,
                                      bytes_accessed=bytes_accessed),
    )(x_tlc, w1t, b1, w2cat, b2, w3, fb1, w4, fb2)


def reference_forward(x, params):
    """Pure-JAX reference reproducing the PyTorch forward, for validation."""
    conv1_w, conv1_b, conv2_w, conv2_b, fc1_w, fc1_b, fc2_w, fc2_b = params
    n = x.shape[0]
    xp = jnp.stack([x[:, 0, k:k + L1] for k in range(3)], axis=-1)    # (N,185,3)
    c1 = jnp.einsum('ntk,ck->nct', xp, conv1_w[:, 0, :]) + conv1_b[None, :, None]
    c1 = jnp.maximum(c1, 0.0)
    p1 = jnp.max(c1[:, :, :2 * P1].reshape(n, 16, P1, 2), axis=-1)    # (N,16,92)
    pp = jnp.stack([p1[:, :, k:k + L2] for k in range(3)], axis=-1)   # (N,16,90,3)
    c2 = jnp.einsum('nitk,oik->not', pp, conv2_w) + conv2_b[None, :, None]
    c2 = jnp.maximum(c2, 0.0)
    p2 = jnp.max(c2.reshape(n, 32, P2, 2), axis=-1)                   # (N,32,45)
    flat = p2.reshape(n, FLAT)
    h = flat @ fc1_w.T + fc1_b
    s = jax.nn.softmax(h, axis=1)        # nn.Softmax() -> dim=1 for 2-D input
    return s @ fc2_w.T + fc2_b


if __name__ == "__main__":
    key = jax.random.PRNGKey(0)
    keys = jax.random.split(key, 9)

    def uniform(k, shape, fan_in):
        b = 1.0 / float(np.sqrt(fan_in))
        return jax.random.uniform(k, shape, jnp.float32, -b, b)

    # deterministic parameters (PyTorch-default-style uniform init)
    conv1_w = uniform(keys[1], (16, 1, 3), 1 * 3)
    conv1_b = uniform(keys[2], (16,), 1 * 3)
    conv2_w = uniform(keys[3], (32, 16, 3), 16 * 3)
    conv2_b = uniform(keys[4], (32,), 16 * 3)
    fc1_w = uniform(keys[5], (HIDDEN, FLAT), FLAT)
    fc1_b = uniform(keys[6], (HIDDEN,), FLAT)
    fc2_w = uniform(keys[7], (NUM_CLASSES, HIDDEN), HIDDEN)
    fc2_b = uniform(keys[8], (NUM_CLASSES,), HIDDEN)
    params = (conv1_w, conv1_b, conv2_w, conv2_b, fc1_w, fc1_b, fc2_w, fc2_b)

    # one-time weight permutation / padding / bf16 cast (not on the fwd path)
    prepared = prepare_params(params)
    prepared = jax.tree_util.tree_map(jax.block_until_ready, prepared)

    # example input: batch=2, 1 channel, 187-sample heartbeat trace (NCL)
    x = jax.random.normal(keys[0], (N_BATCH, 1, L_IN), jnp.float32)

    out = net_forward(x, prepared)
    jax.block_until_ready(out)
    assert out.shape == (N_BATCH, NUM_CLASSES)

    ref = reference_forward(x, params)
    np.testing.assert_allclose(np.asarray(out), np.asarray(ref),
                               rtol=1e-2, atol=1e-2)
    print("KERNEL_OK")
</pallas_src>

<mosaic_0001>
module attributes {stable_mosaic.version = 11 : i64} {
  func.func @net_kernel(%arg0: i32, %arg1: memref<2x187x1xf32, #tpu.memory_space<vmem>>, %arg2: memref<3x16xf32, #tpu.memory_space<vmem>>, %arg3: memref<1x16xf32, #tpu.memory_space<vmem>>, %arg4: memref<48x32xf32, #tpu.memory_space<vmem>>, %arg5: memref<1x32xf32, #tpu.memory_space<vmem>>, %arg6: memref<512x512xbf16, #tpu.memory_space<vmem>>, %arg7: memref<1x512xf32, #tpu.memory_space<vmem>>, %arg8: memref<512x5xf32, #tpu.memory_space<vmem>>, %arg9: memref<1x5xf32, #tpu.memory_space<vmem>>, %arg10: memref<2x5xf32, #tpu.memory_space<vmem>>, %arg11: memref<185x16xf32, #tpu.memory_space<vmem>>, %arg12: memref<90x32xf32, #tpu.memory_space<vmem>>, %arg13: memref<90x32xf32, #tpu.memory_space<vmem>>, %arg14: memref<3x2x512xf32, #tpu.memory_space<vmem>>, %arg15: memref<2x512xf32, #tpu.memory_space<vmem>>) attributes {dimension_semantics = [#tpu.dimension_semantics<arbitrary>], iteration_bounds = array<i64: 3>, scalar_prefetch = 0 : i64, scratch_operands = 5 : i64, tpu.core_type = #tpu.core_type<tc>, window_params = [{pipeline_mode = #tpu.pipeline_mode<synchronous>, transform_indices = @transform_0, window_bounds = array<i64: 2, 187, 1>}, {pipeline_mode = #tpu.pipeline_mode<synchronous>, transform_indices = @transform_1, window_bounds = array<i64: 3, 16>}, {pipeline_mode = #tpu.pipeline_mode<synchronous>, transform_indices = @transform_2, window_bounds = array<i64: 1, 16>}, {pipeline_mode = #tpu.pipeline_mode<synchronous>, transform_indices = @transform_3, window_bounds = array<i64: 48, 32>}, {pipeline_mode = #tpu.pipeline_mode<synchronous>, transform_indices = @transform_4, window_bounds = array<i64: 1, 32>}, {transform_indices = @transform_5, window_bounds = array<i64: 512, 512>}, {pipeline_mode = #tpu.pipeline_mode<synchronous>, transform_indices = @transform_6, window_bounds = array<i64: 1, 512>}, {pipeline_mode = #tpu.pipeline_mode<synchronous>, transform_indices = @transform_7, window_bounds = array<i64: 512, 5>}, {pipeline_mode = #tpu.pipeline_mode<synchronous>, transform_indices = @transform_8, window_bounds = array<i64: 1, 5>}, {pipeline_mode = #tpu.pipeline_mode<synchronous>, transform_indices = @transform_9, window_bounds = array<i64: 2, 5>}]} {
    %c0_i32 = arith.constant 0 : i32
    %0 = arith.cmpi eq, %arg0, %c0_i32 : i32
    %1 = arith.extui %0 : i1 to i32
    %c0_i32_0 = arith.constant 0 : i32
    %2 = arith.cmpi ne, %1, %c0_i32_0 : i32
    scf.if %2 {
      %cst_9 = arith.constant 0.000000e+00 : f32
      %15 = vector.broadcast %cst_9 : f32 to vector<2x512xf32>
      %c0_10 = arith.constant 0 : index
      %c0_11 = arith.constant 0 : index
      %16 = vector.load %arg15[%c0_10, %c0_11] : memref<2x512xf32, #tpu.memory_space<vmem>>, vector<2x512xf32>
      tpu.vector_store %arg15[%c0_10, %c0_11], %15 {strides = array<i32>} : memref<2x512xf32, #tpu.memory_space<vmem>>, vector<2x512xf32>,
      %c0_12 = arith.constant 0 : index
      %c0_13 = arith.constant 0 : index
      %c0_14 = arith.constant 0 : index
      %17 = vector.load %arg1[%c0_12, %c0_13, %c0_14] : memref<2x187x1xf32, #tpu.memory_space<vmem>>, vector<1x185x1xf32>
      %18 = vector.shape_cast %17 : vector<1x185x1xf32> to vector<185x1xf32>
      %c0_15 = arith.constant 0 : index
      %c0_16 = arith.constant 0 : index
      %19 = vector.load %arg2[%c0_15, %c0_16] : memref<3x16xf32, #tpu.memory_space<vmem>>, vector<1x16xf32>
      %20 = vector.broadcast %18 : vector<185x1xf32> to vector<185x16xf32>
      %21 = vector.broadcast %19 : vector<1x16xf32> to vector<185x16xf32>
      %22 = arith.mulf %20, %21 : vector<185x16xf32>
      %c0_17 = arith.constant 0 : index
      %c1 = arith.constant 1 : index
      %c0_18 = arith.constant 0 : index
      %23 = vector.load %arg1[%c0_17, %c1, %c0_18] : memref<2x187x1xf32, #tpu.memory_space<vmem>>, vector<1x185x1xf32>
      %24 = vector.shape_cast %23 : vector<1x185x1xf32> to vector<185x1xf32>
      %c1_19 = arith.constant 1 : index
      %c0_20 = arith.constant 0 : index
      %25 = vector.load %arg2[%c1_19, %c0_20] : memref<3x16xf32, #tpu.memory_space<vmem>>, vector<1x16xf32>
      %26 = vector.broadcast %24 : vector<185x1xf32> to vector<185x16xf32>
      %27 = vector.broadcast %25 : vector<1x16xf32> to vector<185x16xf32>
      %28 = arith.mulf %26, %27 : vector<185x16xf32>
      %29 = arith.addf %22, %28 : vector<185x16xf32>
      %c0_21 = arith.constant 0 : index
      %c2 = arith.constant 2 : index
      %c0_22 = arith.constant 0 : index
      %30 = vector.load %arg1[%c0_21, %c2, %c0_22] : memref<2x187x1xf32, #tpu.memory_space<vmem>>, vector<1x185x1xf32>
      %31 = vector.shape_cast %30 : vector<1x185x1xf32> to vector<185x1xf32>
      %c2_23 = arith.constant 2 : index
      %c0_24 = arith.constant 0 : index
      %32 = vector.load %arg2[%c2_23, %c0_24] : memref<3x16xf32, #tpu.memory_space<vmem>>, vector<1x16xf32>
      %33 = vector.broadcast %31 : vector<185x1xf32> to vector<185x16xf32>
      %34 = vector.broadcast %32 : vector<1x16xf32> to vector<185x16xf32>
      %35 = arith.mulf %33, %34 : vector<185x16xf32>
      %36 = arith.addf %29, %35 : vector<185x16xf32>
      %c0_25 = arith.constant 0 : index
      %c0_26 = arith.constant 0 : index
      %37 = vector.load %arg3[%c0_25, %c0_26] : memref<1x16xf32, #tpu.memory_space<vmem>>, vector<1x16xf32>
      %38 = vector.broadcast %37 : vector<1x16xf32> to vector<185x16xf32>
      %39 = arith.addf %36, %38 : vector<185x16xf32>
      %cst_27 = arith.constant 0.000000e+00 : f32
      %40 = vector.broadcast %cst_27 : f32 to vector<185x16xf32>
      %41 = arith.maximumf %39, %40 : vector<185x16xf32>
      %c0_28 = arith.constant 0 : index
      %c0_29 = arith.constant 0 : index
      %42 = vector.load %arg11[%c0_28, %c0_29] : memref<185x16xf32, #tpu.memory_space<vmem>>, vector<185x16xf32>
      tpu.vector_store %arg11[%c0_28, %c0_29], %41 {strides = array<i32>} : memref<185x16xf32, #tpu.memory_space<vmem>>, vector<185x16xf32>,
      %c0_30 = arith.constant 0 : index
      %c0_31 = arith.constant 0 : index
      %43 = tpu.strided_load %arg11[%c0_30, %c0_31] {strides = array<i32: 2, 1>} : memref<185x16xf32, #tpu.memory_space<vmem>>, vector<92x16xf32>
      %c1_32 = arith.constant 1 : index
      %c0_33 = arith.constant 0 : index
      %44 = tpu.strided_load %arg11[%c1_32, %c0_33] {strides = array<i32: 2, 1>} : memref<185x16xf32, #tpu.memory_space<vmem>>, vector<92x16xf32>
      %45 = arith.maximumf %43, %44 : vector<92x16xf32>
      %46 = vector.extract_strided_slice %45 {offsets = [0, 0], sizes = [90, 16], strides = [1, 1]} : vector<92x16xf32> to vector<90x16xf32>
      %47 = vector.extract_strided_slice %45 {offsets = [1, 0], sizes = [90, 16], strides = [1, 1]} : vector<92x16xf32> to vector<90x16xf32>
      %48 = vector.extract_strided_slice %45 {offsets = [2, 0], sizes = [90, 16], strides = [1, 1]} : vector<92x16xf32> to vector<90x16xf32>
      %49 = tpu.concatenate %46, %47, %48 in 1 : vector<90x16xf32>, vector<90x16xf32>, vector<90x16xf32> -> vector<90x48xf32>
      %c0_34 = arith.constant 0 : index
      %c0_35 = arith.constant 0 : index
      %50 = vector.load %arg4[%c0_34, %c0_35] : memref<48x32xf32, #tpu.memory_space<vmem>>, vector<48x32xf32>
      %cst_36 = arith.constant dense<0.000000e+00> : vector<90x32xf32>
      %51 = tpu.matmul %49, %50, %cst_36 {dimension_numbers = #tpu.dot_dimension_numbers<[1], [0], [0], [1], [0, 0, 1, 1], [], []>} : vector<90x48xf32>, vector<48x32xf32>, vector<90x32xf32> -> vector<90x32xf32>
      %c0_37 = arith.constant 0 : index
      %c0_38 = arith.constant 0 : index
      %52 = vector.load %arg5[%c0_37, %c0_38] : memref<1x32xf32, #tpu.memory_space<vmem>>, vector<1x32xf32>
      %53 = vector.broadcast %52 : vector<1x32xf32> to vector<90x32xf32>
      %54 = arith.addf %51, %53 : vector<90x32xf32>
      %cst_39 = arith.constant 0.000000e+00 : f32
      %55 = vector.broadcast %cst_39 : f32 to vector<90x32xf32>
      %56 = arith.maximumf %54, %55 : vector<90x32xf32>
      %c0_40 = arith.constant 0 : index
      %c0_41 = arith.constant 0 : index
      %57 = vector.load %arg12[%c0_40, %c0_41] : memref<90x32xf32, #tpu.memory_space<vmem>>, vector<90x32xf32>
      tpu.vector_store %arg12[%c0_40, %c0_41], %56 {strides = array<i32>} : memref<90x32xf32, #tpu.memory_space<vmem>>, vector<90x32xf32>,
      %c0_42 = arith.constant 0 : index
      %c0_43 = arith.constant 0 : index
      %58 = tpu.strided_load %arg12[%c0_42, %c0_43] {strides = array<i32: 2, 1>} : memref<90x32xf32, #tpu.memory_space<vmem>>, vector<45x32xf32>
      %c1_44 = arith.constant 1 : index
      %c0_45 = arith.constant 0 : index
      %59 = tpu.strided_load %arg12[%c1_44, %c0_45] {strides = array<i32: 2, 1>} : memref<90x32xf32, #tpu.memory_space<vmem>>, vector<45x32xf32>
      %60 = arith.maximumf %58, %59 : vector<45x32xf32>
      %c0_46 = arith.constant 0 : index
      %c0_47 = arith.constant 0 : index
      %61 = vector.load %arg13[%c0_46, %c0_47] : memref<90x32xf32, #tpu.memory_space<vmem>>, vector<45x32xf32>
      tpu.vector_store %arg13[%c0_46, %c0_47], %60 {strides = array<i32>} : memref<90x32xf32, #tpu.memory_space<vmem>>, vector<45x32xf32>,
      %c1_48 = arith.constant 1 : index
      %c0_49 = arith.constant 0 : index
      %c0_50 = arith.constant 0 : index
      %62 = vector.load %arg1[%c1_48, %c0_49, %c0_50] : memref<2x187x1xf32, #tpu.memory_space<vmem>>, vector<1x185x1xf32>
      %63 = vector.shape_cast %62 : vector<1x185x1xf32> to vector<185x1xf32>
      %c0_51 = arith.constant 0 : index
      %c0_52 = arith.constant 0 : index
      %64 = vector.load %arg2[%c0_51, %c0_52] : memref<3x16xf32, #tpu.memory_space<vmem>>, vector<1x16xf32>
      %65 = vector.broadcast %63 : vector<185x1xf32> to vector<185x16xf32>
      %66 = vector.broadcast %64 : vector<1x16xf32> to vector<185x16xf32>
      %67 = arith.mulf %65, %66 : vector<185x16xf32>
      %c1_53 = arith.constant 1 : index
      %c1_54 = arith.constant 1 : index
      %c0_55 = arith.constant 0 : index
      %68 = vector.load %arg1[%c1_53, %c1_54, %c0_55] : memref<2x187x1xf32, #tpu.memory_space<vmem>>, vector<1x185x1xf32>
      %69 = vector.shape_cast %68 : vector<1x185x1xf32> to vector<185x1xf32>
      %c1_56 = arith.constant 1 : index
      %c0_57 = arith.constant 0 : index
      %70 = vector.load %arg2[%c1_56, %c0_57] : memref<3x16xf32, #tpu.memory_space<vmem>>, vector<1x16xf32>
      %71 = vector.broadcast %69 : vector<185x1xf32> to vector<185x16xf32>
      %72 = vector.broadcast %70 : vector<1x16xf32> to vector<185x16xf32>
      %73 = arith.mulf %71, %72 : vector<185x16xf32>
      %74 = arith.addf %67, %73 : vector<185x16xf32>
      %c1_58 = arith.constant 1 : index
      %c2_59 = arith.constant 2 : index
      %c0_60 = arith.constant 0 : index
      %75 = vector.load %arg1[%c1_58, %c2_59, %c0_60] : memref<2x187x1xf32, #tpu.memory_space<vmem>>, vector<1x185x1xf32>
      %76 = vector.shape_cast %75 : vector<1x185x1xf32> to vector<185x1xf32>
      %c2_61 = arith.constant 2 : index
      %c0_62 = arith.constant 0 : index
      %77 = vector.load %arg2[%c2_61, %c0_62] : memref<3x16xf32, #tpu.memory_space<vmem>>, vector<1x16xf32>
      %78 = vector.broadcast %76 : vector<185x1xf32> to vector<185x16xf32>
      %79 = vector.broadcast %77 : vector<1x16xf32> to vector<185x16xf32>
      %80 = arith.mulf %78, %79 : vector<185x16xf32>
      %81 = arith.addf %74, %80 : vector<185x16xf32>
      %c0_63 = arith.constant 0 : index
      %c0_64 = arith.constant 0 : index
      %82 = vector.load %arg3[%c0_63, %c0_64] : memref<1x16xf32, #tpu.memory_space<vmem>>, vector<1x16xf32>
      %83 = vector.broadcast %82 : vector<1x16xf32> to vector<185x16xf32>
      %84 = arith.addf %81, %83 : vector<185x16xf32>
      %cst_65 = arith.constant 0.000000e+00 : f32
      %85 = vector.broadcast %cst_65 : f32 to vector<185x16xf32>
      %86 = arith.maximumf %84, %85 : vector<185x16xf32>
      %c0_66 = arith.constant 0 : index
      %c0_67 = arith.constant 0 : index
      %87 = vector.load %arg11[%c0_66, %c0_67] : memref<185x16xf32, #tpu.memory_space<vmem>>, vector<185x16xf32>
      tpu.vector_store %arg11[%c0_66, %c0_67], %86 {strides = array<i32>} : memref<185x16xf32, #tpu.memory_space<vmem>>, vector<185x16xf32>,
      %c0_68 = arith.constant 0 : index
      %c0_69 = arith.constant 0 : index
      %88 = tpu.strided_load %arg11[%c0_68, %c0_69] {strides = array<i32: 2, 1>} : memref<185x16xf32, #tpu.memory_space<vmem>>, vector<92x16xf32>
      %c1_70 = arith.constant 1 : index
      %c0_71 = arith.constant 0 : index
      %89 = tpu.strided_load %arg11[%c1_70, %c0_71] {strides = array<i32: 2, 1>} : memref<185x16xf32, #tpu.memory_space<vmem>>, vector<92x16xf32>
      %90 = arith.maximumf %88, %89 : vector<92x16xf32>
      %91 = vector.extract_strided_slice %90 {offsets = [0, 0], sizes = [90, 16], strides = [1, 1]} : vector<92x16xf32> to vector<90x16xf32>
      %92 = vector.extract_strided_slice %90 {offsets = [1, 0], sizes = [90, 16], strides = [1, 1]} : vector<92x16xf32> to vector<90x16xf32>
      %93 = vector.extract_strided_slice %90 {offsets = [2, 0], sizes = [90, 16], strides = [1, 1]} : vector<92x16xf32> to vector<90x16xf32>
      %94 = tpu.concatenate %91, %92, %93 in 1 : vector<90x16xf32>, vector<90x16xf32>, vector<90x16xf32> -> vector<90x48xf32>
      %c0_72 = arith.constant 0 : index
      %c0_73 = arith.constant 0 : index
      %95 = vector.load %arg4[%c0_72, %c0_73] : memref<48x32xf32, #tpu.memory_space<vmem>>, vector<48x32xf32>
      %cst_74 = arith.constant dense<0.000000e+00> : vector<90x32xf32>
      %96 = tpu.matmul %94, %95, %cst_74 {dimension_numbers = #tpu.dot_dimension_numbers<[1], [0], [0], [1], [0, 0, 1, 1], [], []>} : vector<90x48xf32>, vector<48x32xf32>, vector<90x32xf32> -> vector<90x32xf32>
      %c0_75 = arith.constant 0 : index
      %c0_76 = arith.constant 0 : index
      %97 = vector.load %arg5[%c0_75, %c0_76] : memref<1x32xf32, #tpu.memory_space<vmem>>, vector<1x32xf32>
      %98 = vector.broadcast %97 : vector<1x32xf32> to vector<90x32xf32>
      %99 = arith.addf %96, %98 : vector<90x32xf32>
      %cst_77 = arith.constant 0.000000e+00 : f32
      %100 = vector.broadcast %cst_77 : f32 to vector<90x32xf32>
      %101 = arith.maximumf %99, %100 : vector<90x32xf32>
      %c0_78 = arith.constant 0 : index
      %c0_79 = arith.constant 0 : index
      %102 = vector.load %arg12[%c0_78, %c0_79] : memref<90x32xf32, #tpu.memory_space<vmem>>, vector<90x32xf32>
      tpu.vector_store %arg12[%c0_78, %c0_79], %101 {strides = array<i32>} : memref<90x32xf32, #tpu.memory_space<vmem>>, vector<90x32xf32>,
      %c0_80 = arith.constant 0 : index
      %c0_81 = arith.constant 0 : index
      %103 = tpu.strided_load %arg12[%c0_80, %c0_81] {strides = array<i32: 2, 1>} : memref<90x32xf32, #tpu.memory_space<vmem>>, vector<45x32xf32>
      %c1_82 = arith.constant 1 : index
      %c0_83 = arith.constant 0 : index
      %104 = tpu.strided_load %arg12[%c1_82, %c0_83] {strides = array<i32: 2, 1>} : memref<90x32xf32, #tpu.memory_space<vmem>>, vector<45x32xf32>
      %105 = arith.maximumf %103, %104 : vector<45x32xf32>
      %c45 = arith.constant 45 : index
      %c0_84 = arith.constant 0 : index
      %106 = vector.load %arg13[%c45, %c0_84] : memref<90x32xf32, #tpu.memory_space<vmem>>, vector<45x32xf32>
      tpu.vector_store %arg13[%c45, %c0_84], %105 {strides = array<i32>} : memref<90x32xf32, #tpu.memory_space<vmem>>, vector<45x32xf32>,
      %c0_85 = arith.constant 0 : index
      %c0_86 = arith.constant 0 : index
      %107 = tpu.strided_load %arg13[%c0_85, %c0_86] {strides = array<i32: 45, 1>} : memref<90x32xf32, #tpu.memory_space<vmem>>, vector<2x32xf32>
      %c0_87 = arith.constant 0 : index
      %c0_88 = arith.constant 0 : index
      %c0_89 = arith.constant 0 : index
      %108 = vector.load %arg14[%c0_87, %c0_88, %c0_89] : memref<3x2x512xf32, #tpu.memory_space<vmem>>, vector<1x2x32xf32>
      %109 = vector.shape_cast %108 : vector<1x2x32xf32> to vector<2x32xf32>
      %110 = vector.shape_cast %107 : vector<2x32xf32> to vector<1x2x32xf32>
      tpu.vector_store %arg14[%c0_87, %c0_88, %c0_89], %110 {strides = array<i32>} : memref<3x2x512xf32, #tpu.memory_space<vmem>>, vector<1x2x32xf32>,
      %c1_90 = arith.constant 1 : index
      %c0_91 = arith.constant 0 : index
      %111 = tpu.strided_load %arg13[%c1_90, %c0_91] {strides = array<i32: 45, 1>} : memref<90x32xf32, #tpu.memory_space<vmem>>, vector<2x32xf32>
      %c0_92 = arith.constant 0 : index
      %c0_93 = arith.constant 0 : index
      %c32 = arith.constant 32 : index
      %112 = vector.load %arg14[%c0_92, %c0_93, %c32] : memref<3x2x512xf32, #tpu.memory_space<vmem>>, vector<1x2x32xf32>
      %113 = vector.shape_cast %112 : vector<1x2x32xf32> to vector<2x32xf32>
      %114 = vector.shape_cast %111 : vector<2x32xf32> to vector<1x2x32xf32>
      tpu.vector_store %arg14[%c0_92, %c0_93, %c32], %114 {strides = array<i32>} : memref<3x2x512xf32, #tpu.memory_space<vmem>>, vector<1x2x32xf32>,
      %c2_94 = arith.constant 2 : index
      %c0_95 = arith.constant 0 : index
      %115 = tpu.strided_load %arg13[%c2_94, %c0_95] {strides = array<i32: 45, 1>} : memref<90x32xf32, #tpu.memory_space<vmem>>, vector<2x32xf32>
      %c0_96 = arith.constant 0 : index
      %c0_97 = arith.constant 0 : index
      %c64 = arith.constant 64 : index
      %116 = vector.load %arg14[%c0_96, %c0_97, %c64] : memref<3x2x512xf32, #tpu.memory_space<vmem>>, vector<1x2x32xf32>
      %117 = vector.shape_cast %116 : vector<1x2x32xf32> to vector<2x32xf32>
      %118 = vector.shape_cast %115 : vector<2x32xf32> to vector<1x2x32xf32>
      tpu.vector_store %arg14[%c0_96, %c0_97, %c64], %118 {strides = array<i32>} : memref<3x2x512xf32, #tpu.memory_space<vmem>>, vector<1x2x32xf32>,
      %c3 = arith.constant 3 : index
      %c0_98 = arith.constant 0 : index
      %119 = tpu.strided_load %arg13[%c3, %c0_98] {strides = array<i32: 45, 1>} : memref<90x32xf32, #tpu.memory_space<vmem>>, vector<2x32xf32>
      %c0_99 = arith.constant 0 : index
      %c0_100 = arith.constant 0 : index
      %c96 = arith.constant 96 : index
      %120 = vector.load %arg14[%c0_99, %c0_100, %c96] : memref<3x2x512xf32, #tpu.memory_space<vmem>>, vector<1x2x32xf32>
      %121 = vector.shape_cast %120 : vector<1x2x32xf32> to vector<2x32xf32>
      %122 = vector.shape_cast %119 : vector<2x32xf32> to vector<1x2x32xf32>
      tpu.vector_store %arg14[%c0_99, %c0_100, %c96], %122 {strides = array<i32>} : memref<3x2x512xf32, #tpu.memory_space<vmem>>, vector<1x2x32xf32>,
      %c4 = arith.constant 4 : index
      %c0_101 = arith.constant 0 : index
      %123 = tpu.strided_load %arg13[%c4, %c0_101] {strides = array<i32: 45, 1>} : memref<90x32xf32, #tpu.memory_space<vmem>>, vector<2x32xf32>
      %c0_102 = arith.constant 0 : index
      %c0_103 = arith.constant 0 : index
      %c128 = arith.constant 128 : index
      %124 = vector.load %arg14[%c0_102, %c0_103, %c128] : memref<3x2x512xf32, #tpu.memory_space<vmem>>, vector<1x2x32xf32>
      %125 = vector.shape_cast %124 : vector<1x2x32xf32> to vector<2x32xf32>
      %126 = vector.shape_cast %123 : vector<2x32xf32> to vector<1x2x32xf32>
      tpu.vector_store %arg14[%c0_102, %c0_103, %c128], %126 {strides = array<i32>} : memref<3x2x512xf32, #tpu.memory_space<vmem>>, vector<1x2x32xf32>,
      %c5 = arith.constant 5 : index
      %c0_104 = arith.constant 0 : index
      %127 = tpu.strided_load %arg13[%c5, %c0_104] {strides = array<i32: 45, 1>} : memref<90x32xf32, #tpu.memory_space<vmem>>, vector<2x32xf32>
      %c0_105 = arith.constant 0 : index
      %c0_106 = arith.constant 0 : index
      %c160 = arith.constant 160 : index
      %128 = vector.load %arg14[%c0_105, %c0_106, %c160] : memref<3x2x512xf32, #tpu.memory_space<vmem>>, vector<1x2x32xf32>
      %129 = vector.shape_cast %128 : vector<1x2x32xf32> to vector<2x32xf32>
      %130 = vector.shape_cast %127 : vector<2x32xf32> to vector<1x2x32xf32>
      tpu.vector_store %arg14[%c0_105, %c0_106, %c160], %130 {strides = array<i32>} : memref<3x2x512xf32, #tpu.memory_space<vmem>>, vector<1x2x32xf32>,
      %c6 = arith.constant 6 : index
      %c0_107 = arith.constant 0 : index
      %131 = tpu.strided_load %arg13[%c6, %c0_107] {strides = array<i32: 45, 1>} : memref<90x32xf32, #tpu.memory_space<vmem>>, vector<2x32xf32>
      %c0_108 = arith.constant 0 : index
      %c0_109 = arith.constant 0 : index
      %c192 = arith.constant 192 : index
      %132 = vector.load %arg14[%c0_108, %c0_109, %c192] : memref<3x2x512xf32, #tpu.memory_space<vmem>>, vector<1x2x32xf32>
      %133 = vector.shape_cast %132 : vector<1x2x32xf32> to vector<2x32xf32>
      %134 = vector.shape_cast %131 : vector<2x32xf32> to vector<1x2x32xf32>
      tpu.vector_store %arg14[%c0_108, %c0_109, %c192], %134 {strides = array<i32>} : memref<3x2x512xf32, #tpu.memory_space<vmem>>, vector<1x2x32xf32>,
      %c7 = arith.constant 7 : index
      %c0_110 = arith.constant 0 : index
      %135 = tpu.strided_load %arg13[%c7, %c0_110] {strides = array<i32: 45, 1>} : memref<90x32xf32, #tpu.memory_space<vmem>>, vector<2x32xf32>
      %c0_111 = arith.constant 0 : index
      %c0_112 = arith.constant 0 : index
      %c224 = arith.constant 224 : index
      %136 = vector.load %arg14[%c0_111, %c0_112, %c224] : memref<3x2x512xf32, #tpu.memory_space<vmem>>, vector<1x2x32xf32>
      %137 = vector.shape_cast %136 : vector<1x2x32xf32> to vector<2x32xf32>
      %138 = vector.shape_cast %135 : vector<2x32xf32> to vector<1x2x32xf32>
      tpu.vector_store %arg14[%c0_111, %c0_112, %c224], %138 {strides = array<i32>} : memref<3x2x512xf32, #tpu.memory_space<vmem>>, vector<1x2x32xf32>,
      %c8 = arith.constant 8 : index
      %c0_113 = arith.constant 0 : index
      %139 = tpu.strided_load %arg13[%c8, %c0_113] {strides = array<i32: 45, 1>} : memref<90x32xf32, #tpu.memory_space<vmem>>, vector<2x32xf32>
      %c0_114 = arith.constant 0 : index
      %c0_115 = arith.constant 0 : index
      %c256 = arith.constant 256 : index
      %140 = vector.load %arg14[%c0_114, %c0_115, %c256] : memref<3x2x512xf32, #tpu.memory_space<vmem>>, vector<1x2x32xf32>
      %141 = vector.shape_cast %140 : vector<1x2x32xf32> to vector<2x32xf32>
      %142 = vector.shape_cast %139 : vector<2x32xf32> to vector<1x2x32xf32>
      tpu.vector_store %arg14[%c0_114, %c0_115, %c256], %142 {strides = array<i32>} : memref<3x2x512xf32, #tpu.memory_space<vmem>>, vector<1x2x32xf32>,
      %c9 = arith.constant 9 : index
      %c0_116 = arith.constant 0 : index
      %143 = tpu.strided_load %arg13[%c9, %c0_116] {strides = array<i32: 45, 1>} : memref<90x32xf32, #tpu.memory_space<vmem>>, vector<2x32xf32>
      %c0_117 = arith.constant 0 : index
      %c0_118 = arith.constant 0 : index
      %c288 = arith.constant 288 : index
      %144 = vector.load %arg14[%c0_117, %c0_118, %c288] : memref<3x2x512xf32, #tpu.memory_space<vmem>>, vector<1x2x32xf32>
      %145 = vector.shape_cast %144 : vector<1x2x32xf32> to vector<2x32xf32>
      %146 = vector.shape_cast %143 : vector<2x32xf32> to vector<1x2x32xf32>
      tpu.vector_store %arg14[%c0_117, %c0_118, %c288], %146 {strides = array<i32>} : memref<3x2x512xf32, #tpu.memory_space<vmem>>, vector<1x2x32xf32>,
      %c10 = arith.constant 10 : index
      %c0_119 = arith.constant 0 : index
      %147 = tpu.strided_load %arg13[%c10, %c0_119] {strides = array<i32: 45, 1>} : memref<90x32xf32, #tpu.memory_space<vmem>>, vector<2x32xf32>
      %c0_120 = arith.constant 0 : index
      %c0_121 = arith.constant 0 : index
      %c320 = arith.constant 320 : index
      %148 = vector.load %arg14[%c0_120, %c0_121, %c320] : memref<3x2x512xf32, #tpu.memory_space<vmem>>, vector<1x2x32xf32>
      %149 = vector.shape_cast %148 : vector<1x2x32xf32> to vector<2x32xf32>
      %150 = vector.shape_cast %147 : vector<2x32xf32> to vector<1x2x32xf32>
      tpu.vector_store %arg14[%c0_120, %c0_121, %c320], %150 {strides = array<i32>} : memref<3x2x512xf32, #tpu.memory_space<vmem>>, vector<1x2x32xf32>,
      %c11 = arith.constant 11 : index
      %c0_122 = arith.constant 0 : index
      %151 = tpu.strided_load %arg13[%c11, %c0_122] {strides = array<i32: 45, 1>} : memref<90x32xf32, #tpu.memory_space<vmem>>, vector<2x32xf32>
      %c0_123 = arith.constant 0 : index
      %c0_124 = arith.constant 0 : index
      %c352 = arith.constant 352 : index
      %152 = vector.load %arg14[%c0_123, %c0_124, %c352] : memref<3x2x512xf32, #tpu.memory_space<vmem>>, vector<1x2x32xf32>
      %153 = vector.shape_cast %152 : vector<1x2x32xf32> to vector<2x32xf32>
      %154 = vector.shape_cast %151 : vector<2x32xf32> to vector<1x2x32xf32>
      tpu.vector_store %arg14[%c0_123, %c0_124, %c352], %154 {strides = array<i32>} : memref<3x2x512xf32, #tpu.memory_space<vmem>>, vector<1x2x32xf32>,
      %c12 = arith.constant 12 : index
      %c0_125 = arith.constant 0 : index
      %155 = tpu.strided_load %arg13[%c12, %c0_125] {strides = array<i32: 45, 1>} : memref<90x32xf32, #tpu.memory_space<vmem>>, vector<2x32xf32>
      %c0_126 = arith.constant 0 : index
      %c0_127 = arith.constant 0 : index
      %c384 = arith.constant 384 : index
      %156 = vector.load %arg14[%c0_126, %c0_127, %c384] : memref<3x2x512xf32, #tpu.memory_space<vmem>>, vector<1x2x32xf32>
      %157 = vector.shape_cast %156 : vector<1x2x32xf32> to vector<2x32xf32>
      %158 = vector.shape_cast %155 : vector<2x32xf32> to vector<1x2x32xf32>
      tpu.vector_store %arg14[%c0_126, %c0_127, %c384], %158 {strides = array<i32>} : memref<3x2x512xf32, #tpu.memory_space<vmem>>, vector<1x2x32xf32>,
      %c13 = arith.constant 13 : index
      %c0_128 = arith.constant 0 : index
      %159 = tpu.strided_load %arg13[%c13, %c0_128] {strides = array<i32: 45, 1>} : memref<90x32xf32, #tpu.memory_space<vmem>>, vector<2x32xf32>
      %c0_129 = arith.constant 0 : index
      %c0_130 = arith.constant 0 : index
      %c416 = arith.constant 416 : index
      %160 = vector.load %arg14[%c0_129, %c0_130, %c416] : memref<3x2x512xf32, #tpu.memory_space<vmem>>, vector<1x2x32xf32>
      %161 = vector.shape_cast %160 : vector<1x2x32xf32> to vector<2x32xf32>
      %162 = vector.shape_cast %159 : vector<2x32xf32> to vector<1x2x32xf32>
      tpu.vector_store %arg14[%c0_129, %c0_130, %c416], %162 {strides = array<i32>} : memref<3x2x512xf32, #tpu.memory_space<vmem>>, vector<1x2x32xf32>,
      %c14 = arith.constant 14 : index
      %c0_131 = arith.constant 0 : index
      %163 = tpu.strided_load %arg13[%c14, %c0_131] {strides = array<i32: 45, 1>} : memref<90x32xf32, #tpu.memory_space<vmem>>, vector<2x32xf32>
      %c0_132 = arith.constant 0 : index
      %c0_133 = arith.constant 0 : index
      %c448 = arith.constant 448 : index
      %164 = vector.load %arg14[%c0_132, %c0_133, %c448] : memref<3x2x512xf32, #tpu.memory_space<vmem>>, vector<1x2x32xf32>
      %165 = vector.shape_cast %164 : vector<1x2x32xf32> to vector<2x32xf32>
      %166 = vector.shape_cast %163 : vector<2x32xf32> to vector<1x2x32xf32>
      tpu.vector_store %arg14[%c0_132, %c0_133, %c448], %166 {strides = array<i32>} : memref<3x2x512xf32, #tpu.memory_space<vmem>>, vector<1x2x32xf32>,
      %c15 = arith.constant 15 : index
      %c0_134 = arith.constant 0 : index
      %167 = tpu.strided_load %arg13[%c15, %c0_134] {strides = array<i32: 45, 1>} : memref<90x32xf32, #tpu.memory_space<vmem>>, vector<2x32xf32>
      %c0_135 = arith.constant 0 : index
      %c0_136 = arith.constant 0 : index
      %c480 = arith.constant 480 : index
      %168 = vector.load %arg14[%c0_135, %c0_136, %c480] : memref<3x2x512xf32, #tpu.memory_space<vmem>>, vector<1x2x32xf32>
      %169 = vector.shape_cast %168 : vector<1x2x32xf32> to vector<2x32xf32>
      %170 = vector.shape_cast %167 : vector<2x32xf32> to vector<1x2x32xf32>
      tpu.vector_store %arg14[%c0_135, %c0_136, %c480], %170 {strides = array<i32>} : memref<3x2x512xf32, #tpu.memory_space<vmem>>, vector<1x2x32xf32>,
      %c16 = arith.constant 16 : index
      %c0_137 = arith.constant 0 : index
      %171 = tpu.strided_load %arg13[%c16, %c0_137] {strides = array<i32: 45, 1>} : memref<90x32xf32, #tpu.memory_space<vmem>>, vector<2x32xf32>
      %c1_138 = arith.constant 1 : index
      %c0_139 = arith.constant 0 : index
      %c0_140 = arith.constant 0 : index
      %172 = vector.load %arg14[%c1_138, %c0_139, %c0_140] : memref<3x2x512xf32, #tpu.memory_space<vmem>>, vector<1x2x32xf32>
      %173 = vector.shape_cast %172 : vector<1x2x32xf32> to vector<2x32xf32>
      %174 = vector.shape_cast %171 : vector<2x32xf32> to vector<1x2x32xf32>
      tpu.vector_store %arg14[%c1_138, %c0_139, %c0_140], %174 {strides = array<i32>} : memref<3x2x512xf32, #tpu.memory_space<vmem>>, vector<1x2x32xf32>,
      %c17 = arith.constant 17 : index
      %c0_141 = arith.constant 0 : index
      %175 = tpu.strided_load %arg13[%c17, %c0_141] {strides = array<i32: 45, 1>} : memref<90x32xf32, #tpu.memory_space<vmem>>, vector<2x32xf32>
      %c1_142 = arith.constant 1 : index
      %c0_143 = arith.constant 0 : index
      %c32_144 = arith.constant 32 : index
      %176 = vector.load %arg14[%c1_142, %c0_143, %c32_144] : memref<3x2x512xf32, #tpu.memory_space<vmem>>, vector<1x2x32xf32>
      %177 = vector.shape_cast %176 : vector<1x2x32xf32> to vector<2x32xf32>
      %178 = vector.shape_cast %175 : vector<2x32xf32> to vector<1x2x32xf32>
      tpu.vector_store %arg14[%c1_142, %c0_143, %c32_144], %178 {strides = array<i32>} : memref<3x2x512xf32, #tpu.memory_space<vmem>>, vector<1x2x32xf32>,
      %c18 = arith.constant 18 : index
      %c0_145 = arith.constant 0 : index
      %179 = tpu.strided_load %arg13[%c18, %c0_145] {strides = array<i32: 45, 1>} : memref<90x32xf32, #tpu.memory_space<vmem>>, vector<2x32xf32>
      %c1_146 = arith.constant 1 : index
      %c0_147 = arith.constant 0 : index
      %c64_148 = arith.constant 64 : index
      %180 = vector.load %arg14[%c1_146, %c0_147, %c64_148] : memref<3x2x512xf32, #tpu.memory_space<vmem>>, vector<1x2x32xf32>
      %181 = vector.shape_cast %180 : vector<1x2x32xf32> to vector<2x32xf32>
      %182 = vector.shape_cast %179 : vector<2x32xf32> to vector<1x2x32xf32>
      tpu.vector_store %arg14[%c1_146, %c0_147, %c64_148], %182 {strides = array<i32>} : memref<3x2x512xf32, #tpu.memory_space<vmem>>, vector<1x2x32xf32>,
      %c19 = arith.constant 19 : index
      %c0_149 = arith.constant 0 : index
      %183 = tpu.strided_load %arg13[%c19, %c0_149] {strides = array<i32: 45, 1>} : memref<90x32xf32, #tpu.memory_space<vmem>>, vector<2x32xf32>
      %c1_150 = arith.constant 1 : index
      %c0_151 = arith.constant 0 : index
      %c96_152 = arith.constant 96 : index
      %184 = vector.load %arg14[%c1_150, %c0_151, %c96_152] : memref<3x2x512xf32, #tpu.memory_space<vmem>>, vector<1x2x32xf32>
      %185 = vector.shape_cast %184 : vector<1x2x32xf32> to vector<2x32xf32>
      %186 = vector.shape_cast %183 : vector<2x32xf32> to vector<1x2x32xf32>
      tpu.vector_store %arg14[%c1_150, %c0_151, %c96_152], %186 {strides = array<i32>} : memref<3x2x512xf32, #tpu.memory_space<vmem>>, vector<1x2x32xf32>,
      %c20 = arith.constant 20 : index
      %c0_153 = arith.constant 0 : index
      %187 = tpu.strided_load %arg13[%c20, %c0_153] {strides = array<i32: 45, 1>} : memref<90x32xf32, #tpu.memory_space<vmem>>, vector<2x32xf32>
      %c1_154 = arith.constant 1 : index
      %c0_155 = arith.constant 0 : index
      %c128_156 = arith.constant 128 : index
      %188 = vector.load %arg14[%c1_154, %c0_155, %c128_156] : memref<3x2x512xf32, #tpu.memory_space<vmem>>, vector<1x2x32xf32>
      %189 = vector.shape_cast %188 : vector<1x2x32xf32> to vector<2x32xf32>
      %190 = vector.shape_cast %187 : vector<2x32xf32> to vector<1x2x32xf32>
      tpu.vector_store %arg14[%c1_154, %c0_155, %c128_156], %190 {strides = array<i32>} : memref<3x2x512xf32, #tpu.memory_space<vmem>>, vector<1x2x32xf32>,
      %c21 = arith.constant 21 : index
      %c0_157 = arith.constant 0 : index
      %191 = tpu.strided_load %arg13[%c21, %c0_157] {strides = array<i32: 45, 1>} : memref<90x32xf32, #tpu.memory_space<vmem>>, vector<2x32xf32>
      %c1_158 = arith.constant 1 : index
      %c0_159 = arith.constant 0 : index
      %c160_160 = arith.constant 160 : index
      %192 = vector.load %arg14[%c1_158, %c0_159, %c160_160] : memref<3x2x512xf32, #tpu.memory_space<vmem>>, vector<1x2x32xf32>
      %193 = vector.shape_cast %192 : vector<1x2x32xf32> to vector<2x32xf32>
      %194 = vector.shape_cast %191 : vector<2x32xf32> to vector<1x2x32xf32>
      tpu.vector_store %arg14[%c1_158, %c0_159, %c160_160], %194 {strides = array<i32>} : memref<3x2x512xf32, #tpu.memory_space<vmem>>, vector<1x2x32xf32>,
      %c22 = arith.constant 22 : index
      %c0_161 = arith.constant 0 : index
      %195 = tpu.strided_load %arg13[%c22, %c0_161] {strides = array<i32: 45, 1>} : memref<90x32xf32, #tpu.memory_space<vmem>>, vector<2x32xf32>
      %c1_162 = arith.constant 1 : index
      %c0_163 = arith.constant 0 : index
      %c192_164 = arith.constant 192 : index
      %196 = vector.load %arg14[%c1_162, %c0_163, %c192_164] : memref<3x2x512xf32, #tpu.memory_space<vmem>>, vector<1x2x32xf32>
      %197 = vector.shape_cast %196 : vector<1x2x32xf32> to vector<2x32xf32>
      %198 = vector.shape_cast %195 : vector<2x32xf32> to vector<1x2x32xf32>
      tpu.vector_store %arg14[%c1_162, %c0_163, %c192_164], %198 {strides = array<i32>} : memref<3x2x512xf32, #tpu.memory_space<vmem>>, vector<1x2x32xf32>,
      %c23 = arith.constant 23 : index
      %c0_165 = arith.constant 0 : index
      %199 = tpu.strided_load %arg13[%c23, %c0_165] {strides = array<i32: 45, 1>} : memref<90x32xf32, #tpu.memory_space<vmem>>, vector<2x32xf32>
      %c1_166 = arith.constant 1 : index
      %c0_167 = arith.constant 0 : index
      %c224_168 = arith.constant 224 : index
      %200 = vector.load %arg14[%c1_166, %c0_167, %c224_168] : memref<3x2x512xf32, #tpu.memory_space<vmem>>, vector<1x2x32xf32>
      %201 = vector.shape_cast %200 : vector<1x2x32xf32> to vector<2x32xf32>
      %202 = vector.shape_cast %199 : vector<2x32xf32> to vector<1x2x32xf32>
      tpu.vector_store %arg14[%c1_166, %c0_167, %c224_168], %202 {strides = array<i32>} : memref<3x2x512xf32, #tpu.memory_space<vmem>>, vector<1x2x32xf32>,
      %c24 = arith.constant 24 : index
      %c0_169 = arith.constant 0 : index
      %203 = tpu.strided_load %arg13[%c24, %c0_169] {strides = array<i32: 45, 1>} : memref<90x32xf32, #tpu.memory_space<vmem>>, vector<2x32xf32>
      %c1_170 = arith.constant 1 : index
      %c0_171 = arith.constant 0 : index
      %c256_172 = arith.constant 256 : index
      %204 = vector.load %arg14[%c1_170, %c0_171, %c256_172] : memref<3x2x512xf32, #tpu.memory_space<vmem>>, vector<1x2x32xf32>
      %205 = vector.shape_cast %204 : vector<1x2x32xf32> to vector<2x32xf32>
      %206 = vector.shape_cast %203 : vector<2x32xf32> to vector<1x2x32xf32>
      tpu.vector_store %arg14[%c1_170, %c0_171, %c256_172], %206 {strides = array<i32>} : memref<3x2x512xf32, #tpu.memory_space<vmem>>, vector<1x2x32xf32>,
      %c25 = arith.constant 25 : index
      %c0_173 = arith.constant 0 : index
      %207 = tpu.strided_load %arg13[%c25, %c0_173] {strides = array<i32: 45, 1>} : memref<90x32xf32, #tpu.memory_space<vmem>>, vector<2x32xf32>
      %c1_174 = arith.constant 1 : index
      %c0_175 = arith.constant 0 : index
      %c288_176 = arith.constant 288 : index
      %208 = vector.load %arg14[%c1_174, %c0_175, %c288_176] : memref<3x2x512xf32, #tpu.memory_space<vmem>>, vector<1x2x32xf32>
      %209 = vector.shape_cast %208 : vector<1x2x32xf32> to vector<2x32xf32>
      %210 = vector.shape_cast %207 : vector<2x32xf32> to vector<1x2x32xf32>
      tpu.vector_store %arg14[%c1_174, %c0_175, %c288_176], %210 {strides = array<i32>} : memref<3x2x512xf32, #tpu.memory_space<vmem>>, vector<1x2x32xf32>,
      %c26 = arith.constant 26 : index
      %c0_177 = arith.constant 0 : index
      %211 = tpu.strided_load %arg13[%c26, %c0_177] {strides = array<i32: 45, 1>} : memref<90x32xf32, #tpu.memory_space<vmem>>, vector<2x32xf32>
      %c1_178 = arith.constant 1 : index
      %c0_179 = arith.constant 0 : index
      %c320_180 = arith.constant 320 : index
      %212 = vector.load %arg14[%c1_178, %c0_179, %c320_180] : memref<3x2x512xf32, #tpu.memory_space<vmem>>, vector<1x2x32xf32>
      %213 = vector.shape_cast %212 : vector<1x2x32xf32> to vector<2x32xf32>
      %214 = vector.shape_cast %211 : vector<2x32xf32> to vector<1x2x32xf32>
      tpu.vector_store %arg14[%c1_178, %c0_179, %c320_180], %214 {strides = array<i32>} : memref<3x2x512xf32, #tpu.memory_space<vmem>>, vector<1x2x32xf32>,
      %c27 = arith.constant 27 : index
      %c0_181 = arith.constant 0 : index
      %215 = tpu.strided_load %arg13[%c27, %c0_181] {strides = array<i32: 45, 1>} : memref<90x32xf32, #tpu.memory_space<vmem>>, vector<2x32xf32>
      %c1_182 = arith.constant 1 : index
      %c0_183 = arith.constant 0 : index
      %c352_184 = arith.constant 352 : index
      %216 = vector.load %arg14[%c1_182, %c0_183, %c352_184] : memref<3x2x512xf32, #tpu.memory_space<vmem>>, vector<1x2x32xf32>
      %217 = vector.shape_cast %216 : vector<1x2x32xf32> to vector<2x32xf32>
      %218 = vector.shape_cast %215 : vector<2x32xf32> to vector<1x2x32xf32>
      tpu.vector_store %arg14[%c1_182, %c0_183, %c352_184], %218 {strides = array<i32>} : memref<3x2x512xf32, #tpu.memory_space<vmem>>, vector<1x2x32xf32>,
      %c28 = arith.constant 28 : index
      %c0_185 = arith.constant 0 : index
      %219 = tpu.strided_load %arg13[%c28, %c0_185] {strides = array<i32: 45, 1>} : memref<90x32xf32, #tpu.memory_space<vmem>>, vector<2x32xf32>
      %c1_186 = arith.constant 1 : index
      %c0_187 = arith.constant 0 : index
      %c384_188 = arith.constant 384 : index
      %220 = vector.load %arg14[%c1_186, %c0_187, %c384_188] : memref<3x2x512xf32, #tpu.memory_space<vmem>>, vector<1x2x32xf32>
      %221 = vector.shape_cast %220 : vector<1x2x32xf32> to vector<2x32xf32>
      %222 = vector.shape_cast %219 : vector<2x32xf32> to vector<1x2x32xf32>
      tpu.vector_store %arg14[%c1_186, %c0_187, %c384_188], %222 {strides = array<i32>} : memref<3x2x512xf32, #tpu.memory_space<vmem>>, vector<1x2x32xf32>,
      %c29 = arith.constant 29 : index
      %c0_189 = arith.constant 0 : index
      %223 = tpu.strided_load %arg13[%c29, %c0_189] {strides = array<i32: 45, 1>} : memref<90x32xf32, #tpu.memory_space<vmem>>, vector<2x32xf32>
      %c1_190 = arith.constant 1 : index
      %c0_191 = arith.constant 0 : index
      %c416_192 = arith.constant 416 : index
      %224 = vector.load %arg14[%c1_190, %c0_191, %c416_192] : memref<3x2x512xf32, #tpu.memory_space<vmem>>, vector<1x2x32xf32>
      %225 = vector.shape_cast %224 : vector<1x2x32xf32> to vector<2x32xf32>
      %226 = vector.shape_cast %223 : vector<2x32xf32> to vector<1x2x32xf32>
      tpu.vector_store %arg14[%c1_190, %c0_191, %c416_192], %226 {strides = array<i32>} : memref<3x2x512xf32, #tpu.memory_space<vmem>>, vector<1x2x32xf32>,
      %c30 = arith.constant 30 : index
      %c0_193 = arith.constant 0 : index
      %227 = tpu.strided_load %arg13[%c30, %c0_193] {strides = array<i32: 45, 1>} : memref<90x32xf32, #tpu.memory_space<vmem>>, vector<2x32xf32>
      %c1_194 = arith.constant 1 : index
      %c0_195 = arith.constant 0 : index
      %c448_196 = arith.constant 448 : index
      %228 = vector.load %arg14[%c1_194, %c0_195, %c448_196] : memref<3x2x512xf32, #tpu.memory_space<vmem>>, vector<1x2x32xf32>
      %229 = vector.shape_cast %228 : vector<1x2x32xf32> to vector<2x32xf32>
      %230 = vector.shape_cast %227 : vector<2x32xf32> to vector<1x2x32xf32>
      tpu.vector_store %arg14[%c1_194, %c0_195, %c448_196], %230 {strides = array<i32>} : memref<3x2x512xf32, #tpu.memory_space<vmem>>, vector<1x2x32xf32>,
      %c31 = arith.constant 31 : index
      %c0_197 = arith.constant 0 : index
      %231 = tpu.strided_load %arg13[%c31, %c0_197] {strides = array<i32: 45, 1>} : memref<90x32xf32, #tpu.memory_space<vmem>>, vector<2x32xf32>
      %c1_198 = arith.constant 1 : index
      %c0_199 = arith.constant 0 : index
      %c480_200 = arith.constant 480 : index
      %232 = vector.load %arg14[%c1_198, %c0_199, %c480_200] : memref<3x2x512xf32, #tpu.memory_space<vmem>>, vector<1x2x32xf32>
      %233 = vector.shape_cast %232 : vector<1x2x32xf32> to vector<2x32xf32>
      %234 = vector.shape_cast %231 : vector<2x32xf32> to vector<1x2x32xf32>
      tpu.vector_store %arg14[%c1_198, %c0_199, %c480_200], %234 {strides = array<i32>} : memref<3x2x512xf32, #tpu.memory_space<vmem>>, vector<1x2x32xf32>,
      %c32_201 = arith.constant 32 : index
      %c0_202 = arith.constant 0 : index
      %235 = tpu.strided_load %arg13[%c32_201, %c0_202] {strides = array<i32: 45, 1>} : memref<90x32xf32, #tpu.memory_space<vmem>>, vector<2x32xf32>
      %c2_203 = arith.constant 2 : index
      %c0_204 = arith.constant 0 : index
      %c0_205 = arith.constant 0 : index
      %236 = vector.load %arg14[%c2_203, %c0_204, %c0_205] : memref<3x2x512xf32, #tpu.memory_space<vmem>>, vector<1x2x32xf32>
      %237 = vector.shape_cast %236 : vector<1x2x32xf32> to vector<2x32xf32>
      %238 = vector.shape_cast %235 : vector<2x32xf32> to vector<1x2x32xf32>
      tpu.vector_store %arg14[%c2_203, %c0_204, %c0_205], %238 {strides = array<i32>} : memref<3x2x512xf32, #tpu.memory_space<vmem>>, vector<1x2x32xf32>,
      %c33 = arith.constant 33 : index
      %c0_206 = arith.constant 0 : index
      %239 = tpu.strided_load %arg13[%c33, %c0_206] {strides = array<i32: 45, 1>} : memref<90x32xf32, #tpu.memory_space<vmem>>, vector<2x32xf32>
      %c2_207 = arith.constant 2 : index
      %c0_208 = arith.constant 0 : index
      %c32_209 = arith.constant 32 : index
      %240 = vector.load %arg14[%c2_207, %c0_208, %c32_209] : memref<3x2x512xf32, #tpu.memory_space<vmem>>, vector<1x2x32xf32>
      %241 = vector.shape_cast %240 : vector<1x2x32xf32> to vector<2x32xf32>
      %242 = vector.shape_cast %239 : vector<2x32xf32> to vector<1x2x32xf32>
      tpu.vector_store %arg14[%c2_207, %c0_208, %c32_209], %242 {strides = array<i32>} : memref<3x2x512xf32, #tpu.memory_space<vmem>>, vector<1x2x32xf32>,
      %c34 = arith.constant 34 : index
      %c0_210 = arith.constant 0 : index
      %243 = tpu.strided_load %arg13[%c34, %c0_210] {strides = array<i32: 45, 1>} : memref<90x32xf32, #tpu.memory_space<vmem>>, vector<2x32xf32>
      %c2_211 = arith.constant 2 : index
      %c0_212 = arith.constant 0 : index
      %c64_213 = arith.constant 64 : index
      %244 = vector.load %arg14[%c2_211, %c0_212, %c64_213] : memref<3x2x512xf32, #tpu.memory_space<vmem>>, vector<1x2x32xf32>
      %245 = vector.shape_cast %244 : vector<1x2x32xf32> to vector<2x32xf32>
      %246 = vector.shape_cast %243 : vector<2x32xf32> to vector<1x2x32xf32>
      tpu.vector_store %arg14[%c2_211, %c0_212, %c64_213], %246 {strides = array<i32>} : memref<3x2x512xf32, #tpu.memory_space<vmem>>, vector<1x2x32xf32>,
      %c35 = arith.constant 35 : index
      %c0_214 = arith.constant 0 : index
      %247 = tpu.strided_load %arg13[%c35, %c0_214] {strides = array<i32: 45, 1>} : memref<90x32xf32, #tpu.memory_space<vmem>>, vector<2x32xf32>
      %c2_215 = arith.constant 2 : index
      %c0_216 = arith.constant 0 : index
      %c96_217 = arith.constant 96 : index
      %248 = vector.load %arg14[%c2_215, %c0_216, %c96_217] : memref<3x2x512xf32, #tpu.memory_space<vmem>>, vector<1x2x32xf32>
      %249 = vector.shape_cast %248 : vector<1x2x32xf32> to vector<2x32xf32>
      %250 = vector.shape_cast %247 : vector<2x32xf32> to vector<1x2x32xf32>
      tpu.vector_store %arg14[%c2_215, %c0_216, %c96_217], %250 {strides = array<i32>} : memref<3x2x512xf32, #tpu.memory_space<vmem>>, vector<1x2x32xf32>,
      %c36 = arith.constant 36 : index
      %c0_218 = arith.constant 0 : index
      %251 = tpu.strided_load %arg13[%c36, %c0_218] {strides = array<i32: 45, 1>} : memref<90x32xf32, #tpu.memory_space<vmem>>, vector<2x32xf32>
      %c2_219 = arith.constant 2 : index
      %c0_220 = arith.constant 0 : index
      %c128_221 = arith.constant 128 : index
      %252 = vector.load %arg14[%c2_219, %c0_220, %c128_221] : memref<3x2x512xf32, #tpu.memory_space<vmem>>, vector<1x2x32xf32>
      %253 = vector.shape_cast %252 : vector<1x2x32xf32> to vector<2x32xf32>
      %254 = vector.shape_cast %251 : vector<2x32xf32> to vector<1x2x32xf32>
      tpu.vector_store %arg14[%c2_219, %c0_220, %c128_221], %254 {strides = array<i32>} : memref<3x2x512xf32, #tpu.memory_space<vmem>>, vector<1x2x32xf32>,
      %c37 = arith.constant 37 : index
      %c0_222 = arith.constant 0 : index
      %255 = tpu.strided_load %arg13[%c37, %c0_222] {strides = array<i32: 45, 1>} : memref<90x32xf32, #tpu.memory_space<vmem>>, vector<2x32xf32>
      %c2_223 = arith.constant 2 : index
      %c0_224 = arith.constant 0 : index
      %c160_225 = arith.constant 160 : index
      %256 = vector.load %arg14[%c2_223, %c0_224, %c160_225] : memref<3x2x512xf32, #tpu.memory_space<vmem>>, vector<1x2x32xf32>
      %257 = vector.shape_cast %256 : vector<1x2x32xf32> to vector<2x32xf32>
      %258 = vector.shape_cast %255 : vector<2x32xf32> to vector<1x2x32xf32>
      tpu.vector_store %arg14[%c2_223, %c0_224, %c160_225], %258 {strides = array<i32>} : memref<3x2x512xf32, #tpu.memory_space<vmem>>, vector<1x2x32xf32>,
      %c38 = arith.constant 38 : index
      %c0_226 = arith.constant 0 : index
      %259 = tpu.strided_load %arg13[%c38, %c0_226] {strides = array<i32: 45, 1>} : memref<90x32xf32, #tpu.memory_space<vmem>>, vector<2x32xf32>
      %c2_227 = arith.constant 2 : index
      %c0_228 = arith.constant 0 : index
      %c192_229 = arith.constant 192 : index
      %260 = vector.load %arg14[%c2_227, %c0_228, %c192_229] : memref<3x2x512xf32, #tpu.memory_space<vmem>>, vector<1x2x32xf32>
      %261 = vector.shape_cast %260 : vector<1x2x32xf32> to vector<2x32xf32>
      %262 = vector.shape_cast %259 : vector<2x32xf32> to vector<1x2x32xf32>
      tpu.vector_store %arg14[%c2_227, %c0_228, %c192_229], %262 {strides = array<i32>} : memref<3x2x512xf32, #tpu.memory_space<vmem>>, vector<1x2x32xf32>,
      %c39 = arith.constant 39 : index
      %c0_230 = arith.constant 0 : index
      %263 = tpu.strided_load %arg13[%c39, %c0_230] {strides = array<i32: 45, 1>} : memref<90x32xf32, #tpu.memory_space<vmem>>, vector<2x32xf32>
      %c2_231 = arith.constant 2 : index
      %c0_232 = arith.constant 0 : index
      %c224_233 = arith.constant 224 : index
      %264 = vector.load %arg14[%c2_231, %c0_232, %c224_233] : memref<3x2x512xf32, #tpu.memory_space<vmem>>, vector<1x2x32xf32>
      %265 = vector.shape_cast %264 : vector<1x2x32xf32> to vector<2x32xf32>
      %266 = vector.shape_cast %263 : vector<2x32xf32> to vector<1x2x32xf32>
      tpu.vector_store %arg14[%c2_231, %c0_232, %c224_233], %266 {strides = array<i32>} : memref<3x2x512xf32, #tpu.memory_space<vmem>>, vector<1x2x32xf32>,
      %c40 = arith.constant 40 : index
      %c0_234 = arith.constant 0 : index
      %267 = tpu.strided_load %arg13[%c40, %c0_234] {strides = array<i32: 45, 1>} : memref<90x32xf32, #tpu.memory_space<vmem>>, vector<2x32xf32>
      %c2_235 = arith.constant 2 : index
      %c0_236 = arith.constant 0 : index
      %c256_237 = arith.constant 256 : index
      %268 = vector.load %arg14[%c2_235, %c0_236, %c256_237] : memref<3x2x512xf32, #tpu.memory_space<vmem>>, vector<1x2x32xf32>
      %269 = vector.shape_cast %268 : vector<1x2x32xf32> to vector<2x32xf32>
      %270 = vector.shape_cast %267 : vector<2x32xf32> to vector<1x2x32xf32>
      tpu.vector_store %arg14[%c2_235, %c0_236, %c256_237], %270 {strides = array<i32>} : memref<3x2x512xf32, #tpu.memory_space<vmem>>, vector<1x2x32xf32>,
      %c41 = arith.constant 41 : index
      %c0_238 = arith.constant 0 : index
      %271 = tpu.strided_load %arg13[%c41, %c0_238] {strides = array<i32: 45, 1>} : memref<90x32xf32, #tpu.memory_space<vmem>>, vector<2x32xf32>
      %c2_239 = arith.constant 2 : index
      %c0_240 = arith.constant 0 : index
      %c288_241 = arith.constant 288 : index
      %272 = vector.load %arg14[%c2_239, %c0_240, %c288_241] : memref<3x2x512xf32, #tpu.memory_space<vmem>>, vector<1x2x32xf32>
      %273 = vector.shape_cast %272 : vector<1x2x32xf32> to vector<2x32xf32>
      %274 = vector.shape_cast %271 : vector<2x32xf32> to vector<1x2x32xf32>
      tpu.vector_store %arg14[%c2_239, %c0_240, %c288_241], %274 {strides = array<i32>} : memref<3x2x512xf32, #tpu.memory_space<vmem>>, vector<1x2x32xf32>,
      %c42 = arith.constant 42 : index
      %c0_242 = arith.constant 0 : index
      %275 = tpu.strided_load %arg13[%c42, %c0_242] {strides = array<i32: 45, 1>} : memref<90x32xf32, #tpu.memory_space<vmem>>, vector<2x32xf32>
      %c2_243 = arith.constant 2 : index
      %c0_244 = arith.constant 0 : index
      %c320_245 = arith.constant 320 : index
      %276 = vector.load %arg14[%c2_243, %c0_244, %c320_245] : memref<3x2x512xf32, #tpu.memory_space<vmem>>, vector<1x2x32xf32>
      %277 = vector.shape_cast %276 : vector<1x2x32xf32> to vector<2x32xf32>
      %278 = vector.shape_cast %275 : vector<2x32xf32> to vector<1x2x32xf32>
      tpu.vector_store %arg14[%c2_243, %c0_244, %c320_245], %278 {strides = array<i32>} : memref<3x2x512xf32, #tpu.memory_space<vmem>>, vector<1x2x32xf32>,
      %c43 = arith.constant 43 : index
      %c0_246 = arith.constant 0 : index
      %279 = tpu.strided_load %arg13[%c43, %c0_246] {strides = array<i32: 45, 1>} : memref<90x32xf32, #tpu.memory_space<vmem>>, vector<2x32xf32>
      %c2_247 = arith.constant 2 : index
      %c0_248 = arith.constant 0 : index
      %c352_249 = arith.constant 352 : index
      %280 = vector.load %arg14[%c2_247, %c0_248, %c352_249] : memref<3x2x512xf32, #tpu.memory_space<vmem>>, vector<1x2x32xf32>
      %281 = vector.shape_cast %280 : vector<1x2x32xf32> to vector<2x32xf32>
      %282 = vector.shape_cast %279 : vector<2x32xf32> to vector<1x2x32xf32>
      tpu.vector_store %arg14[%c2_247, %c0_248, %c352_249], %282 {strides = array<i32>} : memref<3x2x512xf32, #tpu.memory_space<vmem>>, vector<1x2x32xf32>,
      %c44 = arith.constant 44 : index
      %c0_250 = arith.constant 0 : index
      %283 = tpu.strided_load %arg13[%c44, %c0_250] {strides = array<i32: 45, 1>} : memref<90x32xf32, #tpu.memory_space<vmem>>, vector<2x32xf32>
      %c2_251 = arith.constant 2 : index
      %c0_252 = arith.constant 0 : index
      %c384_253 = arith.constant 384 : index
      %284 = vector.load %arg14[%c2_251, %c0_252, %c384_253] : memref<3x2x512xf32, #tpu.memory_space<vmem>>, vector<1x2x32xf32>
      %285 = vector.shape_cast %284 : vector<1x2x32xf32> to vector<2x32xf32>
      %286 = vector.shape_cast %283 : vector<2x32xf32> to vector<1x2x32xf32>
      tpu.vector_store %arg14[%c2_251, %c0_252, %c384_253], %286 {strides = array<i32>} : memref<3x2x512xf32, #tpu.memory_space<vmem>>, vector<1x2x32xf32>,
      %cst_254 = arith.constant 0.000000e+00 : f32
      %287 = vector.broadcast %cst_254 : f32 to vector<2x96xf32>
      %c2_255 = arith.constant 2 : index
      %c0_256 = arith.constant 0 : index
      %c416_257 = arith.constant 416 : index
      %288 = vector.load %arg14[%c2_255, %c0_256, %c416_257] : memref<3x2x512xf32, #tpu.memory_space<vmem>>, vector<1x2x96xf32>
      %289 = vector.shape_cast %288 : vector<1x2x96xf32> to vector<2x96xf32>
      %290 = vector.shape_cast %287 : vector<2x96xf32> to vector<1x2x96xf32>
      tpu.vector_store %arg14[%c2_255, %c0_256, %c416_257], %290 {strides = array<i32>} : memref<3x2x512xf32, #tpu.memory_space<vmem>>, vector<1x2x96xf32>,
    } else {
    }
    %3 = arith.index_cast %arg0 : i32 to index
    %c0 = arith.constant 0 : index
    %c0_1 = arith.constant 0 : index
    %4 = vector.load %arg14[%3, %c0, %c0_1] : memref<3x2x512xf32, #tpu.memory_space<vmem>>, vector<1x2x512xf32>
    %5 = vector.shape_cast %4 : vector<1x2x512xf32> to vector<2x512xf32>
    %6 = arith.truncf %5 : vector<2x512xf32> to vector<2x512xbf16>
    %c0_2 = arith.constant 0 : index
    %c0_3 = arith.constant 0 : index
    %7 = vector.load %arg15[%c0_2, %c0_3] : memref<2x512xf32, #tpu.memory_space<vmem>>, vector<2x512xf32>
    %c0_4 = arith.constant 0 : index
    %c0_5 = arith.constant 0 : index
    %8 = vector.load %arg6[%c0_4, %c0_5] : memref<512x512xbf16, #tpu.memory_space<vmem>>, vector<512x512xbf16>
    %cst = arith.constant dense<0.000000e+00> : vector<2x512xf32>
    %9 = tpu.matmul %6, %8, %cst {dimension_numbers = #tpu.dot_dimension_numbers<[1], [0], [0], [1], [0, 0, 1, 1], [], []>} : vector<2x512xbf16>, vector<512x512xbf16>, vector<2x512xf32> -> vector<2x512xf32>
    %10 = arith.addf %7, %9 : vector<2x512xf32>
    %c0_6 = arith.constant 0 : index
    %c0_7 = arith.constant 0 : index
    %11 = vector.load %arg15[%c0_6, %c0_7] : memref<2x512xf32, #tpu.memory_space<vmem>>, vector<2x512xf32>
    tpu.vector_store %arg15[%c0_6, %c0_7], %10 {strides = array<i32>} : memref<2x512xf32, #tpu.memory_space<vmem>>, vector<2x512xf32>,
    %c2_i32 = arith.constant 2 : i32
    %12 = arith.cmpi eq, %arg0, %c2_i32 : i32
    %13 = arith.extui %12 : i1 to i32
    %c0_i32_8 = arith.constant 0 : i32
    %14 = arith.cmpi ne, %13, %c0_i32_8 : i32
    scf.if %14 {
      %c0_9 = arith.constant 0 : index
      %c0_10 = arith.constant 0 : index
      %15 = vector.load %arg15[%c0_9, %c0_10] : memref<2x512xf32, #tpu.memory_space<vmem>>, vector<2x512xf32>
      %c0_11 = arith.constant 0 : index
      %c0_12 = arith.constant 0 : index
      %16 = vector.load %arg7[%c0_11, %c0_12] : memref<1x512xf32, #tpu.memory_space<vmem>>, vector<1x512xf32>
      %17 = vector.broadcast %16 : vector<1x512xf32> to vector<2x512xf32>
      %18 = arith.addf %15, %17 : vector<2x512xf32>
      %cst_13 = arith.constant dense<0xFF800000> : vector<2xf32>
      %19 = vector.multi_reduction <maximumf>, %18, %cst_13 [1] : vector<2x512xf32> to vector<2xf32>
      %20 = vector.shape_cast %19 : vector<2xf32> to vector<2x1xf32>
      %21 = vector.broadcast %20 : vector<2x1xf32> to vector<2x512xf32>
      %22 = arith.subf %18, %21 : vector<2x512xf32>
      %23 = math.exp %22 : vector<2x512xf32>
      %cst_14 = arith.constant dense<0.000000e+00> : vector<2xf32>
      %24 = vector.multi_reduction <add>, %23, %cst_14 [1] : vector<2x512xf32> to vector<2xf32>
      %25 = vector.shape_cast %24 : vector<2xf32> to vector<2x1xf32>
      %26 = tpu.reciprocal %25 {approx = true} : vector<2x1xf32> -> vector<2x1xf32>
      %27 = vector.broadcast %26 : vector<2x1xf32> to vector<2x512xf32>
      %28 = arith.mulf %23, %27 : vector<2x512xf32>
      %c0_15 = arith.constant 0 : index
      %c0_16 = arith.constant 0 : index
      %29 = vector.load %arg8[%c0_15, %c0_16] : memref<512x5xf32, #tpu.memory_space<vmem>>, vector<512x5xf32>
      %cst_17 = arith.constant dense<0.000000e+00> : vector<2x5xf32>
      %30 = tpu.matmul %28, %29, %cst_17 {dimension_numbers = #tpu.dot_dimension_numbers<[1], [0], [0], [1], [0, 0, 1, 1], [], []>} : vector<2x512xf32>, vector<512x5xf32>, vector<2x5xf32> -> vector<2x5xf32>
      %c0_18 = arith.constant 0 : index
      %c0_19 = arith.constant 0 : index
      %31 = vector.load %arg9[%c0_18, %c0_19] : memref<1x5xf32, #tpu.memory_space<vmem>>, vector<1x5xf32>
      %32 = vector.broadcast %31 : vector<1x5xf32> to vector<2x5xf32>
      %33 = arith.addf %30, %32 : vector<2x5xf32>
      %c0_20 = arith.constant 0 : index
      %c0_21 = arith.constant 0 : index
      %34 = vector.load %arg10[%c0_20, %c0_21] : memref<2x5xf32, #tpu.memory_space<vmem>>, vector<2x5xf32>
      tpu.vector_store %arg10[%c0_20, %c0_21], %33 {strides = array<i32>} : memref<2x5xf32, #tpu.memory_space<vmem>>, vector<2x5xf32>,
    } else {
    }
    return
  }
  func.func @transform_0(%arg0: i32) -> (i32, i32, i32) {
    %c0_i32 = arith.constant 0 : i32
    %c0_i32_0 = arith.constant 0 : i32
    %c0_i32_1 = arith.constant 0 : i32
    %c0_i32_2 = arith.constant 0 : i32
    return %c0_i32, %c0_i32_0, %c0_i32_1 : i32, i32, i32
  }
  func.func @transform_1(%arg0: i32) -> (i32, i32) {
    %c0_i32 = arith.constant 0 : i32
    %c0_i32_0 = arith.constant 0 : i32
    %c0_i32_1 = arith.constant 0 : i32
    return %c0_i32, %c0_i32_0 : i32, i32
  }
  func.func @transform_2(%arg0: i32) -> (i32, i32) {
    %c0_i32 = arith.constant 0 : i32
    %c0_i32_0 = arith.constant 0 : i32
    %c0_i32_1 = arith.constant 0 : i32
    return %c0_i32, %c0_i32_0 : i32, i32
  }
  func.func @transform_3(%arg0: i32) -> (i32, i32) {
    %c0_i32 = arith.constant 0 : i32
    %c0_i32_0 = arith.constant 0 : i32
    %c0_i32_1 = arith.constant 0 : i32
    return %c0_i32, %c0_i32_0 : i32, i32
  }
  func.func @transform_4(%arg0: i32) -> (i32, i32) {
    %c0_i32 = arith.constant 0 : i32
    %c0_i32_0 = arith.constant 0 : i32
    %c0_i32_1 = arith.constant 0 : i32
    return %c0_i32, %c0_i32_0 : i32, i32
  }
  func.func @transform_5(%arg0: i32) -> (i32, i32) {
    %c0_i32 = arith.constant 0 : i32
    %c0_i32_0 = arith.constant 0 : i32
    return %arg0, %c0_i32 : i32, i32
  }
  func.func @transform_6(%arg0: i32) -> (i32, i32) {
    %c0_i32 = arith.constant 0 : i32
    %c0_i32_0 = arith.constant 0 : i32
    %c0_i32_1 = arith.constant 0 : i32
    return %c0_i32, %c0_i32_0 : i32, i32
  }
  func.func @transform_7(%arg0: i32) -> (i32, i32) {
    %c0_i32 = arith.constant 0 : i32
    %c0_i32_0 = arith.constant 0 : i32
    %c0_i32_1 = arith.constant 0 : i32
    return %c0_i32, %c0_i32_0 : i32, i32
  }
  func.func @transform_8(%arg0: i32) -> (i32, i32) {
    %c0_i32 = arith.constant 0 : i32
    %c0_i32_0 = arith.constant 0 : i32
    %c0_i32_1 = arith.constant 0 : i32
    return %c0_i32, %c0_i32_0 : i32, i32
  }
  func.func @transform_9(%arg0: i32) -> (i32, i32) {
    %c0_i32 = arith.constant 0 : i32
    %c0_i32_0 = arith.constant 0 : i32
    %c0_i32_1 = arith.constant 0 : i32
    return %c0_i32, %c0_i32_0 : i32, i32
  }
}

</mosaic_0001>

<llo_original>
// kernel: net_forward.1
$region0: #{net_forward.1}
  #allocation0 [shape = 'u32[]', space=smem, size = 0x4, offset = 0x4, fixed_abs, tag = 'smem constant byte address 0x4 - core index']
  #allocation1 [shape = 'u32[144,128]{1,0:T(1,128)}', space=vmem, size = 0x12000, scoped, tag = 'internal scratch']
  #allocation2 [shape = 'f32[185,16]{1,0:T(8,128)}', space=vmem, size = 0x18000, scoped, tag = 'scratch operand']
  #allocation3 [shape = 'f32[90,32]{1,0:T(8,128)}', space=vmem, size = 0xc000, scoped, tag = 'scratch operand']
  #allocation4 [shape = 'f32[90,32]{1,0:T(8,128)}', space=vmem, size = 0xc000, scoped, tag = 'scratch operand']
  #allocation5 [shape = 'f32[3,2,512]{2,1,0:T(2,128)}', space=vmem, size = 0x3000, scoped, tag = 'scratch operand']
  #allocation6 [shape = 'f32[2,512]{1,0:T(2,128)}', space=vmem, size = 0x1000, scoped, tag = 'scratch operand']
  %s0 = inlined_call_operand.vmem [shape: f32[2,187,1], index: 0, kind: input, shape index: {}]
  %s1 = inlined_call_operand.hbm [shape: f32[3,16], index: 1, kind: input, shape index: {}]
  %s2 = inlined_call_operand.hbm [shape: f32[1,16], index: 2, kind: input, shape index: {}]
  %s3 = inlined_call_operand.vmem [shape: f32[48,32], index: 3, kind: input, shape index: {}]
  %s4 = inlined_call_operand.hbm [shape: f32[1,32], index: 4, kind: input, shape index: {}]
  %s5 = inlined_call_operand.hbm [shape: bf16[1536,512], index: 5, kind: input, shape index: {}]
  %s6 = inlined_call_operand.hbm [shape: f32[1,512], index: 6, kind: input, shape index: {}]
  %s7 = inlined_call_operand.vmem [shape: f32[512,5], index: 7, kind: input, shape index: {}]
  %s8 = inlined_call_operand.hbm [shape: f32[1,5], index: 8, kind: input, shape index: {}]
  %s9 = inlined_call_operand.hbm [shape: f32[2,5], index: 9, kind: output, shape index: {}]
  %s10 = sld [smem:[#allocation0]]
  $region101: #{net_forward.1} parent=0
    _
  %s12 = ssub.s32 1, %s10
  %s13 = scalar_select 0, %s12, %s10
  $region1: #{net_forward.1} parent=0
    #allocation7 [shape = 'u8[2048]{0}', space=vmem, size = 0x800, scoped, tag = 'input window, operand 1, single buffered']
    #allocation8 [shape = 's32[2]{0}', space=sflag, size = 0x8, scoped, tag = 'scoped memory for net_forward.1']
    #allocation9 [shape = 's32[2]{0}', space=sflag, size = 0x8, scoped, tag = 'scoped memory for net_forward.1']
    #allocation10 [shape = 'u8[512]{0}', space=vmem, size = 0x400, scoped, tag = 'input window, operand 2, single buffered']
    #allocation11 [shape = 's32[1]{0}', space=sflag, size = 0x4, scoped, tag = 'scoped memory for net_forward.1']
    #allocation12 [shape = 'u8[512]{0}', space=vmem, size = 0x400, scoped, tag = 'input window, operand 4, single buffered']
    #allocation13 [shape = 'u8[1048576]{0}', space=vmem, size = 0x100000, scoped, tag = 'input window, operand 5']
    #allocation14 [shape = 's32[2]{0}', space=sflag, size = 0x8, scoped, tag = 'scoped memory for net_forward.1']
    #allocation15 [shape = 'u8[2048]{0}', space=vmem, size = 0x800, scoped, tag = 'input window, operand 6, single buffered']
    #allocation16 [shape = 'u8[512]{0}', space=vmem, size = 0x400, scoped, tag = 'input window, operand 8, single buffered']
    #allocation17 [shape = 's32[1]{0}', space=sflag, size = 0x4, scoped, tag = 'scoped memory for net_forward.1']
    #allocation18 [shape = 'u8[1024]{0}', space=vmem, size = 0x400, scoped, tag = 'output window, operand 0, single buffered']
    %14 = vsyncpa [#allocation8], 0
    %15 = vsyncpa [#allocation11], 0
    %16 = vsyncpa [#allocation14], 0
    %s17 = scalar_lea.sflag [#allocation14], 1
    %18 = vsyncpa %s17, 0
    %19 = vsyncpa [#allocation17], 0
    %20 = vsyncpa [#allocation9], 0
    loop: start=0, step=1, limit=5
    $region2: #{net_forward.1} parent=1 // loop_pre_header
      _
    $region3: #{net_forward.1} parent=1 // loop_header
      %s22 = sphi 0, %s26
      %p23 = scmp.ge.s32.totalorder %s22, 5
      %s30 = sphi 0, %s30
      %s32 = sphi 0, %s30
      %s33 = sphi 0, %s32
      %s47 = sphi 0, %s33
      %s51 = sphi 0, %s51
      %s53 = sphi 0, %s51
      %s54 = sphi 0, %s53
      %s68 = sphi 0, %s54
      %s72 = sphi 0, %s72
      %s74 = sphi 0, %s72
      %s75 = sphi 0, %s74
      %s89 = sphi 0, %s75
      %s93 = sphi 0, %s93
      %s95 = sphi 0, %s93
      %s96 = sphi 0, %s95
      %s110 = sphi 0, %s96
      %s114 = sphi 0, %s114
      %s116 = sphi 0, %s114
      %s117 = sphi 0, %s116
      %s131 = sphi 0, %s117
      %s137 = sphi 0, %s139
      %s140 = sphi 0, %s137
      %s141 = sphi 0, %s140
      %s157 = sphi 0, %s141
      %s161 = sphi 0, %s161
      %s163 = sphi 0, %s161
      %s164 = sphi 0, %s163
      %s178 = sphi 0, %s164
      %s182 = sphi 0, %s182
      %s184 = sphi 0, %s182
      %s185 = sphi 0, %s184
      %s199 = sphi 0, %s185
      %s203 = sphi 0, %s203
      %s205 = sphi 0, %s203
      %s206 = sphi 0, %s205
      %s220 = sphi 0, %s206
      %s224 = sphi 0, %s224
      %s226 = sphi 0, %s224
      %s227 = sphi 0, %s226
      %s241 = sphi 0, %s227
    $region4: #{net_forward.1} parent=1 // loop_header_branch
      %25 = sbr.rel (%p23) target = $region8
    $region5: #{net_forward.1} parent=1 // loop_body
      %s27 = ssub.s32 %s22, 1
      %s28 = ssub.s32 %s22, 2
      %s29 = sadd.s32 %s22, 1
      %s31 = sadd.s32 %s30, 1
      %p34 = scmp.eq.s32.totalorder %s22, 2
      %p35 = scmp.ne.s32.totalorder %s30, %s32
      %p36 = scmp.eq.s32.totalorder %s22, 0
      %p37 = por %p35, %p36
      %p38 = scmp.ne.s32.totalorder %s30, %s32
      %p39 = scmp.eq.s32.totalorder %s27, 2
      %p40 = por %p38, %p39
      %p41 = scmp.ne.s32.totalorder %s32, %s33
      %p42 = scmp.eq.s32.totalorder %s27, 0
      %p43 = por %p41, %p42
      %p44 = scmp.ne.s32.totalorder %s32, %s33
      %p45 = scmp.eq.s32.totalorder %s28, 2
      %p46 = por %p44, %p45
      %p48 = scmp.ne.s32.totalorder %s33, %s47
      %p49 = scmp.eq.s32.totalorder %s28, 0
      %p50 = por %p48, %p49
      %s52 = sadd.s32 %s51, 1
      %p55 = scmp.eq.s32.totalorder %s22, 2
      %p56 = scmp.ne.s32.totalorder %s51, %s53
      %p57 = scmp.eq.s32.totalorder %s22, 0
      %p58 = por %p56, %p57
      %p59 = scmp.ne.s32.totalorder %s51, %s53
      %p60 = scmp.eq.s32.totalorder %s27, 2
      %p61 = por %p59, %p60
      %p62 = scmp.ne.s32.totalorder %s53, %s54
      %p63 = scmp.eq.s32.totalorder %s27, 0
      %p64 = por %p62, %p63
      %p65 = scmp.ne.s32.totalorder %s53, %s54
      %p66 = scmp.eq.s32.totalorder %s28, 2
      %p67 = por %p65, %p66
      %p69 = scmp.ne.s32.totalorder %s54, %s68
      %p70 = scmp.eq.s32.totalorder %s28, 0
      %p71 = por %p69, %p70
      %s73 = sadd.s32 %s72, 1
      %p76 = scmp.eq.s32.totalorder %s22, 2
      %p77 = scmp.ne.s32.totalorder %s72, %s74
      %p78 = scmp.eq.s32.totalorder %s22, 0
      %p79 = por %p77, %p78
      %p80 = scmp.ne.s32.totalorder %s72, %s74
      %p81 = scmp.eq.s32.totalorder %s27, 2
      %p82 = por %p80, %p81
      %p83 = scmp.ne.s32.totalorder %s74, %s75
      %p84 = scmp.eq.s32.totalorder %s27, 0
      %p85 = por %p83, %p84
      %p86 = scmp.ne.s32.totalorder %s74, %s75
      %p87 = scmp.eq.s32.totalorder %s28, 2
      %p88 = por %p86, %p87
      %p90 = scmp.ne.s32.totalorder %s75, %s89
      %p91 = scmp.eq.s32.totalorder %s28, 0
      %p92 = por %p90, %p91
      %s94 = sadd.s32 %s93, 1
      %p97 = scmp.eq.s32.totalorder %s22, 2
      %p98 = scmp.ne.s32.totalorder %s93, %s95
      %p99 = scmp.eq.s32.totalorder %s22, 0
      %p100 = por %p98, %p99
      %p101 = scmp.ne.s32.totalorder %s93, %s95
      %p102 = scmp.eq.s32.totalorder %s27, 2
      %p103 = por %p101, %p102
      %p104 = scmp.ne.s32.totalorder %s95, %s96
      %p105 = scmp.eq.s32.totalorder %s27, 0
      %p106 = por %p104, %p105
      %p107 = scmp.ne.s32.totalorder %s95, %s96
      %p108 = scmp.eq.s32.totalorder %s28, 2
      %p109 = por %p107, %p108
      %p111 = scmp.ne.s32.totalorder %s96, %s110
      %p112 = scmp.eq.s32.totalorder %s28, 0
      %p113 = por %p111, %p112
      %s115 = sadd.s32 %s114, 1
      %p118 = scmp.eq.s32.totalorder %s22, 2
      %p119 = scmp.ne.s32.totalorder %s114, %s116
      %p120 = scmp.eq.s32.totalorder %s22, 0
      %p121 = por %p119, %p120
      %p122 = scmp.ne.s32.totalorder %s114, %s116
      %p123 = scmp.eq.s32.totalorder %s27, 2
      %p124 = por %p122, %p123
      %p125 = scmp.ne.s32.totalorder %s116, %s117
      %p126 = scmp.eq.s32.totalorder %s27, 0
      %p127 = por %p125, %p126
      %p128 = scmp.ne.s32.totalorder %s116, %s117
      %p129 = scmp.eq.s32.totalorder %s28, 2
      %p130 = por %p128, %p129
      %p132 = scmp.ne.s32.totalorder %s117, %s131
      %p133 = scmp.eq.s32.totalorder %s28, 0
      %p134 = por %p132, %p133
      %s135 = ssub.s32 %s22, %s29
      %p136 = scmp.eq.s32.totalorder %s135, 0
      %s138 = sadd.s32 %s137, 1
      %s139 = scalar_select %p136, %s137, %s138
      %p142 = pneg %p136
      %p143 = scmp.eq.s32.totalorder %s22, 2
      %p144 = por %p142, %p143
      %p145 = scmp.ne.s32.totalorder %s137, %s140
      %p146 = scmp.eq.s32.totalorder %s22, 0
      %p147 = por %p145, %p146
      %p148 = scmp.ne.s32.totalorder %s137, %s140
      %p149 = scmp.eq.s32.totalorder %s27, 2
      %p150 = por %p148, %p149
      %p151 = scmp.ne.s32.totalorder %s140, %s141
      %p152 = scmp.eq.s32.totalorder %s27, 0
      %p153 = por %p151, %p152
      %p154 = scmp.ne.s32.totalorder %s140, %s141
      %p155 = scmp.eq.s32.totalorder %s28, 2
      %p156 = por %p154, %p155
      %p158 = scmp.ne.s32.totalorder %s141, %s157
      %p159 = scmp.eq.s32.totalorder %s28, 0
      %p160 = por %p158, %p159
      %s162 = sadd.s32 %s161, 1
      %p165 = scmp.eq.s32.totalorder %s22, 2
      %p166 = scmp.ne.s32.totalorder %s161, %s163
      %p167 = scmp.eq.s32.totalorder %s22, 0
      %p168 = por %p166, %p167
      %p169 = scmp.ne.s32.totalorder %s161, %s163
      %p170 = scmp.eq.s32.totalorder %s27, 2
      %p171 = por %p169, %p170
      %p172 = scmp.ne.s32.totalorder %s163, %s164
      %p173 = scmp.eq.s32.totalorder %s27, 0
      %p174 = por %p172, %p173
      %p175 = scmp.ne.s32.totalorder %s163, %s164
      %p176 = scmp.eq.s32.totalorder %s28, 2
      %p177 = por %p175, %p176
      %p179 = scmp.ne.s32.totalorder %s164, %s178
      %p180 = scmp.eq.s32.totalorder %s28, 0
      %p181 = por %p179, %p180
      %s183 = sadd.s32 %s182, 1
      %p186 = scmp.eq.s32.totalorder %s22, 2
      %p187 = scmp.ne.s32.totalorder %s182, %s184
      %p188 = scmp.eq.s32.totalorder %s22, 0
      %p189 = por %p187, %p188
      %p190 = scmp.ne.s32.totalorder %s182, %s184
      %p191 = scmp.eq.s32.totalorder %s27, 2
      %p192 = por %p190, %p191
      %p193 = scmp.ne.s32.totalorder %s184, %s185
      %p194 = scmp.eq.s32.totalorder %s27, 0
      %p195 = por %p193, %p194
      %p196 = scmp.ne.s32.totalorder %s184, %s185
      %p197 = scmp.eq.s32.totalorder %s28, 2
      %p198 = por %p196, %p197
      %p200 = scmp.ne.s32.totalorder %s185, %s199
      %p201 = scmp.eq.s32.totalorder %s28, 0
      %p202 = por %p200, %p201
      %s204 = sadd.s32 %s203, 1
      %p207 = scmp.eq.s32.totalorder %s22, 2
      %p208 = scmp.ne.s32.totalorder %s203, %s205
      %p209 = scmp.eq.s32.totalorder %s22, 0
      %p210 = por %p208, %p209
      %p211 = scmp.ne.s32.totalorder %s203, %s205
      %p212 = scmp.eq.s32.totalorder %s27, 2
      %p213 = por %p211, %p212
      %p214 = scmp.ne.s32.totalorder %s205, %s206
      %p215 = scmp.eq.s32.totalorder %s27, 0
      %p216 = por %p214, %p215
      %p217 = scmp.ne.s32.totalorder %s205, %s206
      %p218 = scmp.eq.s32.totalorder %s28, 2
      %p219 = por %p217, %p218
      %p221 = scmp.ne.s32.totalorder %s206, %s220
      %p222 = scmp.eq.s32.totalorder %s28, 0
      %p223 = por %p221, %p222
      %s225 = sadd.s32 %s224, 1
      %p228 = scmp.eq.s32.totalorder %s22, 2
      %p229 = scmp.ne.s32.totalorder %s224, %s226
      %p230 = scmp.eq.s32.totalorder %s22, 0
      %p231 = por %p229, %p230
      %p232 = scmp.ne.s32.totalorder %s224, %s226
      %p233 = scmp.eq.s32.totalorder %s27, 2
      %p234 = por %p232, %p233
      %p235 = scmp.ne.s32.totalorder %s226, %s227
      %p236 = scmp.eq.s32.totalorder %s27, 0
      %p237 = por %p235, %p236
      %p238 = scmp.ne.s32.totalorder %s226, %s227
      %p239 = scmp.eq.s32.totalorder %s28, 2
      %p240 = por %p238, %p239
      %p242 = scmp.ne.s32.totalorder %s227, %s241
      %p243 = scmp.eq.s32.totalorder %s28, 0
      %p244 = por %p242, %p243
      %p245 = scmp.le.s32.totalorder 1, %s22
      %p246 = scmp.lt.s32.totalorder %s22, 4
      %p247 = pnand %p245, %p246
      %p248 = pneg %p247
      // Predicated region
      $region9: #{net_forward.1} parent=5 // pred_check
        _
      $region10: #{net_forward.1} parent=5 // pred_check_branch
        %250 = sbr.rel (%p247) target = $region12
      $region11: #{net_forward.1} parent=5 // pred_region
        %s251 = ssub.s32 %s22, 1
        // Predicated region
        $region13: #{net_forward.1} parent=11 // pred_check
          %p252 = pneg %p43
        $region14: #{net_forward.1} parent=11 // pred_check_branch
          %254 = sbr.rel (%p252) target = $region16
        $region15: #{net_forward.1} parent=11 // pred_region
          _
        $region16: #{net_forward.1} parent=11 // pred_fallthru
          _
        // Predicated region
        $region17: #{net_forward.1} parent=11 // pred_check
          %p255 = pneg %p64
        $region18: #{net_forward.1} parent=11 // pred_check_branch
          %257 = sbr.rel (%p255) target = $region20
        $region19: #{net_forward.1} parent=11 // pred_region
          %s259 = ssub.s32 64, 64
          %260 = vsyncadd [#allocation8], %s259
          %s262 = sshll.u32 [#allocation7], 4
          %s263 = int_to_ptr.vmem [resolvable:$true] %s262
          %265 = dma.hbm_to_vmem [thread:$0]  %s1, 64, %s263, [#allocation8]
        $region20: #{net_forward.1} parent=11 // pred_fallthru
          _
        // Predicated region
        $region21: #{net_forward.1} parent=11 // pred_check
          %p266 = pneg %p85
        $region22: #{net_forward.1} parent=11 // pred_check_branch
          %268 = sbr.rel (%p266) target = $region24
        $region23: #{net_forward.1} parent=11 // pred_region
          %s270 = ssub.s32 16, 16
          %271 = vsyncadd [#allocation11], %s270
          %s273 = sshll.u32 [#allocation10], 4
          %s274 = int_to_ptr.vmem [resolvable:$true] %s273
          %276 = dma.hbm_to_vmem [thread:$0]  %s2, 16, %s274, [#allocation11]
        $region24: #{net_forward.1} parent=11 // pred_fallthru
          _
        // Predicated region
        $region25: #{net_forward.1} parent=11 // pred_check
          %p277 = pneg %p106
        $region26: #{net_forward.1} parent=11 // pred_check_branch
          %279 = sbr.rel (%p277) target = $region28
        $region27: #{net_forward.1} parent=11 // pred_region
          _
        $region28: #{net_forward.1} parent=11 // pred_fallthru
          _
        // Predicated region
        $region29: #{net_forward.1} parent=11 // pred_check
          %p280 = pneg %p127
        $region30: #{net_forward.1} parent=11 // pred_check_branch
          %282 = sbr.rel (%p280) target = $region32
        $region31: #{net_forward.1} parent=11 // pred_region
          %s284 = ssub.s32 16, 16
          %285 = vsyncadd [#allocation11], %s284
          %s287 = sshll.u32 [#allocation12], 4
          %s288 = int_to_ptr.vmem [resolvable:$true] %s287
          %290 = dma.hbm_to_vmem [thread:$0]  %s4, 16, %s288, [#allocation11]
        $region32: #{net_forward.1} parent=11 // pred_fallthru
          _
        // Predicated region
        $region33: #{net_forward.1} parent=11 // pred_check
          %p291 = pneg %p174
        $region34: #{net_forward.1} parent=11 // pred_check_branch
          %293 = sbr.rel (%p291) target = $region36
        $region35: #{net_forward.1} parent=11 // pred_region
          %s295 = ssub.s32 64, 64
          %296 = vsyncadd [#allocation14], %s295
          %s298 = sshll.u32 [#allocation15], 4
          %s299 = int_to_ptr.vmem [resolvable:$true] %s298
          %301 = dma.hbm_to_vmem [thread:$0]  %s6, 64, %s299, [#allocation14]
        $region36: #{net_forward.1} parent=11 // pred_fallthru
          _
        // Predicated region
        $region37: #{net_forward.1} parent=11 // pred_check
          %p302 = pneg %p195
        $region38: #{net_forward.1} parent=11 // pred_check_branch
          %304 = sbr.rel (%p302) target = $region40
        $region39: #{net_forward.1} parent=11 // pred_region
          _
        $region40: #{net_forward.1} parent=11 // pred_fallthru
          _
        // Predicated region
        $region41: #{net_forward.1} parent=11 // pred_check
          %p305 = pneg %p216
        $region42: #{net_forward.1} parent=11 // pred_check_branch
          %307 = sbr.rel (%p305) target = $region44
        $region43: #{net_forward.1} parent=11 // pred_region
          %s309 = ssub.s32 16, 16
          %310 = vsyncadd [#allocation17], %s309
          %s312 = sshll.u32 [#allocation16], 4
          %s313 = int_to_ptr.vmem [resolvable:$true] %s312
          %315 = dma.hbm_to_vmem [thread:$0]  %s8, 16, %s313, [#allocation17]
        $region44: #{net_forward.1} parent=11 // pred_fallthru
          _
      $region12: #{net_forward.1} parent=5 // pred_fallthru
        _
      %p316 = scmp.lt.s32.totalorder %s22, 3
      // Predicated region
      $region45: #{net_forward.1} parent=5 // pred_check
        %p317 = pneg %p316
      $region46: #{net_forward.1} parent=5 // pred_check_branch
        %319 = sbr.rel (%p317) target = $region48
      $region47: #{net_forward.1} parent=5 // pred_region
        // Predicated region
        $region49: #{net_forward.1} parent=47 // pred_check
          %p320 = pneg %p147
        $region50: #{net_forward.1} parent=47 // pred_check_branch
          %322 = sbr.rel (%p320) target = $region52
        $region51: #{net_forward.1} parent=47 // pred_region
          %s323 = sand.u32 %s22, 1
          %s324 = scalar_lea.sflag [#allocation14], %s323
          %s325 = sand.u32 %s137, 1
          %s326 = smul.addr %s325, 1024
          %s327 = scalar_lea.vmem [#allocation13], %s326
          %s328 = smul.u32 64, %s22
          %s330 = ssub.s32 16384, 16384
          %331 = vsyncadd %s324, %s330
          %s332 = smul.addr %s328, 4
          %s333 = smul.addr %s332, 64
          %s334 = scalar_lea.hbm %s5, %s333
          %s335 = sshll.u32 %s327, 4
          %s336 = int_to_ptr.vmem [resolvable:$true] %s335
          %341 = dma.hbm_to_vmem [thread:$0]  %s334, 16384, %s336, %s324, 256, 256, 16
        $region52: #{net_forward.1} parent=47 // pred_fallthru
          _
      $region48: #{net_forward.1} parent=5 // pred_fallthru
        _
      %p342 = scmp.le.s32.totalorder 1, %s22
      %p343 = scmp.lt.s32.totalorder %s22, 4
      %p344 = pnand %p342, %p343
      %p345 = pneg %p344
      // Predicated region
      $region53: #{net_forward.1} parent=5 // pred_check
        _
      $region54: #{net_forward.1} parent=5 // pred_check_branch
        %347 = sbr.rel (%p344) target = $region56
      $region55: #{net_forward.1} parent=5 // pred_region
        %s348 = ssub.s32 %s22, 1
        // Predicated region
        $region57: #{net_forward.1} parent=55 // pred_check
          %p349 = pneg %p64
        $region58: #{net_forward.1} parent=55 // pred_check_branch
          %351 = sbr.rel (%p349) target = $region60
        $region59: #{net_forward.1} parent=55 // pred_region
          %352 = dma.done [#allocation8], 64
        $region60: #{net_forward.1} parent=55 // pred_fallthru
          _
        // Predicated region
        $region61: #{net_forward.1} parent=55 // pred_check
          %p353 = pneg %p85
        $region62: #{net_forward.1} parent=55 // pred_check_branch
          %355 = sbr.rel (%p353) target = $region64
        $region63: #{net_forward.1} parent=55 // pred_region
          %356 = dma.done [#allocation11], 16
        $region64: #{net_forward.1} parent=55 // pred_fallthru
          _
        // Predicated region
        $region65: #{net_forward.1} parent=55 // pred_check
          %p357 = pneg %p127
        $region66: #{net_forward.1} parent=55 // pred_check_branch
          %359 = sbr.rel (%p357) target = $region68
        $region67: #{net_forward.1} parent=55 // pred_region
          %360 = dma.done [#allocation11], 16
        $region68: #{net_forward.1} parent=55 // pred_fallthru
          _
        %s361 = sand.u32 %s27, 1
        %s362 = scalar_lea.sflag [#allocation14], %s361
        %s363 = sand.u32 %s140, 1
        %s364 = smul.addr %s363, 1024
        %s365 = scalar_lea.vmem [#allocation13], %s364
        // Predicated region
        $region69: #{net_forward.1} parent=55 // pred_check
          %p366 = pneg %p153
        $region70: #{net_forward.1} parent=55 // pred_check_branch
          %368 = sbr.rel (%p366) target = $region72
        $region71: #{net_forward.1} parent=55 // pred_region
          %369 = dma.done %s362, 16384
        $region72: #{net_forward.1} parent=55 // pred_fallthru
          _
        // Predicated region
        $region73: #{net_forward.1} parent=55 // pred_check
          %p370 = pneg %p174
        $region74: #{net_forward.1} parent=55 // pred_check_branch
          %372 = sbr.rel (%p370) target = $region76
        $region75: #{net_forward.1} parent=55 // pred_region
          %373 = dma.done [#allocation14], 64
        $region76: #{net_forward.1} parent=55 // pred_fallthru
          _
        // Predicated region
        $region77: #{net_forward.1} parent=55 // pred_check
          %p374 = pneg %p216
        $region78: #{net_forward.1} parent=55 // pred_check_branch
          %376 = sbr.rel (%p374) target = $region80
        $region79: #{net_forward.1} parent=55 // pred_region
          %377 = dma.done [#allocation17], 16
        $region80: #{net_forward.1} parent=55 // pred_fallthru
          _
        %p378 = pneg %p43
        %p379 = pneg %p40
        %p380 = pneg %p64
        %p381 = pneg %p61
        %p382 = pneg %p85
        %p383 = pneg %p82
        %p384 = pneg %p106
        %p385 = pneg %p103
        %p386 = pneg %p127
        %p387 = pneg %p124
        %s388 = sand.u32 %s27, 1
        %s389 = scalar_lea.sflag [#allocation14], %s388
        %s390 = sand.u32 %s140, 1
        %s391 = smul.addr %s390, 1024
        %s392 = scalar_lea.vmem [#allocation13], %s391
        %p393 = pneg %p153
        %p394 = pneg %p150
        %p395 = pneg %p174
        %p396 = pneg %p171
        %p397 = pneg %p195
        %p398 = pneg %p192
        %p399 = pneg %p216
        %p400 = pneg %p213
        %p401 = pneg %p237
        %p402 = pneg %p234
        %s403 = smul.u32 64, %s27
        %p404 = scmp.eq.s32.totalorder %s27, 0
        // Predicated region
        $region81: #{net_forward.1} parent=55 // pred_check
          %p405 = pneg %p404
        $region82: #{net_forward.1} parent=55 // pred_check_branch
          %407 = sbr.rel (%p405) target = $region84
        $region83: #{net_forward.1} parent=55 // pred_region
          %408 = vst [vmem:[#allocation6] sm:$0xff] 0.0
          %v409 = vld [vmem:[%s0] sm:$0xff]
          %v410 = vld [vmem:[%s0 + $0x8] sm:$0xff]
          %v411 = vld [vmem:[%s0 + $0x10] sm:$0xff]
          %v412 = vld [vmem:[%s0 + $0x18] sm:$0xff]
          %v413 = vld [vmem:[%s0 + $0x20] sm:$0xff]
          %v414 = vld [vmem:[%s0 + $0x28] sm:$0xff]
          %v415 = vld [vmem:[%s0 + $0x30] sm:$0xff]
          %v416 = vld [vmem:[%s0 + $0x38] sm:$0xff]
          %v417 = vld [vmem:[%s0 + $0x40] sm:$0xff]
          %v418 = vld [vmem:[%s0 + $0x48] sm:$0xff]
          %v419 = vld [vmem:[%s0 + $0x50] sm:$0xff]
          %v420 = vld [vmem:[%s0 + $0x58] sm:$0xff]
          %v421 = vld [vmem:[%s0 + $0x60] sm:$0xff]
          %v422 = vld [vmem:[%s0 + $0x68] sm:$0xff]
          %v423 = vld [vmem:[%s0 + $0x70] sm:$0xff]
          %v424 = vld [vmem:[%s0 + $0x78] sm:$0xff]
          %v425 = vld [vmem:[%s0 + $0x80] sm:$0xff]
          %v426 = vld [vmem:[%s0 + $0x88] sm:$0xff]
          %v427 = vld [vmem:[%s0 + $0x90] sm:$0xff]
          %v428 = vld [vmem:[%s0 + $0x98] sm:$0xff]
          %v429 = vld [vmem:[%s0 + $0xa0] sm:$0xff]
          %v430 = vld [vmem:[%s0 + $0xa8] sm:$0xff]
          %v431 = vld [vmem:[%s0 + $0xb0] sm:$0xff]
          %v432 = vld [vmem:[%s0 + $0xb8] sm:$0x1]
          %v433 = vld [vmem:[#allocation7] sm:$0x1]
          %435 = vset.pattern.permute.xlu0 0
          %436 = vperm.xlu0 %435, %v409
          %v437 = vpop.permute.xlu0 %436
          %440 = vset.pattern.permute.xlu0 0
          %441 = vperm.xlu0 %440, %v410
          %v442 = vpop.permute.xlu0 %441
          %445 = vset.pattern.permute.xlu0 0
          %446 = vperm.xlu0 %445, %v411
          %v447 = vpop.permute.xlu0 %446
          %450 = vset.pattern.permute.xlu0 0
          %451 = vperm.xlu0 %450, %v412
          %v452 = vpop.permute.xlu0 %451
          %455 = vset.pattern.permute.xlu0 0
          %456 = vperm.xlu0 %455, %v413
          %v457 = vpop.permute.xlu0 %456
          %460 = vset.pattern.permute.xlu0 0
          %461 = vperm.xlu0 %460, %v414
          %v462 = vpop.permute.xlu0 %461
          %465 = vset.pattern.permute.xlu0 0
          %466 = vperm.xlu0 %465, %v415
          %v467 = vpop.permute.xlu0 %466
          %470 = vset.pattern.permute.xlu0 0
          %471 = vperm.xlu0 %470, %v416
          %v472 = vpop.permute.xlu0 %471
          %475 = vset.pattern.permute.xlu0 0
          %476 = vperm.xlu0 %475, %v417
          %v477 = vpop.permute.xlu0 %476
          %480 = vset.pattern.permute.xlu0 0
          %481 = vperm.xlu0 %480, %v418
          %v482 = vpop.permute.xlu0 %481
          %485 = vset.pattern.permute.xlu0 0
          %486 = vperm.xlu0 %485, %v419
          %v487 = vpop.permute.xlu0 %486
          %490 = vset.pattern.permute.xlu0 0
          %491 = vperm.xlu0 %490, %v420
          %v492 = vpop.permute.xlu0 %491
          %495 = vset.pattern.permute.xlu0 0
          %496 = vperm.xlu0 %495, %v421
          %v497 = vpop.permute.xlu0 %496
          %500 = vset.pattern.permute.xlu0 0
          %501 = vperm.xlu0 %500, %v422
          %v502 = vpop.permute.xlu0 %501
          %505 = vset.pattern.permute.xlu0 0
          %506 = vperm.xlu0 %505, %v423
          %v507 = vpop.permute.xlu0 %506
          %510 = vset.pattern.permute.xlu0 0
          %511 = vperm.xlu0 %510, %v424
          %v512 = vpop.permute.xlu0 %511
          %515 = vset.pattern.permute.xlu0 0
          %516 = vperm.xlu0 %515, %v425
          %v517 = vpop.permute.xlu0 %516
          %520 = vset.pattern.permute.xlu0 0
          %521 = vperm.xlu0 %520, %v426
          %v522 = vpop.permute.xlu0 %521
          %525 = vset.pattern.permute.xlu0 0
          %526 = vperm.xlu0 %525, %v427
          %v527 = vpop.permute.xlu0 %526
          %530 = vset.pattern.permute.xlu0 0
          %531 = vperm.xlu0 %530, %v428
          %v532 = vpop.permute.xlu0 %531
          %535 = vset.pattern.permute.xlu0 0
          %536 = vperm.xlu0 %535, %v429
          %v537 = vpop.permute.xlu0 %536
          %540 = vset.pattern.permute.xlu0 0
          %541 = vperm.xlu0 %540, %v430
          %v542 = vpop.permute.xlu0 %541
          %545 = vset.pattern.permute.xlu0 0
          %546 = vperm.xlu0 %545, %v431
          %v547 = vpop.permute.xlu0 %546
          %550 = vset.pattern.permute.xlu0 0
          %551 = vperm.xlu0 %550, %v432
          %v552 = vpop.permute.xlu0 %551
          %v554 = vlaneseq
          %v555 = vshrl.u32 %v554, 7
          %v556 = vsub.s32 0, %v555
          %v557 = vrot.slane %v433, %v556
          %v558 = vmul.f32 %v437, %v557
          %v559 = vmul.f32 %v442, %v557
          %v560 = vmul.f32 %v447, %v557
          %v561 = vmul.f32 %v452, %v557
          %v562 = vmul.f32 %v457, %v557
          %v563 = vmul.f32 %v462, %v557
          %v564 = vmul.f32 %v467, %v557
          %v565 = vmul.f32 %v472, %v557
          %v566 = vmul.f32 %v477, %v557
          %v567 = vmul.f32 %v482, %v557
          %v568 = vmul.f32 %v487, %v557
          %v569 = vmul.f32 %v492, %v557
          %v570 = vmul.f32 %v497, %v557
          %v571 = vmul.f32 %v502, %v557
          %v572 = vmul.f32 %v507, %v557
          %v573 = vmul.f32 %v512, %v557
          %v574 = vmul.f32 %v517, %v557
          %v575 = vmul.f32 %v522, %v557
          %v576 = vmul.f32 %v527, %v557
          %v577 = vmul.f32 %v532, %v557
          %v578 = vmul.f32 %v537, %v557
          %v579 = vmul.f32 %v542, %v557
          %v580 = vmul.f32 %v547, %v557
          %v581 = vmul.f32 %v552, %v557
          %v582 = vld [vmem:[%s0 + $0x1] sm:$0xff]
          %v583 = vld [vmem:[%s0 + $0x9] sm:$0xff]
          %v584 = vld [vmem:[%s0 + $0x11] sm:$0xff]
          %v585 = vld [vmem:[%s0 + $0x19] sm:$0xff]
          %v586 = vld [vmem:[%s0 + $0x21] sm:$0xff]
          %v587 = vld [vmem:[%s0 + $0x29] sm:$0xff]
          %v588 = vld [vmem:[%s0 + $0x31] sm:$0xff]
          %v589 = vld [vmem:[%s0 + $0x39] sm:$0xff]
          %v590 = vld [vmem:[%s0 + $0x41] sm:$0xff]
          %v591 = vld [vmem:[%s0 + $0x49] sm:$0xff]
          %v592 = vld [vmem:[%s0 + $0x51] sm:$0xff]
          %v593 = vld [vmem:[%s0 + $0x59] sm:$0xff]
          %v594 = vld [vmem:[%s0 + $0x61] sm:$0xff]
          %v595 = vld [vmem:[%s0 + $0x69] sm:$0xff]
          %v596 = vld [vmem:[%s0 + $0x71] sm:$0xff]
          %v597 = vld [vmem:[%s0 + $0x79] sm:$0xff]
          %v598 = vld [vmem:[%s0 + $0x81] sm:$0xff]
          %v599 = vld [vmem:[%s0 + $0x89] sm:$0xff]
          %v600 = vld [vmem:[%s0 + $0x91] sm:$0xff]
          %v601 = vld [vmem:[%s0 + $0x99] sm:$0xff]
          %v602 = vld [vmem:[%s0 + $0xa1] sm:$0xff]
          %v603 = vld [vmem:[%s0 + $0xa9] sm:$0xff]
          %v604 = vld [vmem:[%s0 + $0xb1] sm:$0xff]
          %v605 = vld [vmem:[%s0 + $0xb9] sm:$0x1]
          %v606 = vld [vmem:[#allocation7 + $0x1] sm:$0x1]
          %608 = vset.pattern.permute.xlu0 0
          %609 = vperm.xlu0 %608, %v582
          %v610 = vpop.permute.xlu0 %609
          %613 = vset.pattern.permute.xlu0 0
          %614 = vperm.xlu0 %613, %v583
          %v615 = vpop.permute.xlu0 %614
          %618 = vset.pattern.permute.xlu0 0
          %619 = vperm.xlu0 %618, %v584
          %v620 = vpop.permute.xlu0 %619
          %623 = vset.pattern.permute.xlu0 0
          %624 = vperm.xlu0 %623, %v585
          %v625 = vpop.permute.xlu0 %624
          %628 = vset.pattern.permute.xlu0 0
          %629 = vperm.xlu0 %628, %v586
          %v630 = vpop.permute.xlu0 %629
          %633 = vset.pattern.permute.xlu0 0
          %634 = vperm.xlu0 %633, %v587
          %v635 = vpop.permute.xlu0 %634
          %638 = vset.pattern.permute.xlu0 0
          %639 = vperm.xlu0 %638, %v588
          %v640 = vpop.permute.xlu0 %639
          %643 = vset.pattern.permute.xlu0 0
          %644 = vperm.xlu0 %643, %v589
          %v645 = vpop.permute.xlu0 %644
          %648 = vset.pattern.permute.xlu0 0
          %649 = vperm.xlu0 %648, %v590
          %v650 = vpop.permute.xlu0 %649
          %653 = vset.pattern.permute.xlu0 0
          %654 = vperm.xlu0 %653, %v591
          %v655 = vpop.permute.xlu0 %654
          %658 = vset.pattern.permute.xlu0 0
          %659 = vperm.xlu0 %658, %v592
          %v660 = vpop.permute.xlu0 %659
          %663 = vset.pattern.permute.xlu0 0
          %664 = vperm.xlu0 %663, %v593
          %v665 = vpop.permute.xlu0 %664
          %668 = vset.pattern.permute.xlu0 0
          %669 = vperm.xlu0 %668, %v594
          %v670 = vpop.permute.xlu0 %669
          %673 = vset.pattern.permute.xlu0 0
          %674 = vperm.xlu0 %673, %v595
          %v675 = vpop.permute.xlu0 %674
          %678 = vset.pattern.permute.xlu0 0
          %679 = vperm.xlu0 %678, %v596
          %v680 = vpop.permute.xlu0 %679
          %683 = vset.pattern.permute.xlu0 0
          %684 = vperm.xlu0 %683, %v597
          %v685 = vpop.permute.xlu0 %684
          %688 = vset.pattern.permute.xlu0 0
          %689 = vperm.xlu0 %688, %v598
          %v690 = vpop.permute.xlu0 %689
          %693 = vset.pattern.permute.xlu0 0
          %694 = vperm.xlu0 %693, %v599
          %v695 = vpop.permute.xlu0 %694
          %698 = vset.pattern.permute.xlu0 0
          %699 = vperm.xlu0 %698, %v600
          %v700 = vpop.permute.xlu0 %699
          %703 = vset.pattern.permute.xlu0 0
          %704 = vperm.xlu0 %703, %v601
          %v705 = vpop.permute.xlu0 %704
          %708 = vset.pattern.permute.xlu0 0
          %709 = vperm.xlu0 %708, %v602
          %v710 = vpop.permute.xlu0 %709
          %713 = vset.pattern.permute.xlu0 0
          %714 = vperm.xlu0 %713, %v603
          %v715 = vpop.permute.xlu0 %714
          %718 = vset.pattern.permute.xlu0 0
          %719 = vperm.xlu0 %718, %v604
          %v720 = vpop.permute.xlu0 %719
          %723 = vset.pattern.permute.xlu0 0
          %724 = vperm.xlu0 %723, %v605
          %v725 = vpop.permute.xlu0 %724
          %v727 = vlaneseq
          %v728 = vshrl.u32 %v727, 7
          %v729 = vsub.s32 0, %v728
          %v730 = vrot.slane %v606, %v729
          %v731 = vmul.f32 %v610, %v730
          %v732 = vmul.f32 %v615, %v730
          %v733 = vmul.f32 %v620, %v730
          %v734 = vmul.f32 %v625, %v730
          %v735 = vmul.f32 %v630, %v730
          %v736 = vmul.f32 %v635, %v730
          %v737 = vmul.f32 %v640, %v730
          %v738 = vmul.f32 %v645, %v730
          %v739 = vmul.f32 %v650, %v730
          %v740 = vmul.f32 %v655, %v730
          %v741 = vmul.f32 %v660, %v730
          %v742 = vmul.f32 %v665, %v730
          %v743 = vmul.f32 %v670, %v730
          %v744 = vmul.f32 %v675, %v730
          %v745 = vmul.f32 %v680, %v730
          %v746 = vmul.f32 %v685, %v730
          %v747 = vmul.f32 %v690, %v730
          %v748 = vmul.f32 %v695, %v730
          %v749 = vmul.f32 %v700, %v730
          %v750 = vmul.f32 %v705, %v730
          %v751 = vmul.f32 %v710, %v730
          %v752 = vmul.f32 %v715, %v730
          %v753 = vmul.f32 %v720, %v730
          %v754 = vmul.f32 %v725, %v730
          %v755 = vadd.f32 %v558, %v731
          %v756 = vadd.f32 %v559, %v732
          %v757 = vadd.f32 %v560, %v733
          %v758 = vadd.f32 %v561, %v734
          %v759 = vadd.f32 %v562, %v735
          %v760 = vadd.f32 %v563, %v736
          %v761 = vadd.f32 %v564, %v737
          %v762 = vadd.f32 %v565, %v738
          %v763 = vadd.f32 %v566, %v739
          %v764 = vadd.f32 %v567, %v740
          %v765 = vadd.f32 %v568, %v741
          %v766 = vadd.f32 %v569, %v742
          %v767 = vadd.f32 %v570, %v743
          %v768 = vadd.f32 %v571, %v744
          %v769 = vadd.f32 %v572, %v745
          %v770 = vadd.f32 %v573, %v746
          %v771 = vadd.f32 %v574, %v747
          %v772 = vadd.f32 %v575, %v748
          %v773 = vadd.f32 %v576, %v749
          %v774 = vadd.f32 %v577, %v750
          %v775 = vadd.f32 %v578, %v751
          %v776 = vadd.f32 %v579, %v752
          %v777 = vadd.f32 %v580, %v753
          %v778 = vadd.f32 %v581, %v754
          %v779 = vld [vmem:[%s0 + $0x2] sm:$0xff]
          %v780 = vld [vmem:[%s0 + $0xa] sm:$0xff]
          %v781 = vld [vmem:[%s0 + $0x12] sm:$0xff]
          %v782 = vld [vmem:[%s0 + $0x1a] sm:$0xff]
          %v783 = vld [vmem:[%s0 + $0x22] sm:$0xff]
          %v784 = vld [vmem:[%s0 + $0x2a] sm:$0xff]
          %v785 = vld [vmem:[%s0 + $0x32] sm:$0xff]
          %v786 = vld [vmem:[%s0 + $0x3a] sm:$0xff]
          %v787 = vld [vmem:[%s0 + $0x42] sm:$0xff]
          %v788 = vld [vmem:[%s0 + $0x4a] sm:$0xff]
          %v789 = vld [vmem:[%s0 + $0x52] sm:$0xff]
          %v790 = vld [vmem:[%s0 + $0x5a] sm:$0xff]
          %v791 = vld [vmem:[%s0 + $0x62] sm:$0xff]
          %v792 = vld [vmem:[%s0 + $0x6a] sm:$0xff]
          %v793 = vld [vmem:[%s0 + $0x72] sm:$0xff]
          %v794 = vld [vmem:[%s0 + $0x7a] sm:$0xff]
          %v795 = vld [vmem:[%s0 + $0x82] sm:$0xff]
          %v796 = vld [vmem:[%s0 + $0x8a] sm:$0xff]
          %v797 = vld [vmem:[%s0 + $0x92] sm:$0xff]
          %v798 = vld [vmem:[%s0 + $0x9a] sm:$0xff]
          %v799 = vld [vmem:[%s0 + $0xa2] sm:$0xff]
          %v800 = vld [vmem:[%s0 + $0xaa] sm:$0xff]
          %v801 = vld [vmem:[%s0 + $0xb2] sm:$0xff]
          %v802 = vld [vmem:[%s0 + $0xba] sm:$0x1]
          %v803 = vld [vmem:[#allocation7 + $0x2] sm:$0x1]
          %805 = vset.pattern.permute.xlu0 0
          %806 = vperm.xlu0 %805, %v779
          %v807 = vpop.permute.xlu0 %806
          %810 = vset.pattern.permute.xlu0 0
          %811 = vperm.xlu0 %810, %v780
          %v812 = vpop.permute.xlu0 %811
          %815 = vset.pattern.permute.xlu0 0
          %816 = vperm.xlu0 %815, %v781
          %v817 = vpop.permute.xlu0 %816
          %820 = vset.pattern.permute.xlu0 0
          %821 = vperm.xlu0 %820, %v782
          %v822 = vpop.permute.xlu0 %821
          %825 = vset.pattern.permute.xlu0 0
          %826 = vperm.xlu0 %825, %v783
          %v827 = vpop.permute.xlu0 %826
          %830 = vset.pattern.permute.xlu0 0
          %831 = vperm.xlu0 %830, %v784
          %v832 = vpop.permute.xlu0 %831
          %835 = vset.pattern.permute.xlu0 0
          %836 = vperm.xlu0 %835, %v785
          %v837 = vpop.permute.xlu0 %836
          %840 = vset.pattern.permute.xlu0 0
          %841 = vperm.xlu0 %840, %v786
          %v842 = vpop.permute.xlu0 %841
          %845 = vset.pattern.permute.xlu0 0
          %846 = vperm.xlu0 %845, %v787
          %v847 = vpop.permute.xlu0 %846
          %850 = vset.pattern.permute.xlu0 0
          %851 = vperm.xlu0 %850, %v788
          %v852 = vpop.permute.xlu0 %851
          %855 = vset.pattern.permute.xlu0 0
          %856 = vperm.xlu0 %855, %v789
          %v857 = vpop.permute.xlu0 %856
          %860 = vset.pattern.permute.xlu0 0
          %861 = vperm.xlu0 %860, %v790
          %v862 = vpop.permute.xlu0 %861
          %865 = vset.pattern.permute.xlu0 0
          %866 = vperm.xlu0 %865, %v791
          %v867 = vpop.permute.xlu0 %866
          %870 = vset.pattern.permute.xlu0 0
          %871 = vperm.xlu0 %870, %v792
          %v872 = vpop.permute.xlu0 %871
          %875 = vset.pattern.permute.xlu0 0
          %876 = vperm.xlu0 %875, %v793
          %v877 = vpop.permute.xlu0 %876
          %880 = vset.pattern.permute.xlu0 0
          %881 = vperm.xlu0 %880, %v794
          %v882 = vpop.permute.xlu0 %881
          %885 = vset.pattern.permute.xlu0 0
          %886 = vperm.xlu0 %885, %v795
          %v887 = vpop.permute.xlu0 %886
          %890 = vset.pattern.permute.xlu0 0
          %891 = vperm.xlu0 %890, %v796
          %v892 = vpop.permute.xlu0 %891
          %895 = vset.pattern.permute.xlu0 0
          %896 = vperm.xlu0 %895, %v797
          %v897 = vpop.permute.xlu0 %896
          %900 = vset.pattern.permute.xlu0 0
          %901 = vperm.xlu0 %900, %v798
          %v902 = vpop.permute.xlu0 %901
          %905 = vset.pattern.permute.xlu0 0
          %906 = vperm.xlu0 %905, %v799
          %v907 = vpop.permute.xlu0 %906
          %910 = vset.pattern.permute.xlu0 0
          %911 = vperm.xlu0 %910, %v800
          %v912 = vpop.permute.xlu0 %911
          %915 = vset.pattern.permute.xlu0 0
          %916 = vperm.xlu0 %915, %v801
          %v917 = vpop.permute.xlu0 %916
          %920 = vset.pattern.permute.xlu0 0
          %921 = vperm.xlu0 %920, %v802
          %v922 = vpop.permute.xlu0 %921
          %v924 = vlaneseq
          %v925 = vshrl.u32 %v924, 7
          %v926 = vsub.s32 0, %v925
          %v927 = vrot.slane %v803, %v926
          %v928 = vmul.f32 %v807, %v927
          %v929 = vmul.f32 %v812, %v927
          %v930 = vmul.f32 %v817, %v927
          %v931 = vmul.f32 %v822, %v927
          %v932 = vmul.f32 %v827, %v927
          %v933 = vmul.f32 %v832, %v927
          %v934 = vmul.f32 %v837, %v927
          %v935 = vmul.f32 %v842, %v927
          %v936 = vmul.f32 %v847, %v927
          %v937 = vmul.f32 %v852, %v927
          %v938 = vmul.f32 %v857, %v927
          %v939 = vmul.f32 %v862, %v927
          %v940 = vmul.f32 %v867, %v927
          %v941 = vmul.f32 %v872, %v927
          %v942 = vmul.f32 %v877, %v927
          %v943 = vmul.f32 %v882, %v927
          %v944 = vmul.f32 %v887, %v927
          %v945 = vmul.f32 %v892, %v927
          %v946 = vmul.f32 %v897, %v927
          %v947 = vmul.f32 %v902, %v927
          %v948 = vmul.f32 %v907, %v927
          %v949 = vmul.f32 %v912, %v927
          %v950 = vmul.f32 %v917, %v927
          %v951 = vmul.f32 %v922, %v927
          %v952 = vadd.f32 %v755, %v928
          %v953 = vadd.f32 %v756, %v929
          %v954 = vadd.f32 %v757, %v930
          %v955 = vadd.f32 %v758, %v931
          %v956 = vadd.f32 %v759, %v932
          %v957 = vadd.f32 %v760, %v933
          %v958 = vadd.f32 %v761, %v934
          %v959 = vadd.f32 %v762, %v935
          %v960 = vadd.f32 %v763, %v936
          %v961 = vadd.f32 %v764, %v937
          %v962 = vadd.f32 %v765, %v938
          %v963 = vadd.f32 %v766, %v939
          %v964 = vadd.f32 %v767, %v940
          %v965 = vadd.f32 %v768, %v941
          %v966 = vadd.f32 %v769, %v942
          %v967 = vadd.f32 %v770, %v943
          %v968 = vadd.f32 %v771, %v944
          %v969 = vadd.f32 %v772, %v945
          %v970 = vadd.f32 %v773, %v946
          %v971 = vadd.f32 %v774, %v947
          %v972 = vadd.f32 %v775, %v948
          %v973 = vadd.f32 %v776, %v949
          %v974 = vadd.f32 %v777, %v950
          %v975 = vadd.f32 %v778, %v951
          %v976 = vld [vmem:[#allocation10] sm:$0x1]
          %v978 = vlaneseq
          %v979 = vshrl.u32 %v978, 7
          %v980 = vsub.s32 0, %v979
          %v981 = vrot.slane %v976, %v980
          %v983 = vadd.f32 %v952, %v981
          %v984 = vadd.f32 %v953, %v981
          %v985 = vadd.f32 %v954, %v981
          %v986 = vadd.f32 %v955, %v981
          %v987 = vadd.f32 %v956, %v981
          %v988 = vadd.f32 %v957, %v981
          %v989 = vadd.f32 %v958, %v981
          %v990 = vadd.f32 %v959, %v981
          %v991 = vadd.f32 %v960, %v981
          %v992 = vadd.f32 %v961, %v981
          %v993 = vadd.f32 %v962, %v981
          %v994 = vadd.f32 %v963, %v981
          %v995 = vadd.f32 %v964, %v981
          %v996 = vadd.f32 %v965, %v981
          %v997 = vadd.f32 %v966, %v981
          %v998 = vadd.f32 %v967, %v981
          %v999 = vadd.f32 %v968, %v981
          %v1000 = vadd.f32 %v969, %v981
          %v1001 = vadd.f32 %v970, %v981
          %v1002 = vadd.f32 %v971, %v981
          %v1003 = vadd.f32 %v972, %v981
          %v1004 = vadd.f32 %v973, %v981
          %v1005 = vadd.f32 %v974, %v981
          %v1006 = vadd.f32 %v975, %v981
          %v1007 = vmax.f32 %v983, 0.0
          %v1008 = vmax.f32 %v984, 0.0
          %v1009 = vmax.f32 %v985, 0.0
          %v1010 = vmax.f32 %v986, 0.0
          %v1011 = vmax.f32 %v987, 0.0
          %v1012 = vmax.f32 %v988, 0.0
          %v1013 = vmax.f32 %v989, 0.0
          %v1014 = vmax.f32 %v990, 0.0
          %v1015 = vmax.f32 %v991, 0.0
          %v1016 = vmax.f32 %v992, 0.0
          %v1017 = vmax.f32 %v993, 0.0
          %v1018 = vmax.f32 %v994, 0.0
          %v1019 = vmax.f32 %v995, 0.0
          %v1020 = vmax.f32 %v996, 0.0
          %v1021 = vmax.f32 %v997, 0.0
          %v1022 = vmax.f32 %v998, 0.0
          %v1023 = vmax.f32 %v999, 0.0
          %v1024 = vmax.f32 %v1000, 0.0
          %v1025 = vmax.f32 %v1001, 0.0
          %v1026 = vmax.f32 %v1002, 0.0
          %v1027 = vmax.f32 %v1003, 0.0
          %v1028 = vmax.f32 %v1004, 0.0
          %v1029 = vmax.f32 %v1005, 0.0
          %v1030 = vmax.f32 %v1006, 0.0
          %vm1031 = vcmask 130048
          %1032 = vst.msk [vmem:[#allocation2] sm:$0xff] %vm1031, %v1007
          %1033 = vst.msk [vmem:[#allocation2 + $0x8] sm:$0xff] %vm1031, %v1008
          %1034 = vst.msk [vmem:[#allocation2 + $0x10] sm:$0xff] %vm1031, %v1009
          %1035 = vst.msk [vmem:[#allocation2 + $0x18] sm:$0xff] %vm1031, %v1010
          %1036 = vst.msk [vmem:[#allocation2 + $0x20] sm:$0xff] %vm1031, %v1011
          %1037 = vst.msk [vmem:[#allocation2 + $0x28] sm:$0xff] %vm1031, %v1012
          %1038 = vst.msk [vmem:[#allocation2 + $0x30] sm:$0xff] %vm1031, %v1013
          %1039 = vst.msk [vmem:[#allocation2 + $0x38] sm:$0xff] %vm1031, %v1014
          %1040 = vst.msk [vmem:[#allocation2 + $0x40] sm:$0xff] %vm1031, %v1015
          %1041 = vst.msk [vmem:[#allocation2 + $0x48] sm:$0xff] %vm1031, %v1016
          %1042 = vst.msk [vmem:[#allocation2 + $0x50] sm:$0xff] %vm1031, %v1017
          %1043 = vst.msk [vmem:[#allocation2 + $0x58] sm:$0xff] %vm1031, %v1018
          %1044 = vst.msk [vmem:[#allocation2 + $0x60] sm:$0xff] %vm1031, %v1019
          %1045 = vst.msk [vmem:[#allocation2 + $0x68] sm:$0xff] %vm1031, %v1020
          %1046 = vst.msk [vmem:[#allocation2 + $0x70] sm:$0xff] %vm1031, %v1021
          %1047 = vst.msk [vmem:[#allocation2 + $0x78] sm:$0xff] %vm1031, %v1022
          %1048 = vst.msk [vmem:[#allocation2 + $0x80] sm:$0xff] %vm1031, %v1023
          %1049 = vst.msk [vmem:[#allocation2 + $0x88] sm:$0xff] %vm1031, %v1024
          %1050 = vst.msk [vmem:[#allocation2 + $0x90] sm:$0xff] %vm1031, %v1025
          %1051 = vst.msk [vmem:[#allocation2 + $0x98] sm:$0xff] %vm1031, %v1026
          %1052 = vst.msk [vmem:[#allocation2 + $0xa0] sm:$0xff] %vm1031, %v1027
          %1053 = vst.msk [vmem:[#allocation2 + $0xa8] sm:$0xff] %vm1031, %v1028
          %1054 = vst.msk [vmem:[#allocation2 + $0xb0] sm:$0xff] %vm1031, %v1029
          %vm1055 = vcmask 122880
          %1056 = vst.msk [vmem:[#allocation2 + $0xb8] sm:$0x1] %vm1055, %v1030
          %v1057 = vld [vmem:[#allocation2] ss:$2 sm:$0xff]
          %s1058 = scalar_lea.vmem [#allocation2], 16
          %v1059 = vld [vmem:[%s1058] ss:$2 sm:$0xff]
          %s1060 = scalar_lea.vmem [#allocation2], 32
          %v1061 = vld [vmem:[%s1060] ss:$2 sm:$0xff]
          %s1062 = scalar_lea.vmem [#allocation2], 48
          %v1063 = vld [vmem:[%s1062] ss:$2 sm:$0xff]
          %s1064 = scalar_lea.vmem [#allocation2], 64
          %v1065 = vld [vmem:[%s1064] ss:$2 sm:$0xff]
          %s1066 = scalar_lea.vmem [#allocation2], 80
          %v1067 = vld [vmem:[%s1066] ss:$2 sm:$0xff]
          %s1068 = scalar_lea.vmem [#allocation2], 96
          %v1069 = vld [vmem:[%s1068] ss:$2 sm:$0xff]
          %s1070 = scalar_lea.vmem [#allocation2], 112
          %v1071 = vld [vmem:[%s1070] ss:$2 sm:$0xff]
          %s1072 = scalar_lea.vmem [#allocation2], 128
          %v1073 = vld [vmem:[%s1072] ss:$2 sm:$0xff]
          %s1074 = scalar_lea.vmem [#allocation2], 144
          %v1075 = vld [vmem:[%s1074] ss:$2 sm:$0xff]
          %s1076 = scalar_lea.vmem [#allocation2], 160
          %v1077 = vld [vmem:[%s1076] ss:$2 sm:$0xff]
          %s1078 = scalar_lea.vmem [#allocation2], 176
          %v1079 = vld [vmem:[%s1078] ss:$2 sm:$0xf]
          %s1080 = scalar_lea.vmem [#allocation2], 1
          %v1081 = vld [vmem:[%s1080] ss:$2 sm:$0xff]
          %s1082 = scalar_lea.vmem [#allocation2], 17
          %v1083 = vld [vmem:[%s1082] ss:$2 sm:$0xff]
          %s1084 = scalar_lea.vmem [#allocation2], 33
          %v1085 = vld [vmem:[%s1084] ss:$2 sm:$0xff]
          %s1086 = scalar_lea.vmem [#allocation2], 49
          %v1087 = vld [vmem:[%s1086] ss:$2 sm:$0xff]
          %s1088 = scalar_lea.vmem [#allocation2], 65
          %v1089 = vld [vmem:[%s1088] ss:$2 sm:$0xff]
          %s1090 = scalar_lea.vmem [#allocation2], 81
          %v1091 = vld [vmem:[%s1090] ss:$2 sm:$0xff]
          %s1092 = scalar_lea.vmem [#allocation2], 97
          %v1093 = vld [vmem:[%s1092] ss:$2 sm:$0xff]
          %s1094 = scalar_lea.vmem [#allocation2], 113
          %v1095 = vld [vmem:[%s1094] ss:$2 sm:$0xff]
          %s1096 = scalar_lea.vmem [#allocation2], 129
          %v1097 = vld [vmem:[%s1096] ss:$2 sm:$0xff]
          %s1098 = scalar_lea.vmem [#allocation2], 145
          %v1099 = vld [vmem:[%s1098] ss:$2 sm:$0xff]
          %s1100 = scalar_lea.vmem [#allocation2], 161
          %v1101 = vld [vmem:[%s1100] ss:$2 sm:$0xff]
          %s1102 = scalar_lea.vmem [#allocation2], 177
          %v1103 = vld [vmem:[%s1102] ss:$2 sm:$0xf]
          %v1104 = vmax.f32 %v1057, %v1081
          %v1105 = vmax.f32 %v1059, %v1083
          %v1106 = vmax.f32 %v1061, %v1085
          %v1107 = vmax.f32 %v1063, %v1087
          %v1108 = vmax.f32 %v1065, %v1089
          %v1109 = vmax.f32 %v1067, %v1091
          %v1110 = vmax.f32 %v1069, %v1093
          %v1111 = vmax.f32 %v1071, %v1095
          %v1112 = vmax.f32 %v1073, %v1097
          %v1113 = vmax.f32 %v1075, %v1099
          %v1114 = vmax.f32 %v1077, %v1101
          %v1115 = vmax.f32 %v1079, %v1103
          %vm1128 = vcmask 1046528
          %v1129 = vrot.slane %v1104, 1
          %v1130 = vrot.slane %v1105, 1
          %v1131 = vsel %vm1128, %v1129, %v1130
          %v1132 = vrot.slane %v1106, 1
          %v1133 = vsel %vm1128, %v1130, %v1132
          %v1134 = vrot.slane %v1107, 1
          %v1135 = vsel %vm1128, %v1132, %v1134
          %v1136 = vrot.slane %v1108, 1
          %v1137 = vsel %vm1128, %v1134, %v1136
          %v1138 = vrot.slane %v1109, 1
          %v1139 = vsel %vm1128, %v1136, %v1138
          %v1140 = vrot.slane %v1110, 1
          %v1141 = vsel %vm1128, %v1138, %v1140
          %v1142 = vrot.slane %v1111, 1
          %v1143 = vsel %vm1128, %v1140, %v1142
          %v1144 = vrot.slane %v1112, 1
          %v1145 = vsel %vm1128, %v1142, %v1144
          %v1146 = vrot.slane %v1113, 1
          %v1147 = vsel %vm1128, %v1144, %v1146
          %v1148 = vrot.slane %v1114, 1
          %v1149 = vsel %vm1128, %v1146, %v1148
          %v1150 = vrot.slane %v1115, 1
          %v1151 = vsel %vm1128, %v1148, %v1150
          %1152 = vrot.lane.b32.xlu0 %v1131, 16
          %v1153 = vpop.permute.xlu0 %1152
          %1154 = vrot.lane.b32.xlu0 %v1133, 16
          %v1155 = vpop.permute.xlu0 %1154
          %1156 = vrot.lane.b32.xlu0 %v1135, 16
          %v1157 = vpop.permute.xlu0 %1156
          %1158 = vrot.lane.b32.xlu0 %v1137, 16
          %v1159 = vpop.permute.xlu0 %1158
          %1160 = vrot.lane.b32.xlu0 %v1139, 16
          %v1161 = vpop.permute.xlu0 %1160
          %1162 = vrot.lane.b32.xlu0 %v1141, 16
          %v1163 = vpop.permute.xlu0 %1162
          %1164 = vrot.lane.b32.xlu0 %v1143, 16
          %v1165 = vpop.permute.xlu0 %1164
          %1166 = vrot.lane.b32.xlu0 %v1145, 16
          %v1167 = vpop.permute.xlu0 %1166
          %1168 = vrot.lane.b32.xlu0 %v1147, 16
          %v1169 = vpop.permute.xlu0 %1168
          %1170 = vrot.lane.b32.xlu0 %v1149, 16
          %v1171 = vpop.permute.xlu0 %1170
          %1172 = vrot.lane.b32.xlu0 %v1151, 16
          %v1173 = vpop.permute.xlu0 %1172
          %1174 = vrot.lane.b32.xlu0 %v1150, 16
          %v1175 = vpop.permute.xlu0 %1174
          %vm1188 = vcmask 1045504
          %v1189 = vrot.slane %v1104, 2
          %v1190 = vrot.slane %v1105, 2
          %v1191 = vsel %vm1188, %v1189, %v1190
          %v1192 = vrot.slane %v1106, 2
          %v1193 = vsel %vm1188, %v1190, %v1192
          %v1194 = vrot.slane %v1107, 2
          %v1195 = vsel %vm1188, %v1192, %v1194
          %v1196 = vrot.slane %v1108, 2
          %v1197 = vsel %vm1188, %v1194, %v1196
          %v1198 = vrot.slane %v1109, 2
          %v1199 = vsel %vm1188, %v1196, %v1198
          %v1200 = vrot.slane %v1110, 2
          %v1201 = vsel %vm1188, %v1198, %v1200
          %v1202 = vrot.slane %v1111, 2
          %v1203 = vsel %vm1188, %v1200, %v1202
          %v1204 = vrot.slane %v1112, 2
          %v1205 = vsel %vm1188, %v1202, %v1204
          %v1206 = vrot.slane %v1113, 2
          %v1207 = vsel %vm1188, %v1204, %v1206
          %v1208 = vrot.slane %v1114, 2
          %v1209 = vsel %vm1188, %v1206, %v1208
          %v1210 = vrot.slane %v1115, 2
          %v1211 = vsel %vm1188, %v1208, %v1210
          %1212 = vrot.lane.b32.xlu0 %v1191, 32
          %v1213 = vpop.permute.xlu0 %1212
          %1214 = vrot.lane.b32.xlu0 %v1193, 32
          %v1215 = vpop.permute.xlu0 %1214
          %1216 = vrot.lane.b32.xlu0 %v1195, 32
          %v1217 = vpop.permute.xlu0 %1216
          %1218 = vrot.lane.b32.xlu0 %v1197, 32
          %v1219 = vpop.permute.xlu0 %1218
          %1220 = vrot.lane.b32.xlu0 %v1199, 32
          %v1221 = vpop.permute.xlu0 %1220
          %1222 = vrot.lane.b32.xlu0 %v1201, 32
          %v1223 = vpop.permute.xlu0 %1222
          %1224 = vrot.lane.b32.xlu0 %v1203, 32
          %v1225 = vpop.permute.xlu0 %1224
          %1226 = vrot.lane.b32.xlu0 %v1205, 32
          %v1227 = vpop.permute.xlu0 %1226
          %1228 = vrot.lane.b32.xlu0 %v1207, 32
          %v1229 = vpop.permute.xlu0 %1228
          %1230 = vrot.lane.b32.xlu0 %v1209, 32
          %v1231 = vpop.permute.xlu0 %1230
          %1232 = vrot.lane.b32.xlu0 %v1211, 32
          %v1233 = vpop.permute.xlu0 %1232
          %1234 = vrot.lane.b32.xlu0 %v1210, 32
          %v1235 = vpop.permute.xlu0 %1234
          %v1248 = vsel %vm1031, %v1104, %v1153
          %v1249 = vsel %vm1031, %v1105, %v1155
          %v1250 = vsel %vm1031, %v1106, %v1157
          %v1251 = vsel %vm1031, %v1107, %v1159
          %v1252 = vsel %vm1031, %v1108, %v1161
          %v1253 = vsel %vm1031, %v1109, %v1163
          %v1254 = vsel %vm1031, %v1110, %v1165
          %v1255 = vsel %vm1031, %v1111, %v1167
          %v1256 = vsel %vm1031, %v1112, %v1169
          %v1257 = vsel %vm1031, %v1113, %v1171
          %v1258 = vsel %vm1031, %v1114, %v1173
          %v1259 = vsel %vm1031, %v1115, %v1175
          %vm1260 = vcmask 261120
          %v1261 = vsel %vm1260, %v1248, %v1213
          %v1262 = vsel %vm1260, %v1249, %v1215
          %v1263 = vsel %vm1260, %v1250, %v1217
          %v1264 = vsel %vm1260, %v1251, %v1219
          %v1265 = vsel %vm1260, %v1252, %v1221
          %v1266 = vsel %vm1260, %v1253, %v1223
          %v1267 = vsel %vm1260, %v1254, %v1225
          %v1268 = vsel %vm1260, %v1255, %v1227
          %v1269 = vsel %vm1260, %v1256, %v1229
          %v1270 = vsel %vm1260, %v1257, %v1231
          %v1271 = vsel %vm1260, %v1258, %v1233
          %v1272 = vsel %vm1260, %v1259, %v1235
          %v1273 = vld [vmem:[%s3] sm:$0xff]
          %v1274 = vld [vmem:[%s3 + $0x8] sm:$0xff]
          %v1275 = vld [vmem:[%s3 + $0x10] sm:$0xff]
          %v1276 = vld [vmem:[%s3 + $0x18] sm:$0xff]
          %v1277 = vld [vmem:[%s3 + $0x20] sm:$0xff]
          %v1278 = vld [vmem:[%s3 + $0x28] sm:$0xff]
          %v1279 = vld [vmem:[#allocation12] sm:$0x1]
          %v1281 = vlaneseq
          %v1282 = vshrl.u32 %v1281, 7
          %v1283 = vsub.s32 0, %v1282
          %v1284 = vrot.slane %v1279, %v1283
          %vm1286 = vcmask 392192
          %v1288 = vsel %vm1286, %v1261, 0
          %v1291 = vsel %vm1286, %v1262, 0
          %v1294 = vsel %vm1286, %v1263, 0
          %v1297 = vsel %vm1286, %v1264, 0
          %v1300 = vsel %vm1286, %v1265, 0
          %v1303 = vsel %vm1286, %v1266, 0
          %v1306 = vsel %vm1286, %v1267, 0
          %v1309 = vsel %vm1286, %v1268, 0
          %v1312 = vsel %vm1286, %v1269, 0
          %v1315 = vsel %vm1286, %v1270, 0
          %v1318 = vsel %vm1286, %v1271, 0
          %v1321 = vsel %vm1286, %v1272, 0
          %1323 = vmatprep.subr.mxu0 0.0
          %1324 = vmatpush1.msra.mxu0 %v1273
          %1325 = vmatprep.subr.mxu0 0.0
          %1326 = vmatpush1.msra.mxu0 %v1274
          %1327 = vmatprep.subr.mxu0 0.0
          %1328 = vmatpush1.msra.mxu0 %v1275
          %1329 = vmatprep.subr.mxu0 0.0
          %1330 = vmatpush1.msra.mxu0 %v1276
          %1331 = vmatprep.subr.mxu0 0.0
          %1332 = vmatpush1.msra.mxu0 %v1277
          %1333 = vmatprep.subr.mxu0 0.0
          %1334 = vmatpush1.msra.mxu0 %v1278
          %1335 = vmatprep.subr.mxu0 0.0
          %1336 = vmatpush1.msra.mxu0 0.0
          %1337 = vmatprep.subr.mxu0 0.0
          %1338 = vmatpush1.msra.mxu0 0.0
          %1339 = vmatprep.subr.mxu0 0.0
          %1340 = vmatpush1.msra.mxu0 0.0
          %1341 = vmatprep.subr.mxu0 0.0
          %1342 = vmatpush1.msra.mxu0 0.0
          %1343 = vmatprep.subr.mxu0 0.0
          %1344 = vmatpush1.msra.mxu0 0.0
          %1345 = vmatprep.subr.mxu0 0.0
          %1346 = vmatpush1.msra.mxu0 0.0
          %1347 = vmatprep.subr.mxu0 0.0
          %1348 = vmatpush1.msra.mxu0 0.0
          %1349 = vmatprep.subr.mxu0 0.0
          %1350 = vmatpush1.msra.mxu0 0.0
          %1351 = vmatprep.subr.mxu0 0.0
          %1352 = vmatpush1.msra.mxu0 0.0
          %1353 = vmatprep.subr.mxu0 0.0
          %1354 = vmatpush1.msra.mxu0 0.0
          %1355 = vmatprep.subr.mxu0 0.0
          %1356 = vmatpush1.msra.mxu0 0.0
          %1357 = vmatprep.subr.mxu0 0.0
          %1358 = vmatpush1.msra.mxu0 0.0
          %1359 = vmatprep.subr.mxu0 0.0
          %1360 = vmatpush1.msra.mxu0 0.0
          %1361 = vmatprep.subr.mxu0 0.0
          %1362 = vmatpush1.msra.mxu0 0.0
          %1363 = vmatprep.subr.mxu0 0.0
          %1364 = vmatpush1.msra.mxu0 0.0
          %1365 = vmatprep.subr.mxu0 0.0
          %1366 = vmatpush1.msra.mxu0 0.0
          %1367 = vmatprep.subr.mxu0 0.0
          %1368 = vmatpush1.msra.mxu0 0.0
          %1369 = vmatprep.subr.mxu0 0.0
          %1370 = vmatpush1.msra.mxu0 0.0
          %1371 = vmatprep.subr.mxu0 0.0
          %1372 = vmatpush1.msra.mxu0 0.0
          %1373 = vmatprep.subr.mxu0 0.0
          %1374 = vmatpush1.msra.mxu0 0.0
          %1375 = vmatprep.subr.mxu0 0.0
          %1376 = vmatpush1.msra.mxu0 0.0
          %1377 = vmatprep.subr.mxu0 0.0
          %1378 = vmatpush1.msra.mxu0 0.0
          %1379 = vmatprep.subr.mxu0 0.0
          %1380 = vmatpush1.msra.mxu0 0.0
          %1381 = vmatprep.subr.mxu0 0.0
          %1382 = vmatpush1.msra.mxu0 0.0
          %1383 = vmatprep.subr.mxu0 0.0
          %1384 = vmatpush1.msra.mxu0 0.0
          %1385 = vmatprep.subr.mxu0 0.0
          %1386 = vmatpush1.msra.mxu0 0.0
          %1387 = vmatprep.mubr.f32.mxu0 0.0
          %1388 = vmatmul.mubr.f32.gmra.mrb[0].mxu0 %v1288
          %v1389 = vpop.f32.mrb[0].mxu0
          %v1390 = vadd.f32 %v1284, %v1389
          %v1391 = vpop.f32.mrb[0].mxu0
          %1392 = vmatprep.mubr.f32.mxu0 0.0
          %1393 = vmatmul.mubr.f32.gmra.mrb[0].mxu0 %v1291
          %v1394 = vpop.f32.mrb[0].mxu0
          %v1395 = vadd.f32 %v1284, %v1394
          %v1396 = vpop.f32.mrb[0].mxu0
          %1397 = vmatprep.mubr.f32.mxu0 0.0
          %1398 = vmatmul.mubr.f32.gmra.mrb[0].mxu0 %v1294
          %v1399 = vpop.f32.mrb[0].mxu0
          %v1400 = vadd.f32 %v1284, %v1399
          %v1401 = vpop.f32.mrb[0].mxu0
          %1402 = vmatprep.mubr.f32.mxu0 0.0
          %1403 = vmatmul.mubr.f32.gmra.mrb[0].mxu0 %v1297
          %v1404 = vpop.f32.mrb[0].mxu0
          %v1405 = vadd.f32 %v1284, %v1404
          %v1406 = vpop.f32.mrb[0].mxu0
          %1407 = vmatprep.mubr.f32.mxu0 0.0
          %1408 = vmatmul.mubr.f32.gmra.mrb[0].mxu0 %v1300
          %v1409 = vpop.f32.mrb[0].mxu0
          %v1410 = vadd.f32 %v1284, %v1409
          %v1411 = vpop.f32.mrb[0].mxu0
          %1412 = vmatprep.mubr.f32.mxu0 0.0
          %1413 = vmatmul.mubr.f32.gmra.mrb[0].mxu0 %v1303
          %v1414 = vpop.f32.mrb[0].mxu0
          %v1415 = vadd.f32 %v1284, %v1414
          %v1416 = vpop.f32.mrb[0].mxu0
          %1417 = vmatprep.mubr.f32.mxu0 0.0
          %1418 = vmatmul.mubr.f32.gmra.mrb[0].mxu0 %v1306
          %v1419 = vpop.f32.mrb[0].mxu0
          %v1420 = vadd.f32 %v1284, %v1419
          %v1421 = vpop.f32.mrb[0].mxu0
          %1422 = vmatprep.mubr.f32.mxu0 0.0
          %1423 = vmatmul.mubr.f32.gmra.mrb[0].mxu0 %v1309
          %v1424 = vpop.f32.mrb[0].mxu0
          %v1425 = vadd.f32 %v1284, %v1424
          %v1426 = vpop.f32.mrb[0].mxu0
          %1427 = vmatprep.mubr.f32.mxu0 0.0
          %1428 = vmatmul.mubr.f32.gmra.mrb[0].mxu0 %v1312
          %v1429 = vpop.f32.mrb[0].mxu0
          %v1430 = vadd.f32 %v1284, %v1429
          %v1431 = vpop.f32.mrb[0].mxu0
          %1432 = vmatprep.mubr.f32.mxu0 0.0
          %1433 = vmatmul.mubr.f32.gmra.mrb[0].mxu0 %v1315
          %v1434 = vpop.f32.mrb[0].mxu0
          %v1435 = vadd.f32 %v1284, %v1434
          %v1436 = vpop.f32.mrb[0].mxu0
          %1437 = vmatprep.mubr.f32.mxu0 0.0
          %1438 = vmatmul.mubr.f32.gmra.mrb[0].mxu0 %v1318
          %v1439 = vpop.f32.mrb[0].mxu0
          %v1440 = vadd.f32 %v1284, %v1439
          %v1441 = vpop.f32.mrb[0].mxu0
          %1442 = vmatprep.mubr.f32.mxu0 0.0
          %1443 = vmatmul.mubr.f32.gmra.mrb[0].mxu0 %v1321
          %v1444 = vpop.f32.mrb[0].mxu0
          %v1445 = vadd.f32 %v1284, %v1444
          %v1446 = vpop.f32.mrb[0].mxu0
          %1447 = vdwg.mxu0
          %v1448 = vmax.f32 %v1390, 0.0
          %v1449 = vmax.f32 %v1395, 0.0
          %v1450 = vmax.f32 %v1400, 0.0
          %v1451 = vmax.f32 %v1405, 0.0
          %v1452 = vmax.f32 %v1410, 0.0
          %v1453 = vmax.f32 %v1415, 0.0
          %v1454 = vmax.f32 %v1420, 0.0
          %v1455 = vmax.f32 %v1425, 0.0
          %v1456 = vmax.f32 %v1430, 0.0
          %v1457 = vmax.f32 %v1435, 0.0
          %v1458 = vmax.f32 %v1440, 0.0
          %v1459 = vmax.f32 %v1445, 0.0
          %1460 = vst.msk [vmem:[#allocation3] sm:$0xff] %vm1260, %v1448
          %1461 = vst.msk [vmem:[#allocation3 + $0x8] sm:$0xff] %vm1260, %v1449
          %1462 = vst.msk [vmem:[#allocation3 + $0x10] sm:$0xff] %vm1260, %v1450
          %1463 = vst.msk [vmem:[#allocation3 + $0x18] sm:$0xff] %vm1260, %v1451
          %1464 = vst.msk [vmem:[#allocation3 + $0x20] sm:$0xff] %vm1260, %v1452
          %1465 = vst.msk [vmem:[#allocation3 + $0x28] sm:$0xff] %vm1260, %v1453
          %1466 = vst.msk [vmem:[#allocation3 + $0x30] sm:$0xff] %vm1260, %v1454
          %1467 = vst.msk [vmem:[#allocation3 + $0x38] sm:$0xff] %vm1260, %v1455
          %1468 = vst.msk [vmem:[#allocation3 + $0x40] sm:$0xff] %vm1260, %v1456
          %1469 = vst.msk [vmem:[#allocation3 + $0x48] sm:$0xff] %vm1260, %v1457
          %1470 = vst.msk [vmem:[#allocation3 + $0x50] sm:$0xff] %vm1260, %v1458
          %vm1471 = vcmask 254976
          %1472 = vst.msk [vmem:[#allocation3 + $0x58] sm:$0x3] %vm1471, %v1459
          %v1473 = vld [vmem:[#allocation3] ss:$2 sm:$0xff]
          %s1474 = scalar_lea.vmem [#allocation3], 16
          %v1475 = vld [vmem:[%s1474] ss:$2 sm:$0xff]
          %s1476 = scalar_lea.vmem [#allocation3], 32
          %v1477 = vld [vmem:[%s1476] ss:$2 sm:$0xff]
          %s1478 = scalar_lea.vmem [#allocation3], 48
          %v1479 = vld [vmem:[%s1478] ss:$2 sm:$0xff]
          %s1480 = scalar_lea.vmem [#allocation3], 64
          %v1481 = vld [vmem:[%s1480] ss:$2 sm:$0xff]
          %s1482 = scalar_lea.vmem [#allocation3], 80
          %v1483 = vld [vmem:[%s1482] ss:$2 sm:$0x1f]
          %s1484 = scalar_lea.vmem [#allocation3], 1
          %v1485 = vld [vmem:[%s1484] ss:$2 sm:$0xff]
          %s1486 = scalar_lea.vmem [#allocation3], 17
          %v1487 = vld [vmem:[%s1486] ss:$2 sm:$0xff]
          %s1488 = scalar_lea.vmem [#allocation3], 33
          %v1489 = vld [vmem:[%s1488] ss:$2 sm:$0xff]
          %s1490 = scalar_lea.vmem [#allocation3], 49
          %v1491 = vld [vmem:[%s1490] ss:$2 sm:$0xff]
          %s1492 = scalar_lea.vmem [#allocation3], 65
          %v1493 = vld [vmem:[%s1492] ss:$2 sm:$0xff]
          %s1494 = scalar_lea.vmem [#allocation3], 81
          %v1495 = vld [vmem:[%s1494] ss:$2 sm:$0x1f]
          %v1496 = vmax.f32 %v1473, %v1485
          %v1497 = vmax.f32 %v1475, %v1487
          %v1498 = vmax.f32 %v1477, %v1489
          %v1499 = vmax.f32 %v1479, %v1491
          %v1500 = vmax.f32 %v1481, %v1493
          %v1501 = vmax.f32 %v1483, %v1495
          %1502 = vst.msk [vmem:[#allocation4] sm:$0xff] %vm1260, %v1496
          %1503 = vst.msk [vmem:[#allocation4 + $0x8] sm:$0xff] %vm1260, %v1497
          %1504 = vst.msk [vmem:[#allocation4 + $0x10] sm:$0xff] %vm1260, %v1498
          %1505 = vst.msk [vmem:[#allocation4 + $0x18] sm:$0xff] %vm1260, %v1499
          %1506 = vst.msk [vmem:[#allocation4 + $0x20] sm:$0xff] %vm1260, %v1500
          %vm1507 = vcmask 258048
          %1508 = vst.msk [vmem:[#allocation4 + $0x28] sm:$0x1f] %vm1507, %v1501
          %s1509 = scalar_lea.vmem %s0, 192
          %v1510 = vld [vmem:[%s1509] sm:$0xff]
          %v1511 = vld [vmem:[%s1509 + $0x8] sm:$0xff]
          %v1512 = vld [vmem:[%s1509 + $0x10] sm:$0xff]
          %v1513 = vld [vmem:[%s1509 + $0x18] sm:$0xff]
          %v1514 = vld [vmem:[%s1509 + $0x20] sm:$0xff]
          %v1515 = vld [vmem:[%s1509 + $0x28] sm:$0xff]
          %v1516 = vld [vmem:[%s1509 + $0x30] sm:$0xff]
          %v1517 = vld [vmem:[%s1509 + $0x38] sm:$0xff]
          %v1518 = vld [vmem:[%s1509 + $0x40] sm:$0xff]
          %v1519 = vld [vmem:[%s1509 + $0x48] sm:$0xff]
          %v1520 = vld [vmem:[%s1509 + $0x50] sm:$0xff]
          %v1521 = vld [vmem:[%s1509 + $0x58] sm:$0xff]
          %v1522 = vld [vmem:[%s1509 + $0x60] sm:$0xff]
          %v1523 = vld [vmem:[%s1509 + $0x68] sm:$0xff]
          %v1524 = vld [vmem:[%s1509 + $0x70] sm:$0xff]
          %v1525 = vld [vmem:[%s1509 + $0x78] sm:$0xff]
          %v1526 = vld [vmem:[%s1509 + $0x80] sm:$0xff]
          %v1527 = vld [vmem:[%s1509 + $0x88] sm:$0xff]
          %v1528 = vld [vmem:[%s1509 + $0x90] sm:$0xff]
          %v1529 = vld [vmem:[%s1509 + $0x98] sm:$0xff]
          %v1530 = vld [vmem:[%s1509 + $0xa0] sm:$0xff]
          %v1531 = vld [vmem:[%s1509 + $0xa8] sm:$0xff]
          %v1532 = vld [vmem:[%s1509 + $0xb0] sm:$0xff]
          %v1533 = vld [vmem:[%s1509 + $0xb8] sm:$0x1]
          %v1534 = vld [vmem:[#allocation7] sm:$0x1]
          %1536 = vset.pattern.permute.xlu0 0
          %1537 = vperm.xlu0 %1536, %v1510
          %v1538 = vpop.permute.xlu0 %1537
          %1541 = vset.pattern.permute.xlu0 0
          %1542 = vperm.xlu0 %1541, %v1511
          %v1543 = vpop.permute.xlu0 %1542
          %1546 = vset.pattern.permute.xlu0 0
          %1547 = vperm.xlu0 %1546, %v1512
          %v1548 = vpop.permute.xlu0 %1547
          %1551 = vset.pattern.permute.xlu0 0
          %1552 = vperm.xlu0 %1551, %v1513
          %v1553 = vpop.permute.xlu0 %1552
          %1556 = vset.pattern.permute.xlu0 0
          %1557 = vperm.xlu0 %1556, %v1514
          %v1558 = vpop.permute.xlu0 %1557
          %1561 = vset.pattern.permute.xlu0 0
          %1562 = vperm.xlu0 %1561, %v1515
          %v1563 = vpop.permute.xlu0 %1562
          %1566 = vset.pattern.permute.xlu0 0
          %1567 = vperm.xlu0 %1566, %v1516
          %v1568 = vpop.permute.xlu0 %1567
          %1571 = vset.pattern.permute.xlu0 0
          %1572 = vperm.xlu0 %1571, %v1517
          %v1573 = vpop.permute.xlu0 %1572
          %1576 = vset.pattern.permute.xlu0 0
          %1577 = vperm.xlu0 %1576, %v1518
          %v1578 = vpop.permute.xlu0 %1577
          %1581 = vset.pattern.permute.xlu0 0
          %1582 = vperm.xlu0 %1581, %v1519
          %v1583 = vpop.permute.xlu0 %1582
          %1586 = vset.pattern.permute.xlu0 0
          %1587 = vperm.xlu0 %1586, %v1520
          %v1588 = vpop.permute.xlu0 %1587
          %1591 = vset.pattern.permute.xlu0 0
          %1592 = vperm.xlu0 %1591, %v1521
          %v1593 = vpop.permute.xlu0 %1592
          %1596 = vset.pattern.permute.xlu0 0
          %1597 = vperm.xlu0 %1596, %v1522
          %v1598 = vpop.permute.xlu0 %1597
          %1601 = vset.pattern.permute.xlu0 0
          %1602 = vperm.xlu0 %1601, %v1523
          %v1603 = vpop.permute.xlu0 %1602
          %1606 = vset.pattern.permute.xlu0 0
          %1607 = vperm.xlu0 %1606, %v1524
          %v1608 = vpop.permute.xlu0 %1607
          %1611 = vset.pattern.permute.xlu0 0
          %1612 = vperm.xlu0 %1611, %v1525
          %v1613 = vpop.permute.xlu0 %1612
          %1616 = vset.pattern.permute.xlu0 0
          %1617 = vperm.xlu0 %1616, %v1526
          %v1618 = vpop.permute.xlu0 %1617
          %1621 = vset.pattern.permute.xlu0 0
          %1622 = vperm.xlu0 %1621, %v1527
          %v1623 = vpop.permute.xlu0 %1622
          %1626 = vset.pattern.permute.xlu0 0
          %1627 = vperm.xlu0 %1626, %v1528
          %v1628 = vpop.permute.xlu0 %1627
          %1631 = vset.pattern.permute.xlu0 0
          %1632 = vperm.xlu0 %1631, %v1529
          %v1633 = vpop.permute.xlu0 %1632
          %1636 = vset.pattern.permute.xlu0 0
          %1637 = vperm.xlu0 %1636, %v1530
          %v1638 = vpop.permute.xlu0 %1637
          %1641 = vset.pattern.permute.xlu0 0
          %1642 = vperm.xlu0 %1641, %v1531
          %v1643 = vpop.permute.xlu0 %1642
          %1646 = vset.pattern.permute.xlu0 0
          %1647 = vperm.xlu0 %1646, %v1532
          %v1648 = vpop.permute.xlu0 %1647
          %1651 = vset.pattern.permute.xlu0 0
          %1652 = vperm.xlu0 %1651, %v1533
          %v1653 = vpop.permute.xlu0 %1652
          %v1655 = vlaneseq
          %v1656 = vshrl.u32 %v1655, 7
          %v1657 = vsub.s32 0, %v1656
          %v1658 = vrot.slane %v1534, %v1657
          %v1659 = vmul.f32 %v1538, %v1658
          %v1660 = vmul.f32 %v1543, %v1658
          %v1661 = vmul.f32 %v1548, %v1658
          %v1662 = vmul.f32 %v1553, %v1658
          %v1663 = vmul.f32 %v1558, %v1658
          %v1664 = vmul.f32 %v1563, %v1658
          %v1665 = vmul.f32 %v1568, %v1658
          %v1666 = vmul.f32 %v1573, %v1658
          %v1667 = vmul.f32 %v1578, %v1658
          %v1668 = vmul.f32 %v1583, %v1658
          %v1669 = vmul.f32 %v1588, %v1658
          %v1670 = vmul.f32 %v1593, %v1658
          %v1671 = vmul.f32 %v1598, %v1658
          %v1672 = vmul.f32 %v1603, %v1658
          %v1673 = vmul.f32 %v1608, %v1658
          %v1674 = vmul.f32 %v1613, %v1658
          %v1675 = vmul.f32 %v1618, %v1658
          %v1676 = vmul.f32 %v1623, %v1658
          %v1677 = vmul.f32 %v1628, %v1658
          %v1678 = vmul.f32 %v1633, %v1658
          %v1679 = vmul.f32 %v1638, %v1658
          %v1680 = vmul.f32 %v1643, %v1658
          %v1681 = vmul.f32 %v1648, %v1658
          %v1682 = vmul.f32 %v1653, %v1658
          %v1683 = vld [vmem:[%s1509 + $0x1] sm:$0xff]
          %v1684 = vld [vmem:[%s1509 + $0x9] sm:$0xff]
          %v1685 = vld [vmem:[%s1509 + $0x11] sm:$0xff]
          %v1686 = vld [vmem:[%s1509 + $0x19] sm:$0xff]
          %v1687 = vld [vmem:[%s1509 + $0x21] sm:$0xff]
          %v1688 = vld [vmem:[%s1509 + $0x29] sm:$0xff]
          %v1689 = vld [vmem:[%s1509 + $0x31] sm:$0xff]
          %v1690 = vld [vmem:[%s1509 + $0x39] sm:$0xff]
          %v1691 = vld [vmem:[%s1509 + $0x41] sm:$0xff]
          %v1692 = vld [vmem:[%s1509 + $0x49] sm:$0xff]
          %v1693 = vld [vmem:[%s1509 + $0x51] sm:$0xff]
          %v1694 = vld [vmem:[%s1509 + $0x59] sm:$0xff]
          %v1695 = vld [vmem:[%s1509 + $0x61] sm:$0xff]
          %v1696 = vld [vmem:[%s1509 + $0x69] sm:$0xff]
          %v1697 = vld [vmem:[%s1509 + $0x71] sm:$0xff]
          %v1698 = vld [vmem:[%s1509 + $0x79] sm:$0xff]
          %v1699 = vld [vmem:[%s1509 + $0x81] sm:$0xff]
          %v1700 = vld [vmem:[%s1509 + $0x89] sm:$0xff]
          %v1701 = vld [vmem:[%s1509 + $0x91] sm:$0xff]
          %v1702 = vld [vmem:[%s1509 + $0x99] sm:$0xff]
          %v1703 = vld [vmem:[%s1509 + $0xa1] sm:$0xff]
          %v1704 = vld [vmem:[%s1509 + $0xa9] sm:$0xff]
          %v1705 = vld [vmem:[%s1509 + $0xb1] sm:$0xff]
          %v1706 = vld [vmem:[%s1509 + $0xb9] sm:$0x1]
          %v1707 = vld [vmem:[#allocation7 + $0x1] sm:$0x1]
          %1709 = vset.pattern.permute.xlu0 0
          %1710 = vperm.xlu0 %1709, %v1683
          %v1711 = vpop.permute.xlu0 %1710
          %1714 = vset.pattern.permute.xlu0 0
          %1715 = vperm.xlu0 %1714, %v1684
          %v1716 = vpop.permute.xlu0 %1715
          %1719 = vset.pattern.permute.xlu0 0
          %1720 = vperm.xlu0 %1719, %v1685
          %v1721 = vpop.permute.xlu0 %1720
          %1724 = vset.pattern.permute.xlu0 0
          %1725 = vperm.xlu0 %1724, %v1686
          %v1726 = vpop.permute.xlu0 %1725
          %1729 = vset.pattern.permute.xlu0 0
          %1730 = vperm.xlu0 %1729, %v1687
          %v1731 = vpop.permute.xlu0 %1730
          %1734 = vset.pattern.permute.xlu0 0
          %1735 = vperm.xlu0 %1734, %v1688
          %v1736 = vpop.permute.xlu0 %1735
          %1739 = vset.pattern.permute.xlu0 0
          %1740 = vperm.xlu0 %1739, %v1689
          %v1741 = vpop.permute.xlu0 %1740
          %1744 = vset.pattern.permute.xlu0 0
          %1745 = vperm.xlu0 %1744, %v1690
          %v1746 = vpop.permute.xlu0 %1745
          %1749 = vset.pattern.permute.xlu0 0
          %1750 = vperm.xlu0 %1749, %v1691
          %v1751 = vpop.permute.xlu0 %1750
          %1754 = vset.pattern.permute.xlu0 0
          %1755 = vperm.xlu0 %1754, %v1692
          %v1756 = vpop.permute.xlu0 %1755
          %1759 = vset.pattern.permute.xlu0 0
          %1760 = vperm.xlu0 %1759, %v1693
          %v1761 = vpop.permute.xlu0 %1760
          %1764 = vset.pattern.permute.xlu0 0
          %1765 = vperm.xlu0 %1764, %v1694
          %v1766 = vpop.permute.xlu0 %1765
          %1769 = vset.pattern.permute.xlu0 0
          %1770 = vperm.xlu0 %1769, %v1695
          %v1771 = vpop.permute.xlu0 %1770
          %1774 = vset.pattern.permute.xlu0 0
          %1775 = vperm.xlu0 %1774, %v1696
          %v1776 = vpop.permute.xlu0 %1775
          %1779 = vset.pattern.permute.xlu0 0
          %1780 = vperm.xlu0 %1779, %v1697
          %v1781 = vpop.permute.xlu0 %1780
          %1784 = vset.pattern.permute.xlu0 0
          %1785 = vperm.xlu0 %1784, %v1698
          %v1786 = vpop.permute.xlu0 %1785
          %1789 = vset.pattern.permute.xlu0 0
          %1790 = vperm.xlu0 %1789, %v1699
          %v1791 = vpop.permute.xlu0 %1790
          %1794 = vset.pattern.permute.xlu0 0
          %1795 = vperm.xlu0 %1794, %v1700
          %v1796 = vpop.permute.xlu0 %1795
          %1799 = vset.pattern.permute.xlu0 0
          %1800 = vperm.xlu0 %1799, %v1701
          %v1801 = vpop.permute.xlu0 %1800
          %1804 = vset.pattern.permute.xlu0 0
          %1805 = vperm.xlu0 %1804, %v1702
          %v1806 = vpop.permute.xlu0 %1805
          %1809 = vset.pattern.permute.xlu0 0
          %1810 = vperm.xlu0 %1809, %v1703
          %v1811 = vpop.permute.xlu0 %1810
          %1814 = vset.pattern.permute.xlu0 0
          %1815 = vperm.xlu0 %1814, %v1704
          %v1816 = vpop.permute.xlu0 %1815
          %1819 = vset.pattern.permute.xlu0 0
          %1820 = vperm.xlu0 %1819, %v1705
          %v1821 = vpop.permute.xlu0 %1820
          %1824 = vset.pattern.permute.xlu0 0
          %1825 = vperm.xlu0 %1824, %v1706
          %v1826 = vpop.permute.xlu0 %1825
          %v1828 = vlaneseq
          %v1829 = vshrl.u32 %v1828, 7
          %v1830 = vsub.s32 0, %v1829
          %v1831 = vrot.slane %v1707, %v1830
          %v1832 = vmul.f32 %v1711, %v1831
          %v1833 = vmul.f32 %v1716, %v1831
          %v1834 = vmul.f32 %v1721, %v1831
          %v1835 = vmul.f32 %v1726, %v1831
          %v1836 = vmul.f32 %v1731, %v1831
          %v1837 = vmul.f32 %v1736, %v1831
          %v1838 = vmul.f32 %v1741, %v1831
          %v1839 = vmul.f32 %v1746, %v1831
          %v1840 = vmul.f32 %v1751, %v1831
          %v1841 = vmul.f32 %v1756, %v1831
          %v1842 = vmul.f32 %v1761, %v1831
          %v1843 = vmul.f32 %v1766, %v1831
          %v1844 = vmul.f32 %v1771, %v1831
          %v1845 = vmul.f32 %v1776, %v1831
          %v1846 = vmul.f32 %v1781, %v1831
          %v1847 = vmul.f32 %v1786, %v1831
          %v1848 = vmul.f32 %v1791, %v1831
          %v1849 = vmul.f32 %v1796, %v1831
          %v1850 = vmul.f32 %v1801, %v1831
          %v1851 = vmul.f32 %v1806, %v1831
          %v1852 = vmul.f32 %v1811, %v1831
          %v1853 = vmul.f32 %v1816, %v1831
          %v1854 = vmul.f32 %v1821, %v1831
          %v1855 = vmul.f32 %v1826, %v1831
          %v1856 = vadd.f32 %v1659, %v1832
          %v1857 = vadd.f32 %v1660, %v1833
          %v1858 = vadd.f32 %v1661, %v1834
          %v1859 = vadd.f32 %v1662, %v1835
          %v1860 = vadd.f32 %v1663, %v1836
          %v1861 = vadd.f32 %v1664, %v1837
          %v1862 = vadd.f32 %v1665, %v1838
          %v1863 = vadd.f32 %v1666, %v1839
          %v1864 = vadd.f32 %v1667, %v1840
          %v1865 = vadd.f32 %v1668, %v1841
          %v1866 = vadd.f32 %v1669, %v1842
          %v1867 = vadd.f32 %v1670, %v1843
          %v1868 = vadd.f32 %v1671, %v1844
          %v1869 = vadd.f32 %v1672, %v1845
          %v1870 = vadd.f32 %v1673, %v1846
          %v1871 = vadd.f32 %v1674, %v1847
          %v1872 = vadd.f32 %v1675, %v1848
          %v1873 = vadd.f32 %v1676, %v1849
          %v1874 = vadd.f32 %v1677, %v1850
          %v1875 = vadd.f32 %v1678, %v1851
          %v1876 = vadd.f32 %v1679, %v1852
          %v1877 = vadd.f32 %v1680, %v1853
          %v1878 = vadd.f32 %v1681, %v1854
          %v1879 = vadd.f32 %v1682, %v1855
          %v1880 = vld [vmem:[%s1509 + $0x2] sm:$0xff]
          %v1881 = vld [vmem:[%s1509 + $0xa] sm:$0xff]
          %v1882 = vld [vmem:[%s1509 + $0x12] sm:$0xff]
          %v1883 = vld [vmem:[%s1509 + $0x1a] sm:$0xff]
          %v1884 = vld [vmem:[%s1509 + $0x22] sm:$0xff]
          %v1885 = vld [vmem:[%s1509 + $0x2a] sm:$0xff]
          %v1886 = vld [vmem:[%s1509 + $0x32] sm:$0xff]
          %v1887 = vld [vmem:[%s1509 + $0x3a] sm:$0xff]
          %v1888 = vld [vmem:[%s1509 + $0x42] sm:$0xff]
          %v1889 = vld [vmem:[%s1509 + $0x4a] sm:$0xff]
          %v1890 = vld [vmem:[%s1509 + $0x52] sm:$0xff]
          %v1891 = vld [vmem:[%s1509 + $0x5a] sm:$0xff]
          %v1892 = vld [vmem:[%s1509 + $0x62] sm:$0xff]
          %v1893 = vld [vmem:[%s1509 + $0x6a] sm:$0xff]
          %v1894 = vld [vmem:[%s1509 + $0x72] sm:$0xff]
          %v1895 = vld [vmem:[%s1509 + $0x7a] sm:$0xff]
          %v1896 = vld [vmem:[%s1509 + $0x82] sm:$0xff]
          %v1897 = vld [vmem:[%s1509 + $0x8a] sm:$0xff]
          %v1898 = vld [vmem:[%s1509 + $0x92] sm:$0xff]
          %v1899 = vld [vmem:[%s1509 + $0x9a] sm:$0xff]
          %v1900 = vld [vmem:[%s1509 + $0xa2] sm:$0xff]
          %v1901 = vld [vmem:[%s1509 + $0xaa] sm:$0xff]
          %v1902 = vld [vmem:[%s1509 + $0xb2] sm:$0xff]
          %v1903 = vld [vmem:[%s1509 + $0xba] sm:$0x1]
          %v1904 = vld [vmem:[#allocation7 + $0x2] sm:$0x1]
          %1906 = vset.pattern.permute.xlu0 0
          %1907 = vperm.xlu0 %1906, %v1880
          %v1908 = vpop.permute.xlu0 %1907
          %1911 = vset.pattern.permute.xlu0 0
          %1912 = vperm.xlu0 %1911, %v1881
          %v1913 = vpop.permute.xlu0 %1912
          %1916 = vset.pattern.permute.xlu0 0
          %1917 = vperm.xlu0 %1916, %v1882
          %v1918 = vpop.permute.xlu0 %1917
          %1921 = vset.pattern.permute.xlu0 0
          %1922 = vperm.xlu0 %1921, %v1883
          %v1923 = vpop.permute.xlu0 %1922
          %1926 = vset.pattern.permute.xlu0 0
          %1927 = vperm.xlu0 %1926, %v1884
          %v1928 = vpop.permute.xlu0 %1927
          %1931 = vset.pattern.permute.xlu0 0
          %1932 = vperm.xlu0 %1931, %v1885
          %v1933 = vpop.permute.xlu0 %1932
          %1936 = vset.pattern.permute.xlu0 0
          %1937 = vperm.xlu0 %1936, %v1886
          %v1938 = vpop.permute.xlu0 %1937
          %1941 = vset.pattern.permute.xlu0 0
          %1942 = vperm.xlu0 %1941, %v1887
          %v1943 = vpop.permute.xlu0 %1942
          %1946 = vset.pattern.permute.xlu0 0
          %1947 = vperm.xlu0 %1946, %v1888
          %v1948 = vpop.permute.xlu0 %1947
          %1951 = vset.pattern.permute.xlu0 0
          %1952 = vperm.xlu0 %1951, %v1889
          %v1953 = vpop.permute.xlu0 %1952
          %1956 = vset.pattern.permute.xlu0 0
          %1957 = vperm.xlu0 %1956, %v1890
          %v1958 = vpop.permute.xlu0 %1957
          %1961 = vset.pattern.permute.xlu0 0
          %1962 = vperm.xlu0 %1961, %v1891
          %v1963 = vpop.permute.xlu0 %1962
          %1966 = vset.pattern.permute.xlu0 0
          %1967 = vperm.xlu0 %1966, %v1892
          %v1968 = vpop.permute.xlu0 %1967
          %1971 = vset.pattern.permute.xlu0 0
          %1972 = vperm.xlu0 %1971, %v1893
          %v1973 = vpop.permute.xlu0 %1972
          %1976 = vset.pattern.permute.xlu0 0
          %1977 = vperm.xlu0 %1976, %v1894
          %v1978 = vpop.permute.xlu0 %1977
          %1981 = vset.pattern.permute.xlu0 0
          %1982 = vperm.xlu0 %1981, %v1895
          %v1983 = vpop.permute.xlu0 %1982
          %1986 = vset.pattern.permute.xlu0 0
          %1987 = vperm.xlu0 %1986, %v1896
          %v1988 = vpop.permute.xlu0 %1987
          %1991 = vset.pattern.permute.xlu0 0
          %1992 = vperm.xlu0 %1991, %v1897
          %v1993 = vpop.permute.xlu0 %1992
          %1996 = vset.pattern.permute.xlu0 0
          %1997 = vperm.xlu0 %1996, %v1898
          %v1998 = vpop.permute.xlu0 %1997
          %2001 = vset.pattern.permute.xlu0 0
          %2002 = vperm.xlu0 %2001, %v1899
          %v2003 = vpop.permute.xlu0 %2002
          %2006 = vset.pattern.permute.xlu0 0
          %2007 = vperm.xlu0 %2006, %v1900
          %v2008 = vpop.permute.xlu0 %2007
          %2011 = vset.pattern.permute.xlu0 0
          %2012 = vperm.xlu0 %2011, %v1901
          %v2013 = vpop.permute.xlu0 %2012
          %2016 = vset.pattern.permute.xlu0 0
          %2017 = vperm.xlu0 %2016, %v1902
          %v2018 = vpop.permute.xlu0 %2017
          %2021 = vset.pattern.permute.xlu0 0
          %2022 = vperm.xlu0 %2021, %v1903
          %v2023 = vpop.permute.xlu0 %2022
          %v2025 = vlaneseq
          %v2026 = vshrl.u32 %v2025, 7
          %v2027 = vsub.s32 0, %v2026
          %v2028 = vrot.slane %v1904, %v2027
          %v2029 = vmul.f32 %v1908, %v2028
          %v2030 = vmul.f32 %v1913, %v2028
          %v2031 = vmul.f32 %v1918, %v2028
          %v2032 = vmul.f32 %v1923, %v2028
          %v2033 = vmul.f32 %v1928, %v2028
          %v2034 = vmul.f32 %v1933, %v2028
          %v2035 = vmul.f32 %v1938, %v2028
          %v2036 = vmul.f32 %v1943, %v2028
          %v2037 = vmul.f32 %v1948, %v2028
          %v2038 = vmul.f32 %v1953, %v2028
          %v2039 = vmul.f32 %v1958, %v2028
          %v2040 = vmul.f32 %v1963, %v2028
          %v2041 = vmul.f32 %v1968, %v2028
          %v2042 = vmul.f32 %v1973, %v2028
          %v2043 = vmul.f32 %v1978, %v2028
          %v2044 = vmul.f32 %v1983, %v2028
          %v2045 = vmul.f32 %v1988, %v2028
          %v2046 = vmul.f32 %v1993, %v2028
          %v2047 = vmul.f32 %v1998, %v2028
          %v2048 = vmul.f32 %v2003, %v2028
          %v2049 = vmul.f32 %v2008, %v2028
          %v2050 = vmul.f32 %v2013, %v2028
          %v2051 = vmul.f32 %v2018, %v2028
          %v2052 = vmul.f32 %v2023, %v2028
          %v2053 = vadd.f32 %v1856, %v2029
          %v2054 = vadd.f32 %v1857, %v2030
          %v2055 = vadd.f32 %v1858, %v2031
          %v2056 = vadd.f32 %v1859, %v2032
          %v2057 = vadd.f32 %v1860, %v2033
          %v2058 = vadd.f32 %v1861, %v2034
          %v2059 = vadd.f32 %v1862, %v2035
          %v2060 = vadd.f32 %v1863, %v2036
          %v2061 = vadd.f32 %v1864, %v2037
          %v2062 = vadd.f32 %v1865, %v2038
          %v2063 = vadd.f32 %v1866, %v2039
          %v2064 = vadd.f32 %v1867, %v2040
          %v2065 = vadd.f32 %v1868, %v2041
          %v2066 = vadd.f32 %v1869, %v2042
          %v2067 = vadd.f32 %v1870, %v2043
          %v2068 = vadd.f32 %v1871, %v2044
          %v2069 = vadd.f32 %v1872, %v2045
          %v2070 = vadd.f32 %v1873, %v2046
          %v2071 = vadd.f32 %v1874, %v2047
          %v2072 = vadd.f32 %v1875, %v2048
          %v2073 = vadd.f32 %v1876, %v2049
          %v2074 = vadd.f32 %v1877, %v2050
          %v2075 = vadd.f32 %v1878, %v2051
          %v2076 = vadd.f32 %v1879, %v2052
          %v2077 = vld [vmem:[#allocation10] sm:$0x1]
          %v2079 = vlaneseq
          %v2080 = vshrl.u32 %v2079, 7
          %v2081 = vsub.s32 0, %v2080
          %v2082 = vrot.slane %v2077, %v2081
          %v2084 = vadd.f32 %v2053, %v2082
          %v2085 = vadd.f32 %v2054, %v2082
          %v2086 = vadd.f32 %v2055, %v2082
          %v2087 = vadd.f32 %v2056, %v2082
          %v2088 = vadd.f32 %v2057, %v2082
          %v2089 = vadd.f32 %v2058, %v2082
          %v2090 = vadd.f32 %v2059, %v2082
          %v2091 = vadd.f32 %v2060, %v2082
          %v2092 = vadd.f32 %v2061, %v2082
          %v2093 = vadd.f32 %v2062, %v2082
          %v2094 = vadd.f32 %v2063, %v2082
          %v2095 = vadd.f32 %v2064, %v2082
          %v2096 = vadd.f32 %v2065, %v2082
          %v2097 = vadd.f32 %v2066, %v2082
          %v2098 = vadd.f32 %v2067, %v2082
          %v2099 = vadd.f32 %v2068, %v2082
          %v2100 = vadd.f32 %v2069, %v2082
          %v2101 = vadd.f32 %v2070, %v2082
          %v2102 = vadd.f32 %v2071, %v2082
          %v2103 = vadd.f32 %v2072, %v2082
          %v2104 = vadd.f32 %v2073, %v2082
          %v2105 = vadd.f32 %v2074, %v2082
          %v2106 = vadd.f32 %v2075, %v2082
          %v2107 = vadd.f32 %v2076, %v2082
          %v2108 = vmax.f32 %v2084, 0.0
          %v2109 = vmax.f32 %v2085, 0.0
          %v2110 = vmax.f32 %v2086, 0.0
          %v2111 = vmax.f32 %v2087, 0.0
          %v2112 = vmax.f32 %v2088, 0.0
          %v2113 = vmax.f32 %v2089, 0.0
          %v2114 = vmax.f32 %v2090, 0.0
          %v2115 = vmax.f32 %v2091, 0.0
          %v2116 = vmax.f32 %v2092, 0.0
          %v2117 = vmax.f32 %v2093, 0.0
          %v2118 = vmax.f32 %v2094, 0.0
          %v2119 = vmax.f32 %v2095, 0.0
          %v2120 = vmax.f32 %v2096, 0.0
          %v2121 = vmax.f32 %v2097, 0.0
          %v2122 = vmax.f32 %v2098, 0.0
          %v2123 = vmax.f32 %v2099, 0.0
          %v2124 = vmax.f32 %v2100, 0.0
          %v2125 = vmax.f32 %v2101, 0.0
          %v2126 = vmax.f32 %v2102, 0.0
          %v2127 = vmax.f32 %v2103, 0.0
          %v2128 = vmax.f32 %v2104, 0.0
          %v2129 = vmax.f32 %v2105, 0.0
          %v2130 = vmax.f32 %v2106, 0.0
          %v2131 = vmax.f32 %v2107, 0.0
          %2132 = vst.msk [vmem:[#allocation2] sm:$0xff] %vm1031, %v2108
          %2133 = vst.msk [vmem:[#allocation2 + $0x8] sm:$0xff] %vm1031, %v2109
          %2134 = vst.msk [vmem:[#allocation2 + $0x10] sm:$0xff] %vm1031, %v2110
          %2135 = vst.msk [vmem:[#allocation2 + $0x18] sm:$0xff] %vm1031, %v2111
          %2136 = vst.msk [vmem:[#allocation2 + $0x20] sm:$0xff] %vm1031, %v2112
          %2137 = vst.msk [vmem:[#allocation2 + $0x28] sm:$0xff] %vm1031, %v2113
          %2138 = vst.msk [vmem:[#allocation2 + $0x30] sm:$0xff] %vm1031, %v2114
          %2139 = vst.msk [vmem:[#allocation2 + $0x38] sm:$0xff] %vm1031, %v2115
          %2140 = vst.msk [vmem:[#allocation2 + $0x40] sm:$0xff] %vm1031, %v2116
          %2141 = vst.msk [vmem:[#allocation2 + $0x48] sm:$0xff] %vm1031, %v2117
          %2142 = vst.msk [vmem:[#allocation2 + $0x50] sm:$0xff] %vm1031, %v2118
          %2143 = vst.msk [vmem:[#allocation2 + $0x58] sm:$0xff] %vm1031, %v2119
          %2144 = vst.msk [vmem:[#allocation2 + $0x60] sm:$0xff] %vm1031, %v2120
          %2145 = vst.msk [vmem:[#allocation2 + $0x68] sm:$0xff] %vm1031, %v2121
          %2146 = vst.msk [vmem:[#allocation2 + $0x70] sm:$0xff] %vm1031, %v2122
          %2147 = vst.msk [vmem:[#allocation2 + $0x78] sm:$0xff] %vm1031, %v2123
          %2148 = vst.msk [vmem:[#allocation2 + $0x80] sm:$0xff] %vm1031, %v2124
          %2149 = vst.msk [vmem:[#allocation2 + $0x88] sm:$0xff] %vm1031, %v2125
          %2150 = vst.msk [vmem:[#allocation2 + $0x90] sm:$0xff] %vm1031, %v2126
          %2151 = vst.msk [vmem:[#allocation2 + $0x98] sm:$0xff] %vm1031, %v2127
          %2152 = vst.msk [vmem:[#allocation2 + $0xa0] sm:$0xff] %vm1031, %v2128
          %2153 = vst.msk [vmem:[#allocation2 + $0xa8] sm:$0xff] %vm1031, %v2129
          %2154 = vst.msk [vmem:[#allocation2 + $0xb0] sm:$0xff] %vm1031, %v2130
          %2155 = vst.msk [vmem:[#allocation2 + $0xb8] sm:$0x1] %vm1055, %v2131
          %v2156 = vld [vmem:[#allocation2] ss:$2 sm:$0xff]
          %v2157 = vld [vmem:[%s1058] ss:$2 sm:$0xff]
          %v2158 = vld [vmem:[%s1060] ss:$2 sm:$0xff]
          %v2159 = vld [vmem:[%s1062] ss:$2 sm:$0xff]
          %v2160 = vld [vmem:[%s1064] ss:$2 sm:$0xff]
          %v2161 = vld [vmem:[%s1066] ss:$2 sm:$0xff]
          %v2162 = vld [vmem:[%s1068] ss:$2 sm:$0xff]
          %v2163 = vld [vmem:[%s1070] ss:$2 sm:$0xff]
          %v2164 = vld [vmem:[%s1072] ss:$2 sm:$0xff]
          %v2165 = vld [vmem:[%s1074] ss:$2 sm:$0xff]
          %v2166 = vld [vmem:[%s1076] ss:$2 sm:$0xff]
          %v2167 = vld [vmem:[%s1078] ss:$2 sm:$0xf]
          %v2168 = vld [vmem:[%s1080] ss:$2 sm:$0xff]
          %v2169 = vld [vmem:[%s1082] ss:$2 sm:$0xff]
          %v2170 = vld [vmem:[%s1084] ss:$2 sm:$0xff]
          %v2171 = vld [vmem:[%s1086] ss:$2 sm:$0xff]
          %v2172 = vld [vmem:[%s1088] ss:$2 sm:$0xff]
          %v2173 = vld [vmem:[%s1090] ss:$2 sm:$0xff]
          %v2174 = vld [vmem:[%s1092] ss:$2 sm:$0xff]
          %v2175 = vld [vmem:[%s1094] ss:$2 sm:$0xff]
          %v2176 = vld [vmem:[%s1096] ss:$2 sm:$0xff]
          %v2177 = vld [vmem:[%s1098] ss:$2 sm:$0xff]
          %v2178 = vld [vmem:[%s1100] ss:$2 sm:$0xff]
          %v2179 = vld [vmem:[%s1102] ss:$2 sm:$0xf]
          %v2180 = vmax.f32 %v2156, %v2168
          %v2181 = vmax.f32 %v2157, %v2169
          %v2182 = vmax.f32 %v2158, %v2170
          %v2183 = vmax.f32 %v2159, %v2171
          %v2184 = vmax.f32 %v2160, %v2172
          %v2185 = vmax.f32 %v2161, %v2173
          %v2186 = vmax.f32 %v2162, %v2174
          %v2187 = vmax.f32 %v2163, %v2175
          %v2188 = vmax.f32 %v2164, %v2176
          %v2189 = vmax.f32 %v2165, %v2177
          %v2190 = vmax.f32 %v2166, %v2178
          %v2191 = vmax.f32 %v2167, %v2179
          %v2204 = vrot.slane %v2180, 1
          %v2205 = vrot.slane %v2181, 1
          %v2206 = vsel %vm1128, %v2204, %v2205
          %v2207 = vrot.slane %v2182, 1
          %v2208 = vsel %vm1128, %v2205, %v2207
          %v2209 = vrot.slane %v2183, 1
          %v2210 = vsel %vm1128, %v2207, %v2209
          %v2211 = vrot.slane %v2184, 1
          %v2212 = vsel %vm1128, %v2209, %v2211
          %v2213 = vrot.slane %v2185, 1
          %v2214 = vsel %vm1128, %v2211, %v2213
          %v2215 = vrot.slane %v2186, 1
          %v2216 = vsel %vm1128, %v2213, %v2215
          %v2217 = vrot.slane %v2187, 1
          %v2218 = vsel %vm1128, %v2215, %v2217
          %v2219 = vrot.slane %v2188, 1
          %v2220 = vsel %vm1128, %v2217, %v2219
          %v2221 = vrot.slane %v2189, 1
          %v2222 = vsel %vm1128, %v2219, %v2221
          %v2223 = vrot.slane %v2190, 1
          %v2224 = vsel %vm1128, %v2221, %v2223
          %v2225 = vrot.slane %v2191, 1
          %v2226 = vsel %vm1128, %v2223, %v2225
          %2227 = vrot.lane.b32.xlu0 %v2206, 16
          %v2228 = vpop.permute.xlu0 %2227
          %2229 = vrot.lane.b32.xlu0 %v2208, 16
          %v2230 = vpop.permute.xlu0 %2229
          %2231 = vrot.lane.b32.xlu0 %v2210, 16
          %v2232 = vpop.permute.xlu0 %2231
          %2233 = vrot.lane.b32.xlu0 %v2212, 16
          %v2234 = vpop.permute.xlu0 %2233
          %2235 = vrot.lane.b32.xlu0 %v2214, 16
          %v2236 = vpop.permute.xlu0 %2235
          %2237 = vrot.lane.b32.xlu0 %v2216, 16
          %v2238 = vpop.permute.xlu0 %2237
          %2239 = vrot.lane.b32.xlu0 %v2218, 16
          %v2240 = vpop.permute.xlu0 %2239
          %2241 = vrot.lane.b32.xlu0 %v2220, 16
          %v2242 = vpop.permute.xlu0 %2241
          %2243 = vrot.lane.b32.xlu0 %v2222, 16
          %v2244 = vpop.permute.xlu0 %2243
          %2245 = vrot.lane.b32.xlu0 %v2224, 16
          %v2246 = vpop.permute.xlu0 %2245
          %2247 = vrot.lane.b32.xlu0 %v2226, 16
          %v2248 = vpop.permute.xlu0 %2247
          %2249 = vrot.lane.b32.xlu0 %v2225, 16
          %v2250 = vpop.permute.xlu0 %2249
          %v2263 = vrot.slane %v2180, 2
          %v2264 = vrot.slane %v2181, 2
          %v2265 = vsel %vm1188, %v2263, %v2264
          %v2266 = vrot.slane %v2182, 2
          %v2267 = vsel %vm1188, %v2264, %v2266
          %v2268 = vrot.slane %v2183, 2
          %v2269 = vsel %vm1188, %v2266, %v2268
          %v2270 = vrot.slane %v2184, 2
          %v2271 = vsel %vm1188, %v2268, %v2270
          %v2272 = vrot.slane %v2185, 2
          %v2273 = vsel %vm1188, %v2270, %v2272
          %v2274 = vrot.slane %v2186, 2
          %v2275 = vsel %vm1188, %v2272, %v2274
          %v2276 = vrot.slane %v2187, 2
          %v2277 = vsel %vm1188, %v2274, %v2276
          %v2278 = vrot.slane %v2188, 2
          %v2279 = vsel %vm1188, %v2276, %v2278
          %v2280 = vrot.slane %v2189, 2
          %v2281 = vsel %vm1188, %v2278, %v2280
          %v2282 = vrot.slane %v2190, 2
          %v2283 = vsel %vm1188, %v2280, %v2282
          %v2284 = vrot.slane %v2191, 2
          %v2285 = vsel %vm1188, %v2282, %v2284
          %2286 = vrot.lane.b32.xlu0 %v2265, 32
          %v2287 = vpop.permute.xlu0 %2286
          %2288 = vrot.lane.b32.xlu0 %v2267, 32
          %v2289 = vpop.permute.xlu0 %2288
          %2290 = vrot.lane.b32.xlu0 %v2269, 32
          %v2291 = vpop.permute.xlu0 %2290
          %2292 = vrot.lane.b32.xlu0 %v2271, 32
          %v2293 = vpop.permute.xlu0 %2292
          %2294 = vrot.lane.b32.xlu0 %v2273, 32
          %v2295 = vpop.permute.xlu0 %2294
          %2296 = vrot.lane.b32.xlu0 %v2275, 32
          %v2297 = vpop.permute.xlu0 %2296
          %2298 = vrot.lane.b32.xlu0 %v2277, 32
          %v2299 = vpop.permute.xlu0 %2298
          %2300 = vrot.lane.b32.xlu0 %v2279, 32
          %v2301 = vpop.permute.xlu0 %2300
          %2302 = vrot.lane.b32.xlu0 %v2281, 32
          %v2303 = vpop.permute.xlu0 %2302
          %2304 = vrot.lane.b32.xlu0 %v2283, 32
          %v2305 = vpop.permute.xlu0 %2304
          %2306 = vrot.lane.b32.xlu0 %v2285, 32
          %v2307 = vpop.permute.xlu0 %2306
          %2308 = vrot.lane.b32.xlu0 %v2284, 32
          %v2309 = vpop.permute.xlu0 %2308
          %v2322 = vsel %vm1031, %v2180, %v2228
          %v2323 = vsel %vm1031, %v2181, %v2230
          %v2324 = vsel %vm1031, %v2182, %v2232
          %v2325 = vsel %vm1031, %v2183, %v2234
          %v2326 = vsel %vm1031, %v2184, %v2236
          %v2327 = vsel %vm1031, %v2185, %v2238
          %v2328 = vsel %vm1031, %v2186, %v2240
          %v2329 = vsel %vm1031, %v2187, %v2242
          %v2330 = vsel %vm1031, %v2188, %v2244
          %v2331 = vsel %vm1031, %v2189, %v2246
          %v2332 = vsel %vm1031, %v2190, %v2248
          %v2333 = vsel %vm1031, %v2191, %v2250
          %v2334 = vsel %vm1260, %v2322, %v2287
          %v2335 = vsel %vm1260, %v2323, %v2289
          %v2336 = vsel %vm1260, %v2324, %v2291
          %v2337 = vsel %vm1260, %v2325, %v2293
          %v2338 = vsel %vm1260, %v2326, %v2295
          %v2339 = vsel %vm1260, %v2327, %v2297
          %v2340 = vsel %vm1260, %v2328, %v2299
          %v2341 = vsel %vm1260, %v2329, %v2301
          %v2342 = vsel %vm1260, %v2330, %v2303
          %v2343 = vsel %vm1260, %v2331, %v2305
          %v2344 = vsel %vm1260, %v2332, %v2307
          %v2345 = vsel %vm1260, %v2333, %v2309
          %v2346 = vld [vmem:[%s3] sm:$0xff]
          %v2347 = vld [vmem:[%s3 + $0x8] sm:$0xff]
          %v2348 = vld [vmem:[%s3 + $0x10] sm:$0xff]
          %v2349 = vld [vmem:[%s3 + $0x18] sm:$0xff]
          %v2350 = vld [vmem:[%s3 + $0x20] sm:$0xff]
          %v2351 = vld [vmem:[%s3 + $0x28] sm:$0xff]
          %v2352 = vld [vmem:[#allocation12] sm:$0x1]
          %v2354 = vlaneseq
          %v2355 = vshrl.u32 %v2354, 7
          %v2356 = vsub.s32 0, %v2355
          %v2357 = vrot.slane %v2352, %v2356
          %v2360 = vsel %vm1286, %v2334, 0
          %v2363 = vsel %vm1286, %v2335, 0
          %v2366 = vsel %vm1286, %v2336, 0
          %v2369 = vsel %vm1286, %v2337, 0
          %v2372 = vsel %vm1286, %v2338, 0
          %v2375 = vsel %vm1286, %v2339, 0
          %v2378 = vsel %vm1286, %v2340, 0
          %v2381 = vsel %vm1286, %v2341, 0
          %v2384 = vsel %vm1286, %v2342, 0
          %v2387 = vsel %vm1286, %v2343, 0
          %v2390 = vsel %vm1286, %v2344, 0
          %v2393 = vsel %vm1286, %v2345, 0
          %2395 = vmatprep.subr.mxu0 0.0
          %2396 = vmatpush1.msra.mxu0 %v2346
          %2397 = vmatprep.subr.mxu0 0.0
          %2398 = vmatpush1.msra.mxu0 %v2347
          %2399 = vmatprep.subr.mxu0 0.0
          %2400 = vmatpush1.msra.mxu0 %v2348
          %2401 = vmatprep.subr.mxu0 0.0
          %2402 = vmatpush1.msra.mxu0 %v2349
          %2403 = vmatprep.subr.mxu0 0.0
          %2404 = vmatpush1.msra.mxu0 %v2350
          %2405 = vmatprep.subr.mxu0 0.0
          %2406 = vmatpush1.msra.mxu0 %v2351
          %2407 = vmatprep.subr.mxu0 0.0
          %2408 = vmatpush1.msra.mxu0 0.0
          %2409 = vmatprep.subr.mxu0 0.0
          %2410 = vmatpush1.msra.mxu0 0.0
          %2411 = vmatprep.subr.mxu0 0.0
          %2412 = vmatpush1.msra.mxu0 0.0
          %2413 = vmatprep.subr.mxu0 0.0
          %2414 = vmatpush1.msra.mxu0 0.0
          %2415 = vmatprep.subr.mxu0 0.0
          %2416 = vmatpush1.msra.mxu0 0.0
          %2417 = vmatprep.subr.mxu0 0.0
          %2418 = vmatpush1.msra.mxu0 0.0
          %2419 = vmatprep.subr.mxu0 0.0
          %2420 = vmatpush1.msra.mxu0 0.0
          %2421 = vmatprep.subr.mxu0 0.0
          %2422 = vmatpush1.msra.mxu0 0.0
          %2423 = vmatprep.subr.mxu0 0.0
          %2424 = vmatpush1.msra.mxu0 0.0
          %2425 = vmatprep.subr.mxu0 0.0
          %2426 = vmatpush1.msra.mxu0 0.0
          %2427 = vmatprep.subr.mxu0 0.0
          %2428 = vmatpush1.msra.mxu0 0.0
          %2429 = vmatprep.subr.mxu0 0.0
          %2430 = vmatpush1.msra.mxu0 0.0
          %2431 = vmatprep.subr.mxu0 0.0
          %2432 = vmatpush1.msra.mxu0 0.0
          %2433 = vmatprep.subr.mxu0 0.0
          %2434 = vmatpush1.msra.mxu0 0.0
          %2435 = vmatprep.subr.mxu0 0.0
          %2436 = vmatpush1.msra.mxu0 0.0
          %2437 = vmatprep.subr.mxu0 0.0
          %2438 = vmatpush1.msra.mxu0 0.0
          %2439 = vmatprep.subr.mxu0 0.0
          %2440 = vmatpush1.msra.mxu0 0.0
          %2441 = vmatprep.subr.mxu0 0.0
          %2442 = vmatpush1.msra.mxu0 0.0
          %2443 = vmatprep.subr.mxu0 0.0
          %2444 = vmatpush1.msra.mxu0 0.0
          %2445 = vmatprep.subr.mxu0 0.0
          %2446 = vmatpush1.msra.mxu0 0.0
          %2447 = vmatprep.subr.mxu0 0.0
          %2448 = vmatpush1.msra.mxu0 0.0
          %2449 = vmatprep.subr.mxu0 0.0
          %2450 = vmatpush1.msra.mxu0 0.0
          %2451 = vmatprep.subr.mxu0 0.0
          %2452 = vmatpush1.msra.mxu0 0.0
          %2453 = vmatprep.subr.mxu0 0.0
          %2454 = vmatpush1.msra.mxu0 0.0
          %2455 = vmatprep.subr.mxu0 0.0
          %2456 = vmatpush1.msra.mxu0 0.0
          %2457 = vmatprep.subr.mxu0 0.0
          %2458 = vmatpush1.msra.mxu0 0.0
          %2459 = vmatprep.mubr.f32.mxu0 0.0
          %2460 = vmatmul.mubr.f32.gmra.mrb[0].mxu0 %v2360
          %v2461 = vpop.f32.mrb[0].mxu0
          %v2462 = vadd.f32 %v2357, %v2461
          %v2463 = vpop.f32.mrb[0].mxu0
          %2464 = vmatprep.mubr.f32.mxu0 0.0
          %2465 = vmatmul.mubr.f32.gmra.mrb[0].mxu0 %v2363
          %v2466 = vpop.f32.mrb[0].mxu0
          %v2467 = vadd.f32 %v2357, %v2466
          %v2468 = vpop.f32.mrb[0].mxu0
          %2469 = vmatprep.mubr.f32.mxu0 0.0
          %2470 = vmatmul.mubr.f32.gmra.mrb[0].mxu0 %v2366
          %v2471 = vpop.f32.mrb[0].mxu0
          %v2472 = vadd.f32 %v2357, %v2471
          %v2473 = vpop.f32.mrb[0].mxu0
          %2474 = vmatprep.mubr.f32.mxu0 0.0
          %2475 = vmatmul.mubr.f32.gmra.mrb[0].mxu0 %v2369
          %v2476 = vpop.f32.mrb[0].mxu0
          %v2477 = vadd.f32 %v2357, %v2476
          %v2478 = vpop.f32.mrb[0].mxu0
          %2479 = vmatprep.mubr.f32.mxu0 0.0
          %2480 = vmatmul.mubr.f32.gmra.mrb[0].mxu0 %v2372
          %v2481 = vpop.f32.mrb[0].mxu0
          %v2482 = vadd.f32 %v2357, %v2481
          %v2483 = vpop.f32.mrb[0].mxu0
          %2484 = vmatprep.mubr.f32.mxu0 0.0
          %2485 = vmatmul.mubr.f32.gmra.mrb[0].mxu0 %v2375
          %v2486 = vpop.f32.mrb[0].mxu0
          %v2487 = vadd.f32 %v2357, %v2486
          %v2488 = vpop.f32.mrb[0].mxu0
          %2489 = vmatprep.mubr.f32.mxu0 0.0
          %2490 = vmatmul.mubr.f32.gmra.mrb[0].mxu0 %v2378
          %v2491 = vpop.f32.mrb[0].mxu0
          %v2492 = vadd.f32 %v2357, %v2491
          %v2493 = vpop.f32.mrb[0].mxu0
          %2494 = vmatprep.mubr.f32.mxu0 0.0
          %2495 = vmatmul.mubr.f32.gmra.mrb[0].mxu0 %v2381
          %v2496 = vpop.f32.mrb[0].mxu0
          %v2497 = vadd.f32 %v2357, %v2496
          %v2498 = vpop.f32.mrb[0].mxu0
          %2499 = vmatprep.mubr.f32.mxu0 0.0
          %2500 = vmatmul.mubr.f32.gmra.mrb[0].mxu0 %v2384
          %v2501 = vpop.f32.mrb[0].mxu0
          %v2502 = vadd.f32 %v2357, %v2501
          %v2503 = vpop.f32.mrb[0].mxu0
          %2504 = vmatprep.mubr.f32.mxu0 0.0
          %2505 = vmatmul.mubr.f32.gmra.mrb[0].mxu0 %v2387
          %v2506 = vpop.f32.mrb[0].mxu0
          %v2507 = vadd.f32 %v2357, %v2506
          %v2508 = vpop.f32.mrb[0].mxu0
          %2509 = vmatprep.mubr.f32.mxu0 0.0
          %2510 = vmatmul.mubr.f32.gmra.mrb[0].mxu0 %v2390
          %v2511 = vpop.f32.mrb[0].mxu0
          %v2512 = vadd.f32 %v2357, %v2511
          %v2513 = vpop.f32.mrb[0].mxu0
          %2514 = vmatprep.mubr.f32.mxu0 0.0
          %2515 = vmatmul.mubr.f32.gmra.mrb[0].mxu0 %v2393
          %v2516 = vpop.f32.mrb[0].mxu0
          %v2517 = vadd.f32 %v2357, %v2516
          %v2518 = vpop.f32.mrb[0].mxu0
          %2519 = vdwg.mxu0
          %v2520 = vmax.f32 %v2462, 0.0
          %v2521 = vmax.f32 %v2467, 0.0
          %v2522 = vmax.f32 %v2472, 0.0
          %v2523 = vmax.f32 %v2477, 0.0
          %v2524 = vmax.f32 %v2482, 0.0
          %v2525 = vmax.f32 %v2487, 0.0
          %v2526 = vmax.f32 %v2492, 0.0
          %v2527 = vmax.f32 %v2497, 0.0
          %v2528 = vmax.f32 %v2502, 0.0
          %v2529 = vmax.f32 %v2507, 0.0
          %v2530 = vmax.f32 %v2512, 0.0
          %v2531 = vmax.f32 %v2517, 0.0
          %2532 = vst.msk [vmem:[#allocation3] sm:$0xff] %vm1260, %v2520
          %2533 = vst.msk [vmem:[#allocation3 + $0x8] sm:$0xff] %vm1260, %v2521
          %2534 = vst.msk [vmem:[#allocation3 + $0x10] sm:$0xff] %vm1260, %v2522
          %2535 = vst.msk [vmem:[#allocation3 + $0x18] sm:$0xff] %vm1260, %v2523
          %2536 = vst.msk [vmem:[#allocation3 + $0x20] sm:$0xff] %vm1260, %v2524
          %2537 = vst.msk [vmem:[#allocation3 + $0x28] sm:$0xff] %vm1260, %v2525
          %2538 = vst.msk [vmem:[#allocation3 + $0x30] sm:$0xff] %vm1260, %v2526
          %2539 = vst.msk [vmem:[#allocation3 + $0x38] sm:$0xff] %vm1260, %v2527
          %2540 = vst.msk [vmem:[#allocation3 + $0x40] sm:$0xff] %vm1260, %v2528
          %2541 = vst.msk [vmem:[#allocation3 + $0x48] sm:$0xff] %vm1260, %v2529
          %2542 = vst.msk [vmem:[#allocation3 + $0x50] sm:$0xff] %vm1260, %v2530
          %2543 = vst.msk [vmem:[#allocation3 + $0x58] sm:$0x3] %vm1471, %v2531
          %v2544 = vld [vmem:[#allocation3] ss:$2 sm:$0xff]
          %v2545 = vld [vmem:[%s1474] ss:$2 sm:$0xff]
          %v2546 = vld [vmem:[%s1476] ss:$2 sm:$0xff]
          %v2547 = vld [vmem:[%s1478] ss:$2 sm:$0xff]
          %v2548 = vld [vmem:[%s1480] ss:$2 sm:$0xff]
          %v2549 = vld [vmem:[%s1482] ss:$2 sm:$0x1f]
          %v2550 = vld [vmem:[%s1484] ss:$2 sm:$0xff]
          %v2551 = vld [vmem:[%s1486] ss:$2 sm:$0xff]
          %v2552 = vld [vmem:[%s1488] ss:$2 sm:$0xff]
          %v2553 = vld [vmem:[%s1490] ss:$2 sm:$0xff]
          %v2554 = vld [vmem:[%s1492] ss:$2 sm:$0xff]
          %v2555 = vld [vmem:[%s1494] ss:$2 sm:$0x1f]
          %v2556 = vmax.f32 %v2544, %v2550
          %v2557 = vmax.f32 %v2545, %v2551
          %v2558 = vmax.f32 %v2546, %v2552
          %v2559 = vmax.f32 %v2547, %v2553
          %v2560 = vmax.f32 %v2548, %v2554
          %v2561 = vmax.f32 %v2549, %v2555
          %2562 = vst.msk [vmem:[#allocation4 + $0x2d] sm:$0xff] %vm1260, %v2556
          %2563 = vst.msk [vmem:[#allocation4 + $0x35] sm:$0xff] %vm1260, %v2557
          %2564 = vst.msk [vmem:[#allocation4 + $0x3d] sm:$0xff] %vm1260, %v2558
          %2565 = vst.msk [vmem:[#allocation4 + $0x45] sm:$0xff] %vm1260, %v2559
          %2566 = vst.msk [vmem:[#allocation4 + $0x4d] sm:$0xff] %vm1260, %v2560
          %2567 = vst.msk [vmem:[#allocation4 + $0x55] sm:$0x1f] %vm1507, %v2561
          %v2568 = vld [vmem:[#allocation4] ss:$45 sm:$0x3]
          %2569 = vst.msk [vmem:[#allocation5] sm:$0x3] %vm1471, %v2568
          %s2570 = scalar_lea.vmem [#allocation4], 1
          %v2571 = vld [vmem:[%s2570] ss:$45 sm:$0x3]
          %v2574 = vunpack.c.l.s4 1983009808
          %v2575 = vunpack.c.0.s8 %v2574
          %v2576 = vlaneseq
          %v2577 = vshrl.u32 %v2576, 7
          %v2578 = vsub.s32 %v2575, %v2577
          %v2579 = vrot.slane %v2571, %v2578
          %2580 = vrot.lane.b32.xlu0 %v2579, 32
          %v2581 = vpop.permute.xlu0 %2580
          %vm2583 = vcmask 517376
          %2584 = vst.msk [vmem:[#allocation5] sm:$0x3] %vm2583, %v2581
          %s2585 = scalar_lea.vmem [#allocation4], 2
          %v2586 = vld [vmem:[%s2585] ss:$45 sm:$0x3]
          %v2589 = vunpack.c.l.s4 1983009808
          %v2590 = vunpack.c.0.s8 %v2589
          %v2591 = vlaneseq
          %v2592 = vshrl.u32 %v2591, 7
          %v2593 = vsub.s32 %v2590, %v2592
          %v2594 = vrot.slane %v2586, %v2593
          %2595 = vrot.lane.b32.xlu0 %v2594, 64
          %v2596 = vpop.permute.xlu0 %2595
          %vm2598 = vcmask 779776
          %2599 = vst.msk [vmem:[#allocation5] sm:$0x3] %vm2598, %v2596
          %s2600 = scalar_lea.vmem [#allocation4], 3
          %v2601 = vld [vmem:[%s2600] ss:$45 sm:$0x3]
          %v2604 = vunpack.c.l.s4 1983009808
          %v2605 = vunpack.c.0.s8 %v2604
          %v2606 = vlaneseq
          %v2607 = vshrl.u32 %v2606, 7
          %v2608 = vsub.s32 %v2605, %v2607
          %v2609 = vrot.slane %v2601, %v2608
          %2610 = vrot.lane.b32.xlu0 %v2609, 96
          %v2611 = vpop.permute.xlu0 %2610
          %vm2613 = vcmask 1042176
          %2614 = vst.msk [vmem:[#allocation5] sm:$0x3] %vm2613, %v2611
          %s2615 = scalar_lea.vmem [#allocation4], 4
          %v2616 = vld [vmem:[%s2615] ss:$45 sm:$0x3]
          %2617 = vst.msk [vmem:[#allocation5 + $0x2] sm:$0x3] %vm1471, %v2616
          %s2618 = scalar_lea.vmem [#allocation4], 5
          %v2619 = vld [vmem:[%s2618] ss:$45 sm:$0x3]
          %v2622 = vunpack.c.l.s4 1983009808
          %v2623 = vunpack.c.0.s8 %v2622
          %v2624 = vlaneseq
          %v2625 = vshrl.u32 %v2624, 7
          %v2626 = vsub.s32 %v2623, %v2625
          %v2627 = vrot.slane %v2619, %v2626
          %2628 = vrot.lane.b32.xlu0 %v2627, 32
          %v2629 = vpop.permute.xlu0 %2628
          %2631 = vst.msk [vmem:[#allocation5 + $0x2] sm:$0x3] %vm2583, %v2629
          %s2632 = scalar_lea.vmem [#allocation4], 6
          %v2633 = vld [vmem:[%s2632] ss:$45 sm:$0x3]
          %v2636 = vunpack.c.l.s4 1983009808
          %v2637 = vunpack.c.0.s8 %v2636
          %v2638 = vlaneseq
          %v2639 = vshrl.u32 %v2638, 7
          %v2640 = vsub.s32 %v2637, %v2639
          %v2641 = vrot.slane %v2633, %v2640
          %2642 = vrot.lane.b32.xlu0 %v2641, 64
          %v2643 = vpop.permute.xlu0 %2642
          %2645 = vst.msk [vmem:[#allocation5 + $0x2] sm:$0x3] %vm2598, %v2643
          %s2646 = scalar_lea.vmem [#allocation4], 7
          %v2647 = vld [vmem:[%s2646] ss:$45 sm:$0x3]
          %v2650 = vunpack.c.l.s4 1983009808
          %v2651 = vunpack.c.0.s8 %v2650
          %v2652 = vlaneseq
          %v2653 = vshrl.u32 %v2652, 7
          %v2654 = vsub.s32 %v2651, %v2653
          %v2655 = vrot.slane %v2647, %v2654
          %2656 = vrot.lane.b32.xlu0 %v2655, 96
          %v2657 = vpop.permute.xlu0 %2656
          %2659 = vst.msk [vmem:[#allocation5 + $0x2] sm:$0x3] %vm2613, %v2657
          %s2660 = scalar_lea.vmem [#allocation4], 8
          %v2661 = vld [vmem:[%s2660] ss:$45 sm:$0x3]
          %2662 = vst.msk [vmem:[#allocation5 + $0x4] sm:$0x3] %vm1471, %v2661
          %s2663 = scalar_lea.vmem [#allocation4], 9
          %v2664 = vld [vmem:[%s2663] ss:$45 sm:$0x3]
          %v2667 = vunpack.c.l.s4 1983009808
          %v2668 = vunpack.c.0.s8 %v2667
          %v2669 = vlaneseq
          %v2670 = vshrl.u32 %v2669, 7
          %v2671 = vsub.s32 %v2668, %v2670
          %v2672 = vrot.slane %v2664, %v2671
          %2673 = vrot.lane.b32.xlu0 %v2672, 32
          %v2674 = vpop.permute.xlu0 %2673
          %2676 = vst.msk [vmem:[#allocation5 + $0x4] sm:$0x3] %vm2583, %v2674
          %s2677 = scalar_lea.vmem [#allocation4], 10
          %v2678 = vld [vmem:[%s2677] ss:$45 sm:$0x3]
          %v2681 = vunpack.c.l.s4 1983009808
          %v2682 = vunpack.c.0.s8 %v2681
          %v2683 = vlaneseq
          %v2684 = vshrl.u32 %v2683, 7
          %v2685 = vsub.s32 %v2682, %v2684
          %v2686 = vrot.slane %v2678, %v2685
          %2687 = vrot.lane.b32.xlu0 %v2686, 64
          %v2688 = vpop.permute.xlu0 %2687
          %2690 = vst.msk [vmem:[#allocation5 + $0x4] sm:$0x3] %vm2598, %v2688
          %s2691 = scalar_lea.vmem [#allocation4], 11
          %v2692 = vld [vmem:[%s2691] ss:$45 sm:$0x3]
          %v2695 = vunpack.c.l.s4 1983009808
          %v2696 = vunpack.c.0.s8 %v2695
          %v2697 = vlaneseq
          %v2698 = vshrl.u32 %v2697, 7
          %v2699 = vsub.s32 %v2696, %v2698
          %v2700 = vrot.slane %v2692, %v2699
          %2701 = vrot.lane.b32.xlu0 %v2700, 96
          %v2702 = vpop.permute.xlu0 %2701
          %2704 = vst.msk [vmem:[#allocation5 + $0x4] sm:$0x3] %vm2613, %v2702
          %s2705 = scalar_lea.vmem [#allocation4], 12
          %v2706 = vld [vmem:[%s2705] ss:$45 sm:$0x3]
          %2707 = vst.msk [vmem:[#allocation5 + $0x6] sm:$0x3] %vm1471, %v2706
          %s2708 = scalar_lea.vmem [#allocation4], 13
          %v2709 = vld [vmem:[%s2708] ss:$45 sm:$0x3]
          %v2712 = vunpack.c.l.s4 1983009808
          %v2713 = vunpack.c.0.s8 %v2712
          %v2714 = vlaneseq
          %v2715 = vshrl.u32 %v2714, 7
          %v2716 = vsub.s32 %v2713, %v2715
          %v2717 = vrot.slane %v2709, %v2716
          %2718 = vrot.lane.b32.xlu0 %v2717, 32
          %v2719 = vpop.permute.xlu0 %2718
          %2721 = vst.msk [vmem:[#allocation5 + $0x6] sm:$0x3] %vm2583, %v2719
          %s2722 = scalar_lea.vmem [#allocation4], 14
          %v2723 = vld [vmem:[%s2722] ss:$45 sm:$0x3]
          %v2726 = vunpack.c.l.s4 1983009808
          %v2727 = vunpack.c.0.s8 %v2726
          %v2728 = vlaneseq
          %v2729 = vshrl.u32 %v2728, 7
          %v2730 = vsub.s32 %v2727, %v2729
          %v2731 = vrot.slane %v2723, %v2730
          %2732 = vrot.lane.b32.xlu0 %v2731, 64
          %v2733 = vpop.permute.xlu0 %2732
          %2735 = vst.msk [vmem:[#allocation5 + $0x6] sm:$0x3] %vm2598, %v2733
          %s2736 = scalar_lea.vmem [#allocation4], 15
          %v2737 = vld [vmem:[%s2736] ss:$45 sm:$0x3]
          %v2740 = vunpack.c.l.s4 1983009808
          %v2741 = vunpack.c.0.s8 %v2740
          %v2742 = vlaneseq
          %v2743 = vshrl.u32 %v2742, 7
          %v2744 = vsub.s32 %v2741, %v2743
          %v2745 = vrot.slane %v2737, %v2744
          %2746 = vrot.lane.b32.xlu0 %v2745, 96
          %v2747 = vpop.permute.xlu0 %2746
          %2749 = vst.msk [vmem:[#allocation5 + $0x6] sm:$0x3] %vm2613, %v2747
          %s2750 = scalar_lea.vmem [#allocation4], 16
          %v2751 = vld [vmem:[%s2750] ss:$45 sm:$0x3]
          %s2752 = scalar_lea.vmem [#allocation5], 8
          %2753 = vst.msk [vmem:[%s2752] sm:$0x3] %vm1471, %v2751
          %s2754 = scalar_lea.vmem [#allocation4], 17
          %v2755 = vld [vmem:[%s2754] ss:$45 sm:$0x3]
          %v2758 = vunpack.c.l.s4 1983009808
          %v2759 = vunpack.c.0.s8 %v2758
          %v2760 = vlaneseq
          %v2761 = vshrl.u32 %v2760, 7
          %v2762 = vsub.s32 %v2759, %v2761
          %v2763 = vrot.slane %v2755, %v2762
          %2764 = vrot.lane.b32.xlu0 %v2763, 32
          %v2765 = vpop.permute.xlu0 %2764
          %2767 = vst.msk [vmem:[%s2752] sm:$0x3] %vm2583, %v2765
          %s2768 = scalar_lea.vmem [#allocation4], 18
          %v2769 = vld [vmem:[%s2768] ss:$45 sm:$0x3]
          %v2772 = vunpack.c.l.s4 1983009808
          %v2773 = vunpack.c.0.s8 %v2772
          %v2774 = vlaneseq
          %v2775 = vshrl.u32 %v2774, 7
          %v2776 = vsub.s32 %v2773, %v2775
          %v2777 = vrot.slane %v2769, %v2776
          %2778 = vrot.lane.b32.xlu0 %v2777, 64
          %v2779 = vpop.permute.xlu0 %2778
          %2781 = vst.msk [vmem:[%s2752] sm:$0x3] %vm2598, %v2779
          %s2782 = scalar_lea.vmem [#allocation4], 19
          %v2783 = vld [vmem:[%s2782] ss:$45 sm:$0x3]
          %v2786 = vunpack.c.l.s4 1983009808
          %v2787 = vunpack.c.0.s8 %v2786
          %v2788 = vlaneseq
          %v2789 = vshrl.u32 %v2788, 7
          %v2790 = vsub.s32 %v2787, %v2789
          %v2791 = vrot.slane %v2783, %v2790
          %2792 = vrot.lane.b32.xlu0 %v2791, 96
          %v2793 = vpop.permute.xlu0 %2792
          %2795 = vst.msk [vmem:[%s2752] sm:$0x3] %vm2613, %v2793
          %s2796 = scalar_lea.vmem [#allocation4], 20
          %v2797 = vld [vmem:[%s2796] ss:$45 sm:$0x3]
          %2798 = vst.msk [vmem:[%s2752 + $0x2] sm:$0x3] %vm1471, %v2797
          %s2799 = scalar_lea.vmem [#allocation4], 21
          %v2800 = vld [vmem:[%s2799] ss:$45 sm:$0x3]
          %v2803 = vunpack.c.l.s4 1983009808
          %v2804 = vunpack.c.0.s8 %v2803
          %v2805 = vlaneseq
          %v2806 = vshrl.u32 %v2805, 7
          %v2807 = vsub.s32 %v2804, %v2806
          %v2808 = vrot.slane %v2800, %v2807
          %2809 = vrot.lane.b32.xlu0 %v2808, 32
          %v2810 = vpop.permute.xlu0 %2809
          %2812 = vst.msk [vmem:[%s2752 + $0x2] sm:$0x3] %vm2583, %v2810
          %s2813 = scalar_lea.vmem [#allocation4], 22
          %v2814 = vld [vmem:[%s2813] ss:$45 sm:$0x3]
          %v2817 = vunpack.c.l.s4 1983009808
          %v2818 = vunpack.c.0.s8 %v2817
          %v2819 = vlaneseq
          %v2820 = vshrl.u32 %v2819, 7
          %v2821 = vsub.s32 %v2818, %v2820
          %v2822 = vrot.slane %v2814, %v2821
          %2823 = vrot.lane.b32.xlu0 %v2822, 64
          %v2824 = vpop.permute.xlu0 %2823
          %2826 = vst.msk [vmem:[%s2752 + $0x2] sm:$0x3] %vm2598, %v2824
          %s2827 = scalar_lea.vmem [#allocation4], 23
          %v2828 = vld [vmem:[%s2827] ss:$45 sm:$0x3]
          %v2831 = vunpack.c.l.s4 1983009808
          %v2832 = vunpack.c.0.s8 %v2831
          %v2833 = vlaneseq
          %v2834 = vshrl.u32 %v2833, 7
          %v2835 = vsub.s32 %v2832, %v2834
          %v2836 = vrot.slane %v2828, %v2835
          %2837 = vrot.lane.b32.xlu0 %v2836, 96
          %v2838 = vpop.permute.xlu0 %2837
          %2840 = vst.msk [vmem:[%s2752 + $0x2] sm:$0x3] %vm2613, %v2838
          %s2841 = scalar_lea.vmem [#allocation4], 24
          %v2842 = vld [vmem:[%s2841] ss:$45 sm:$0x3]
          %2843 = vst.msk [vmem:[%s2752 + $0x4] sm:$0x3] %vm1471, %v2842
          %s2844 = scalar_lea.vmem [#allocation4], 25
          %v2845 = vld [vmem:[%s2844] ss:$45 sm:$0x3]
          %v2848 = vunpack.c.l.s4 1983009808
          %v2849 = vunpack.c.0.s8 %v2848
          %v2850 = vlaneseq
          %v2851 = vshrl.u32 %v2850, 7
          %v2852 = vsub.s32 %v2849, %v2851
          %v2853 = vrot.slane %v2845, %v2852
          %2854 = vrot.lane.b32.xlu0 %v2853, 32
          %v2855 = vpop.permute.xlu0 %2854
          %2857 = vst.msk [vmem:[%s2752 + $0x4] sm:$0x3] %vm2583, %v2855
          %s2858 = scalar_lea.vmem [#allocation4], 26
          %v2859 = vld [vmem:[%s2858] ss:$45 sm:$0x3]
          %v2862 = vunpack.c.l.s4 1983009808
          %v2863 = vunpack.c.0.s8 %v2862
          %v2864 = vlaneseq
          %v2865 = vshrl.u32 %v2864, 7
          %v2866 = vsub.s32 %v2863, %v2865
          %v2867 = vrot.slane %v2859, %v2866
          %2868 = vrot.lane.b32.xlu0 %v2867, 64
          %v2869 = vpop.permute.xlu0 %2868
          %2871 = vst.msk [vmem:[%s2752 + $0x4] sm:$0x3] %vm2598, %v2869
          %s2872 = scalar_lea.vmem [#allocation4], 27
          %v2873 = vld [vmem:[%s2872] ss:$45 sm:$0x3]
          %v2876 = vunpack.c.l.s4 1983009808
          %v2877 = vunpack.c.0.s8 %v2876
          %v2878 = vlaneseq
          %v2879 = vshrl.u32 %v2878, 7
          %v2880 = vsub.s32 %v2877, %v2879
          %v2881 = vrot.slane %v2873, %v2880
          %2882 = vrot.lane.b32.xlu0 %v2881, 96
          %v2883 = vpop.permute.xlu0 %2882
          %2885 = vst.msk [vmem:[%s2752 + $0x4] sm:$0x3] %vm2613, %v2883
          %s2886 = scalar_lea.vmem [#allocation4], 28
          %v2887 = vld [vmem:[%s2886] ss:$45 sm:$0x3]
          %2888 = vst.msk [vmem:[%s2752 + $0x6] sm:$0x3] %vm1471, %v2887
          %s2889 = scalar_lea.vmem [#allocation4], 29
          %v2890 = vld [vmem:[%s2889] ss:$45 sm:$0x3]
          %v2893 = vunpack.c.l.s4 1983009808
          %v2894 = vunpack.c.0.s8 %v2893
          %v2895 = vlaneseq
          %v2896 = vshrl.u32 %v2895, 7
          %v2897 = vsub.s32 %v2894, %v2896
          %v2898 = vrot.slane %v2890, %v2897
          %2899 = vrot.lane.b32.xlu0 %v2898, 32
          %v2900 = vpop.permute.xlu0 %2899
          %2902 = vst.msk [vmem:[%s2752 + $0x6] sm:$0x3] %vm2583, %v2900
          %s2903 = scalar_lea.vmem [#allocation4], 30
          %v2904 = vld [vmem:[%s2903] ss:$45 sm:$0x3]
          %v2907 = vunpack.c.l.s4 1983009808
          %v2908 = vunpack.c.0.s8 %v2907
          %v2909 = vlaneseq
          %v2910 = vshrl.u32 %v2909, 7
          %v2911 = vsub.s32 %v2908, %v2910
          %v2912 = vrot.slane %v2904, %v2911
          %2913 = vrot.lane.b32.xlu0 %v2912, 64
          %v2914 = vpop.permute.xlu0 %2913
          %2916 = vst.msk [vmem:[%s2752 + $0x6] sm:$0x3] %vm2598, %v2914
          %s2917 = scalar_lea.vmem [#allocation4], 31
          %v2918 = vld [vmem:[%s2917] ss:$45 sm:$0x3]
          %v2921 = vunpack.c.l.s4 1983009808
          %v2922 = vunpack.c.0.s8 %v2921
          %v2923 = vlaneseq
          %v2924 = vshrl.u32 %v2923, 7
          %v2925 = vsub.s32 %v2922, %v2924
          %v2926 = vrot.slane %v2918, %v2925
          %2927 = vrot.lane.b32.xlu0 %v2926, 96
          %v2928 = vpop.permute.xlu0 %2927
          %2930 = vst.msk [vmem:[%s2752 + $0x6] sm:$0x3] %vm2613, %v2928
          %s2931 = scalar_lea.vmem [#allocation4], 32
          %v2932 = vld [vmem:[%s2931] ss:$45 sm:$0x3]
          %s2933 = scalar_lea.vmem [#allocation5], 16
          %2934 = vst.msk [vmem:[%s2933] sm:$0x3] %vm1471, %v2932
          %s2935 = scalar_lea.vmem [#allocation4], 33
          %v2936 = vld [vmem:[%s2935] ss:$45 sm:$0x3]
          %v2939 = vunpack.c.l.s4 1983009808
          %v2940 = vunpack.c.0.s8 %v2939
          %v2941 = vlaneseq
          %v2942 = vshrl.u32 %v2941, 7
          %v2943 = vsub.s32 %v2940, %v2942
          %v2944 = vrot.slane %v2936, %v2943
          %2945 = vrot.lane.b32.xlu0 %v2944, 32
          %v2946 = vpop.permute.xlu0 %2945
          %2948 = vst.msk [vmem:[%s2933] sm:$0x3] %vm2583, %v2946
          %s2949 = scalar_lea.vmem [#allocation4], 34
          %v2950 = vld [vmem:[%s2949] ss:$45 sm:$0x3]
          %v2953 = vunpack.c.l.s4 1983009808
          %v2954 = vunpack.c.0.s8 %v2953
          %v2955 = vlaneseq
          %v2956 = vshrl.u32 %v2955, 7
          %v2957 = vsub.s32 %v2954, %v2956
          %v2958 = vrot.slane %v2950, %v2957
          %2959 = vrot.lane.b32.xlu0 %v2958, 64
          %v2960 = vpop.permute.xlu0 %2959
          %2962 = vst.msk [vmem:[%s2933] sm:$0x3] %vm2598, %v2960
          %s2963 = scalar_lea.vmem [#allocation4], 35
          %v2964 = vld [vmem:[%s2963] ss:$45 sm:$0x3]
          %v2967 = vunpack.c.l.s4 1983009808
          %v2968 = vunpack.c.0.s8 %v2967
          %v2969 = vlaneseq
          %v2970 = vshrl.u32 %v2969, 7
          %v2971 = vsub.s32 %v2968, %v2970
          %v2972 = vrot.slane %v2964, %v2971
          %2973 = vrot.lane.b32.xlu0 %v2972, 96
          %v2974 = vpop.permute.xlu0 %2973
          %2976 = vst.msk [vmem:[%s2933] sm:$0x3] %vm2613, %v2974
          %s2977 = scalar_lea.vmem [#allocation4], 36
          %v2978 = vld [vmem:[%s2977] ss:$45 sm:$0x3]
          %2979 = vst.msk [vmem:[%s2933 + $0x2] sm:$0x3] %vm1471, %v2978
          %s2980 = scalar_lea.vmem [#allocation4], 37
          %v2981 = vld [vmem:[%s2980] ss:$45 sm:$0x3]
          %v2984 = vunpack.c.l.s4 1983009808
          %v2985 = vunpack.c.0.s8 %v2984
          %v2986 = vlaneseq
          %v2987 = vshrl.u32 %v2986, 7
          %v2988 = vsub.s32 %v2985, %v2987
          %v2989 = vrot.slane %v2981, %v2988
          %2990 = vrot.lane.b32.xlu0 %v2989, 32
          %v2991 = vpop.permute.xlu0 %2990
          %2993 = vst.msk [vmem:[%s2933 + $0x2] sm:$0x3] %vm2583, %v2991
          %s2994 = scalar_lea.vmem [#allocation4], 38
          %v2995 = vld [vmem:[%s2994] ss:$45 sm:$0x3]
          %v2998 = vunpack.c.l.s4 1983009808
          %v2999 = vunpack.c.0.s8 %v2998
          %v3000 = vlaneseq
          %v3001 = vshrl.u32 %v3000, 7
          %v3002 = vsub.s32 %v2999, %v3001
          %v3003 = vrot.slane %v2995, %v3002
          %3004 = vrot.lane.b32.xlu0 %v3003, 64
          %v3005 = vpop.permute.xlu0 %3004
          %3007 = vst.msk [vmem:[%s2933 + $0x2] sm:$0x3] %vm2598, %v3005
          %s3008 = scalar_lea.vmem [#allocation4], 39
          %v3009 = vld [vmem:[%s3008] ss:$45 sm:$0x3]
          %v3012 = vunpack.c.l.s4 1983009808
          %v3013 = vunpack.c.0.s8 %v3012
          %v3014 = vlaneseq
          %v3015 = vshrl.u32 %v3014, 7
          %v3016 = vsub.s32 %v3013, %v3015
          %v3017 = vrot.slane %v3009, %v3016
          %3018 = vrot.lane.b32.xlu0 %v3017, 96
          %v3019 = vpop.permute.xlu0 %3018
          %3021 = vst.msk [vmem:[%s2933 + $0x2] sm:$0x3] %vm2613, %v3019
          %s3022 = scalar_lea.vmem [#allocation4], 40
          %v3023 = vld [vmem:[%s3022] ss:$45 sm:$0x3]
          %3024 = vst.msk [vmem:[%s2933 + $0x4] sm:$0x3] %vm1471, %v3023
          %s3025 = scalar_lea.vmem [#allocation4], 41
          %v3026 = vld [vmem:[%s3025] ss:$45 sm:$0x3]
          %v3029 = vunpack.c.l.s4 1983009808
          %v3030 = vunpack.c.0.s8 %v3029
          %v3031 = vlaneseq
          %v3032 = vshrl.u32 %v3031, 7
          %v3033 = vsub.s32 %v3030, %v3032
          %v3034 = vrot.slane %v3026, %v3033
          %3035 = vrot.lane.b32.xlu0 %v3034, 32
          %v3036 = vpop.permute.xlu0 %3035
          %3038 = vst.msk [vmem:[%s2933 + $0x4] sm:$0x3] %vm2583, %v3036
          %s3039 = scalar_lea.vmem [#allocation4], 42
          %v3040 = vld [vmem:[%s3039] ss:$45 sm:$0x3]
          %v3043 = vunpack.c.l.s4 1983009808
          %v3044 = vunpack.c.0.s8 %v3043
          %v3045 = vlaneseq
          %v3046 = vshrl.u32 %v3045, 7
          %v3047 = vsub.s32 %v3044, %v3046
          %v3048 = vrot.slane %v3040, %v3047
          %3049 = vrot.lane.b32.xlu0 %v3048, 64
          %v3050 = vpop.permute.xlu0 %3049
          %3052 = vst.msk [vmem:[%s2933 + $0x4] sm:$0x3] %vm2598, %v3050
          %s3053 = scalar_lea.vmem [#allocation4], 43
          %v3054 = vld [vmem:[%s3053] ss:$45 sm:$0x3]
          %v3057 = vunpack.c.l.s4 1983009808
          %v3058 = vunpack.c.0.s8 %v3057
          %v3059 = vlaneseq
          %v3060 = vshrl.u32 %v3059, 7
          %v3061 = vsub.s32 %v3058, %v3060
          %v3062 = vrot.slane %v3054, %v3061
          %3063 = vrot.lane.b32.xlu0 %v3062, 96
          %v3064 = vpop.permute.xlu0 %3063
          %3066 = vst.msk [vmem:[%s2933 + $0x4] sm:$0x3] %vm2613, %v3064
          %s3067 = scalar_lea.vmem [#allocation4], 44
          %v3068 = vld [vmem:[%s3067] ss:$45 sm:$0x3]
          %3069 = vst.msk [vmem:[%s2933 + $0x6] sm:$0x3] %vm1471, %v3068
          %vm3070 = vcmask 1041664
          %3071 = vst.msk [vmem:[%s2933 + $0x6] sm:$0x3] %vm3070, 0.0
        $region84: #{net_forward.1} parent=55 // pred_fallthru
          _
        %s3072 = smul.u32 %s27, 4
        %s3073 = smul.addr %s3072, 2
        %s3074 = scalar_lea.vmem [#allocation5], %s3073
        %v3075 = vld [vmem:[%s3074] sm:$0xff]
        %v3077 = vcombine.high %v3075, %v3075
        %v3079 = vunpack.c.l.s4 1983009808
        %v3080 = vunpack.c.0.s8 %v3079
        %v3081 = vlaneseq
        %v3082 = vshrl.u32 %v3081, 7
        %v3083 = vsub.s32 %v3080, %v3082
        %v3084 = vrot.slane %v3075, %v3083
        %v3086 = vunpack.c.l.s4 1983009808
        %v3087 = vunpack.c.0.s8 %v3086
        %v3088 = vlaneseq
        %v3089 = vshrl.u32 %v3088, 7
        %v3090 = vsub.s32 %v3087, %v3089
        %v3091 = vrot.slane %v3077, %v3090
        %v3092 = vcombine.high %v3084, %v3084
        %v3093 = vcombine.high %v3091, %v3091
        %v3098 = vpack.c.bf16 %v3084, %v3084
        %v3099 = vpack.c.bf16 %v3092, %v3092
        %v3100 = vpack.c.bf16 %v3091, %v3091
        %v3101 = vpack.c.bf16 %v3093, %v3093
        %v3102 = vld [vmem:[#allocation6] sm:$0xff]
        %v3103 = vld [vmem:[%s365] sm:$0xff]
        %v3104 = vld [vmem:[%s365 + $0x8] sm:$0xff]
        %v3105 = vld [vmem:[%s365 + $0x10] sm:$0xff]
        %v3106 = vld [vmem:[%s365 + $0x18] sm:$0xff]
        %v3107 = vld [vmem:[%s365 + $0x20] sm:$0xff]
        %v3108 = vld [vmem:[%s365 + $0x28] sm:$0xff]
        %v3109 = vld [vmem:[%s365 + $0x30] sm:$0xff]
        %v3110 = vld [vmem:[%s365 + $0x38] sm:$0xff]
        %v3111 = vld [vmem:[%s365 + $0x40] sm:$0xff]
        %v3112 = vld [vmem:[%s365 + $0x48] sm:$0xff]
        %v3113 = vld [vmem:[%s365 + $0x50] sm:$0xff]
        %v3114 = vld [vmem:[%s365 + $0x58] sm:$0xff]
        %v3115 = vld [vmem:[%s365 + $0x60] sm:$0xff]
        %v3116 = vld [vmem:[%s365 + $0x68] sm:$0xff]
        %v3117 = vld [vmem:[%s365 + $0x70] sm:$0xff]
        %v3118 = vld [vmem:[%s365 + $0x78] sm:$0xff]
        %v3119 = vld [vmem:[%s365 + $0x80] sm:$0xff]
        %v3120 = vld [vmem:[%s365 + $0x88] sm:$0xff]
        %v3121 = vld [vmem:[%s365 + $0x90] sm:$0xff]
        %v3122 = vld [vmem:[%s365 + $0x98] sm:$0xff]
        %v3123 = vld [vmem:[%s365 + $0xa0] sm:$0xff]
        %v3124 = vld [vmem:[%s365 + $0xa8] sm:$0xff]
        %v3125 = vld [vmem:[%s365 + $0xb0] sm:$0xff]
        %v3126 = vld [vmem:[%s365 + $0xb8] sm:$0xff]
        %v3127 = vld [vmem:[%s365 + $0xc0] sm:$0xff]
        %v3128 = vld [vmem:[%s365 + $0xc8] sm:$0xff]
        %v3129 = vld [vmem:[%s365 + $0xd0] sm:$0xff]
        %v3130 = vld [vmem:[%s365 + $0xd8] sm:$0xff]
        %v3131 = vld [vmem:[%s365 + $0xe0] sm:$0xff]
        %v3132 = vld [vmem:[%s365 + $0xe8] sm:$0xff]
        %v3133 = vld [vmem:[%s365 + $0xf0] sm:$0xff]
        %v3134 = vld [vmem:[%s365 + $0xf8] sm:$0xff]
        %v3135 = vld [vmem:[%s365 + $0x100] sm:$0xff]
        %v3136 = vld [vmem:[%s365 + $0x108] sm:$0xff]
        %v3137 = vld [vmem:[%s365 + $0x110] sm:$0xff]
        %v3138 = vld [vmem:[%s365 + $0x118] sm:$0xff]
        %v3139 = vld [vmem:[%s365 + $0x120] sm:$0xff]
        %v3140 = vld [vmem:[%s365 + $0x128] sm:$0xff]
        %v3141 = vld [vmem:[%s365 + $0x130] sm:$0xff]
        %v3142 = vld [vmem:[%s365 + $0x138] sm:$0xff]
        %v3143 = vld [vmem:[%s365 + $0x140] sm:$0xff]
        %v3144 = vld [vmem:[%s365 + $0x148] sm:$0xff]
        %v3145 = vld [vmem:[%s365 + $0x150] sm:$0xff]
        %v3146 = vld [vmem:[%s365 + $0x158] sm:$0xff]
        %v3147 = vld [vmem:[%s365 + $0x160] sm:$0xff]
        %v3148 = vld [vmem:[%s365 + $0x168] sm:$0xff]
        %v3149 = vld [vmem:[%s365 + $0x170] sm:$0xff]
        %v3150 = vld [vmem:[%s365 + $0x178] sm:$0xff]
        %v3151 = vld [vmem:[%s365 + $0x180] sm:$0xff]
        %v3152 = vld [vmem:[%s365 + $0x188] sm:$0xff]
        %v3153 = vld [vmem:[%s365 + $0x190] sm:$0xff]
        %v3154 = vld [vmem:[%s365 + $0x198] sm:$0xff]
        %v3155 = vld [vmem:[%s365 + $0x1a0] sm:$0xff]
        %v3156 = vld [vmem:[%s365 + $0x1a8] sm:$0xff]
        %v3157 = vld [vmem:[%s365 + $0x1b0] sm:$0xff]
        %v3158 = vld [vmem:[%s365 + $0x1b8] sm:$0xff]
        %v3159 = vld [vmem:[%s365 + $0x1c0] sm:$0xff]
        %v3160 = vld [vmem:[%s365 + $0x1c8] sm:$0xff]
        %v3161 = vld [vmem:[%s365 + $0x1d0] sm:$0xff]
        %v3162 = vld [vmem:[%s365 + $0x1d8] sm:$0xff]
        %v3163 = vld [vmem:[%s365 + $0x1e0] sm:$0xff]
        %v3164 = vld [vmem:[%s365 + $0x1e8] sm:$0xff]
        %v3165 = vld [vmem:[%s365 + $0x1f0] sm:$0xff]
        %v3166 = vld [vmem:[%s365 + $0x1f8] sm:$0xff]
        %v3167 = vld [vmem:[%s365 + $0x200] sm:$0xff]
        %v3168 = vld [vmem:[%s365 + $0x208] sm:$0xff]
        %v3169 = vld [vmem:[%s365 + $0x210] sm:$0xff]
        %v3170 = vld [vmem:[%s365 + $0x218] sm:$0xff]
        %v3171 = vld [vmem:[%s365 + $0x220] sm:$0xff]
        %v3172 = vld [vmem:[%s365 + $0x228] sm:$0xff]
        %v3173 = vld [vmem:[%s365 + $0x230] sm:$0xff]
        %v3174 = vld [vmem:[%s365 + $0x238] sm:$0xff]
        %v3175 = vld [vmem:[%s365 + $0x240] sm:$0xff]
        %v3176 = vld [vmem:[%s365 + $0x248] sm:$0xff]
        %v3177 = vld [vmem:[%s365 + $0x250] sm:$0xff]
        %v3178 = vld [vmem:[%s365 + $0x258] sm:$0xff]
        %v3179 = vld [vmem:[%s365 + $0x260] sm:$0xff]
        %v3180 = vld [vmem:[%s365 + $0x268] sm:$0xff]
        %v3181 = vld [vmem:[%s365 + $0x270] sm:$0xff]
        %v3182 = vld [vmem:[%s365 + $0x278] sm:$0xff]
        %v3183 = vld [vmem:[%s365 + $0x280] sm:$0xff]
        %v3184 = vld [vmem:[%s365 + $0x288] sm:$0xff]
        %v3185 = vld [vmem:[%s365 + $0x290] sm:$0xff]
        %v3186 = vld [vmem:[%s365 + $0x298] sm:$0xff]
        %v3187 = vld [vmem:[%s365 + $0x2a0] sm:$0xff]
        %v3188 = vld [vmem:[%s365 + $0x2a8] sm:$0xff]
        %v3189 = vld [vmem:[%s365 + $0x2b0] sm:$0xff]
        %v3190 = vld [vmem:[%s365 + $0x2b8] sm:$0xff]
        %v3191 = vld [vmem:[%s365 + $0x2c0] sm:$0xff]
        %v3192 = vld [vmem:[%s365 + $0x2c8] sm:$0xff]
        %v3193 = vld [vmem:[%s365 + $0x2d0] sm:$0xff]
        %v3194 = vld [vmem:[%s365 + $0x2d8] sm:$0xff]
        %v3195 = vld [vmem:[%s365 + $0x2e0] sm:$0xff]
        %v3196 = vld [vmem:[%s365 + $0x2e8] sm:$0xff]
        %v3197 = vld [vmem:[%s365 + $0x2f0] sm:$0xff]
        %v3198 = vld [vmem:[%s365 + $0x2f8] sm:$0xff]
        %v3199 = vld [vmem:[%s365 + $0x300] sm:$0xff]
        %v3200 = vld [vmem:[%s365 + $0x308] sm:$0xff]
        %v3201 = vld [vmem:[%s365 + $0x310] sm:$0xff]
        %v3202 = vld [vmem:[%s365 + $0x318] sm:$0xff]
        %v3203 = vld [vmem:[%s365 + $0x320] sm:$0xff]
        %v3204 = vld [vmem:[%s365 + $0x328] sm:$0xff]
        %v3205 = vld [vmem:[%s365 + $0x330] sm:$0xff]
        %v3206 = vld [vmem:[%s365 + $0x338] sm:$0xff]
        %v3207 = vld [vmem:[%s365 + $0x340] sm:$0xff]
        %v3208 = vld [vmem:[%s365 + $0x348] sm:$0xff]
        %v3209 = vld [vmem:[%s365 + $0x350] sm:$0xff]
        %v3210 = vld [vmem:[%s365 + $0x358] sm:$0xff]
        %v3211 = vld [vmem:[%s365 + $0x360] sm:$0xff]
        %v3212 = vld [vmem:[%s365 + $0x368] sm:$0xff]
        %v3213 = vld [vmem:[%s365 + $0x370] sm:$0xff]
        %v3214 = vld [vmem:[%s365 + $0x378] sm:$0xff]
        %v3215 = vld [vmem:[%s365 + $0x380] sm:$0xff]
        %v3216 = vld [vmem:[%s365 + $0x388] sm:$0xff]
        %v3217 = vld [vmem:[%s365 + $0x390] sm:$0xff]
        %v3218 = vld [vmem:[%s365 + $0x398] sm:$0xff]
        %v3219 = vld [vmem:[%s365 + $0x3a0] sm:$0xff]
        %v3220 = vld [vmem:[%s365 + $0x3a8] sm:$0xff]
        %v3221 = vld [vmem:[%s365 + $0x3b0] sm:$0xff]
        %v3222 = vld [vmem:[%s365 + $0x3b8] sm:$0xff]
        %v3223 = vld [vmem:[%s365 + $0x3c0] sm:$0xff]
        %v3224 = vld [vmem:[%s365 + $0x3c8] sm:$0xff]
        %v3225 = vld [vmem:[%s365 + $0x3d0] sm:$0xff]
        %v3226 = vld [vmem:[%s365 + $0x3d8] sm:$0xff]
        %v3227 = vld [vmem:[%s365 + $0x3e0] sm:$0xff]
        %v3228 = vld [vmem:[%s365 + $0x3e8] sm:$0xff]
        %v3229 = vld [vmem:[%s365 + $0x3f0] sm:$0xff]
        %v3230 = vld [vmem:[%s365 + $0x3f8] sm:$0xff]
        %v3359 = vunpack.c.l.b16 %v3103
        %v3360 = vunpack.c.h.b16 %v3103
        %v3361 = vunpack.c.l.b16 %v3104
        %v3362 = vunpack.c.h.b16 %v3104
        %v3363 = vunpack.c.l.b16 %v3105
        %v3364 = vunpack.c.h.b16 %v3105
        %v3365 = vunpack.c.l.b16 %v3106
        %v3366 = vunpack.c.h.b16 %v3106
        %v3367 = vunpack.c.l.b16 %v3107
        %v3368 = vunpack.c.h.b16 %v3107
        %v3369 = vunpack.c.l.b16 %v3108
        %v3370 = vunpack.c.h.b16 %v3108
        %v3371 = vunpack.c.l.b16 %v3109
        %v3372 = vunpack.c.h.b16 %v3109
        %v3373 = vunpack.c.l.b16 %v3110
        %v3374 = vunpack.c.h.b16 %v3110
        %v3375 = vunpack.c.l.b16 %v3111
        %v3376 = vunpack.c.h.b16 %v3111
        %v3377 = vunpack.c.l.b16 %v3112
        %v3378 = vunpack.c.h.b16 %v3112
        %v3379 = vunpack.c.l.b16 %v3113
        %v3380 = vunpack.c.h.b16 %v3113
        %v3381 = vunpack.c.l.b16 %v3114
        %v3382 = vunpack.c.h.b16 %v3114
        %v3383 = vunpack.c.l.b16 %v3115
        %v3384 = vunpack.c.h.b16 %v3115
        %v3385 = vunpack.c.l.b16 %v3116
        %v3386 = vunpack.c.h.b16 %v3116
        %v3387 = vunpack.c.l.b16 %v3117
        %v3388 = vunpack.c.h.b16 %v3117
        %v3389 = vunpack.c.l.b16 %v3118
        %v3390 = vunpack.c.h.b16 %v3118
        %v3391 = vunpack.c.l.b16 %v3119
        %v3392 = vunpack.c.h.b16 %v3119
        %v3393 = vunpack.c.l.b16 %v3120
        %v3394 = vunpack.c.h.b16 %v3120
        %v3395 = vunpack.c.l.b16 %v3121
        %v3396 = vunpack.c.h.b16 %v3121
        %v3397 = vunpack.c.l.b16 %v3122
        %v3398 = vunpack.c.h.b16 %v3122
        %v3399 = vunpack.c.l.b16 %v3123
        %v3400 = vunpack.c.h.b16 %v3123
        %v3401 = vunpack.c.l.b16 %v3124
        %v3402 = vunpack.c.h.b16 %v3124
        %v3403 = vunpack.c.l.b16 %v3125
        %v3404 = vunpack.c.h.b16 %v3125
        %v3405 = vunpack.c.l.b16 %v3126
        %v3406 = vunpack.c.h.b16 %v3126
        %v3407 = vunpack.c.l.b16 %v3127
        %v3408 = vunpack.c.h.b16 %v3127
        %v3409 = vunpack.c.l.b16 %v3128
        %v3410 = vunpack.c.h.b16 %v3128
        %v3411 = vunpack.c.l.b16 %v3129
        %v3412 = vunpack.c.h.b16 %v3129
        %v3413 = vunpack.c.l.b16 %v3130
        %v3414 = vunpack.c.h.b16 %v3130
        %v3415 = vunpack.c.l.b16 %v3131
        %v3416 = vunpack.c.h.b16 %v3131
        %v3417 = vunpack.c.l.b16 %v3132
        %v3418 = vunpack.c.h.b16 %v3132
        %v3419 = vunpack.c.l.b16 %v3133
        %v3420 = vunpack.c.h.b16 %v3133
        %v3421 = vunpack.c.l.b16 %v3134
        %v3422 = vunpack.c.h.b16 %v3134
        %v3423 = vunpack.c.l.b16 %v3135
        %v3424 = vunpack.c.h.b16 %v3135
        %v3425 = vunpack.c.l.b16 %v3136
        %v3426 = vunpack.c.h.b16 %v3136
        %v3427 = vunpack.c.l.b16 %v3137
        %v3428 = vunpack.c.h.b16 %v3137
        %v3429 = vunpack.c.l.b16 %v3138
        %v3430 = vunpack.c.h.b16 %v3138
        %v3431 = vunpack.c.l.b16 %v3139
        %v3432 = vunpack.c.h.b16 %v3139
        %v3433 = vunpack.c.l.b16 %v3140
        %v3434 = vunpack.c.h.b16 %v3140
        %v3435 = vunpack.c.l.b16 %v3141
        %v3436 = vunpack.c.h.b16 %v3141
        %v3437 = vunpack.c.l.b16 %v3142
        %v3438 = vunpack.c.h.b16 %v3142
        %v3439 = vunpack.c.l.b16 %v3143
        %v3440 = vunpack.c.h.b16 %v3143
        %v3441 = vunpack.c.l.b16 %v3144
        %v3442 = vunpack.c.h.b16 %v3144
        %v3443 = vunpack.c.l.b16 %v3145
        %v3444 = vunpack.c.h.b16 %v3145
        %v3445 = vunpack.c.l.b16 %v3146
        %v3446 = vunpack.c.h.b16 %v3146
        %v3447 = vunpack.c.l.b16 %v3147
        %v3448 = vunpack.c.h.b16 %v3147
        %v3449 = vunpack.c.l.b16 %v3148
        %v3450 = vunpack.c.h.b16 %v3148
        %v3451 = vunpack.c.l.b16 %v3149
        %v3452 = vunpack.c.h.b16 %v3149
        %v3453 = vunpack.c.l.b16 %v3150
        %v3454 = vunpack.c.h.b16 %v3150
        %v3455 = vunpack.c.l.b16 %v3151
        %v3456 = vunpack.c.h.b16 %v3151
        %v3457 = vunpack.c.l.b16 %v3152
        %v3458 = vunpack.c.h.b16 %v3152
        %v3459 = vunpack.c.l.b16 %v3153
        %v3460 = vunpack.c.h.b16 %v3153
        %v3461 = vunpack.c.l.b16 %v3154
        %v3462 = vunpack.c.h.b16 %v3154
        %v3463 = vunpack.c.l.b16 %v3155
        %v3464 = vunpack.c.h.b16 %v3155
        %v3465 = vunpack.c.l.b16 %v3156
        %v3466 = vunpack.c.h.b16 %v3156
        %v3467 = vunpack.c.l.b16 %v3157
        %v3468 = vunpack.c.h.b16 %v3157
        %v3469 = vunpack.c.l.b16 %v3158
        %v3470 = vunpack.c.h.b16 %v3158
        %v3471 = vunpack.c.l.b16 %v3159
        %v3472 = vunpack.c.h.b16 %v3159
        %v3473 = vunpack.c.l.b16 %v3160
        %v3474 = vunpack.c.h.b16 %v3160
        %v3475 = vunpack.c.l.b16 %v3161
        %v3476 = vunpack.c.h.b16 %v3161
        %v3477 = vunpack.c.l.b16 %v3162
        %v3478 = vunpack.c.h.b16 %v3162
        %v3479 = vunpack.c.l.b16 %v3163
        %v3480 = vunpack.c.h.b16 %v3163
        %v3481 = vunpack.c.l.b16 %v3164
        %v3482 = vunpack.c.h.b16 %v3164
        %v3483 = vunpack.c.l.b16 %v3165
        %v3484 = vunpack.c.h.b16 %v3165
        %v3485 = vunpack.c.l.b16 %v3166
        %v3486 = vunpack.c.h.b16 %v3166
        %v3487 = vunpack.c.l.b16 %v3167
        %v3488 = vunpack.c.h.b16 %v3167
        %v3489 = vunpack.c.l.b16 %v3168
        %v3490 = vunpack.c.h.b16 %v3168
        %v3491 = vunpack.c.l.b16 %v3169
        %v3492 = vunpack.c.h.b16 %v3169
        %v3493 = vunpack.c.l.b16 %v3170
        %v3494 = vunpack.c.h.b16 %v3170
        %v3495 = vunpack.c.l.b16 %v3171
        %v3496 = vunpack.c.h.b16 %v3171
        %v3497 = vunpack.c.l.b16 %v3172
        %v3498 = vunpack.c.h.b16 %v3172
        %v3499 = vunpack.c.l.b16 %v3173
        %v3500 = vunpack.c.h.b16 %v3173
        %v3501 = vunpack.c.l.b16 %v3174
        %v3502 = vunpack.c.h.b16 %v3174
        %v3503 = vunpack.c.l.b16 %v3175
        %v3504 = vunpack.c.h.b16 %v3175
        %v3505 = vunpack.c.l.b16 %v3176
        %v3506 = vunpack.c.h.b16 %v3176
        %v3507 = vunpack.c.l.b16 %v3177
        %v3508 = vunpack.c.h.b16 %v3177
        %v3509 = vunpack.c.l.b16 %v3178
        %v3510 = vunpack.c.h.b16 %v3178
        %v3511 = vunpack.c.l.b16 %v3179
        %v3512 = vunpack.c.h.b16 %v3179
        %v3513 = vunpack.c.l.b16 %v3180
        %v3514 = vunpack.c.h.b16 %v3180
        %v3515 = vunpack.c.l.b16 %v3181
        %v3516 = vunpack.c.h.b16 %v3181
        %v3517 = vunpack.c.l.b16 %v3182
        %v3518 = vunpack.c.h.b16 %v3182
        %v3519 = vunpack.c.l.b16 %v3183
        %v3520 = vunpack.c.h.b16 %v3183
        %v3521 = vunpack.c.l.b16 %v3184
        %v3522 = vunpack.c.h.b16 %v3184
        %v3523 = vunpack.c.l.b16 %v3185
        %v3524 = vunpack.c.h.b16 %v3185
        %v3525 = vunpack.c.l.b16 %v3186
        %v3526 = vunpack.c.h.b16 %v3186
        %v3527 = vunpack.c.l.b16 %v3187
        %v3528 = vunpack.c.h.b16 %v3187
        %v3529 = vunpack.c.l.b16 %v3188
        %v3530 = vunpack.c.h.b16 %v3188
        %v3531 = vunpack.c.l.b16 %v3189
        %v3532 = vunpack.c.h.b16 %v3189
        %v3533 = vunpack.c.l.b16 %v3190
        %v3534 = vunpack.c.h.b16 %v3190
        %v3535 = vunpack.c.l.b16 %v3191
        %v3536 = vunpack.c.h.b16 %v3191
        %v3537 = vunpack.c.l.b16 %v3192
        %v3538 = vunpack.c.h.b16 %v3192
        %v3539 = vunpack.c.l.b16 %v3193
        %v3540 = vunpack.c.h.b16 %v3193
        %v3541 = vunpack.c.l.b16 %v3194
        %v3542 = vunpack.c.h.b16 %v3194
        %v3543 = vunpack.c.l.b16 %v3195
        %v3544 = vunpack.c.h.b16 %v3195
        %v3545 = vunpack.c.l.b16 %v3196
        %v3546 = vunpack.c.h.b16 %v3196
        %v3547 = vunpack.c.l.b16 %v3197
        %v3548 = vunpack.c.h.b16 %v3197
        %v3549 = vunpack.c.l.b16 %v3198
        %v3550 = vunpack.c.h.b16 %v3198
        %v3551 = vunpack.c.l.b16 %v3199
        %v3552 = vunpack.c.h.b16 %v3199
        %v3553 = vunpack.c.l.b16 %v3200
        %v3554 = vunpack.c.h.b16 %v3200
        %v3555 = vunpack.c.l.b16 %v3201
        %v3556 = vunpack.c.h.b16 %v3201
        %v3557 = vunpack.c.l.b16 %v3202
        %v3558 = vunpack.c.h.b16 %v3202
        %v3559 = vunpack.c.l.b16 %v3203
        %v3560 = vunpack.c.h.b16 %v3203
        %v3561 = vunpack.c.l.b16 %v3204
        %v3562 = vunpack.c.h.b16 %v3204
        %v3563 = vunpack.c.l.b16 %v3205
        %v3564 = vunpack.c.h.b16 %v3205
        %v3565 = vunpack.c.l.b16 %v3206
        %v3566 = vunpack.c.h.b16 %v3206
        %v3567 = vunpack.c.l.b16 %v3207
        %v3568 = vunpack.c.h.b16 %v3207
        %v3569 = vunpack.c.l.b16 %v3208
        %v3570 = vunpack.c.h.b16 %v3208
        %v3571 = vunpack.c.l.b16 %v3209
        %v3572 = vunpack.c.h.b16 %v3209
        %v3573 = vunpack.c.l.b16 %v3210
        %v3574 = vunpack.c.h.b16 %v3210
        %v3575 = vunpack.c.l.b16 %v3211
        %v3576 = vunpack.c.h.b16 %v3211
        %v3577 = vunpack.c.l.b16 %v3212
        %v3578 = vunpack.c.h.b16 %v3212
        %v3579 = vunpack.c.l.b16 %v3213
        %v3580 = vunpack.c.h.b16 %v3213
        %v3581 = vunpack.c.l.b16 %v3214
        %v3582 = vunpack.c.h.b16 %v3214
        %v3583 = vunpack.c.l.b16 %v3215
        %v3584 = vunpack.c.h.b16 %v3215
        %v3585 = vunpack.c.l.b16 %v3216
        %v3586 = vunpack.c.h.b16 %v3216
        %v3587 = vunpack.c.l.b16 %v3217
        %v3588 = vunpack.c.h.b16 %v3217
        %v3589 = vunpack.c.l.b16 %v3218
        %v3590 = vunpack.c.h.b16 %v3218
        %v3591 = vunpack.c.l.b16 %v3219
        %v3592 = vunpack.c.h.b16 %v3219
        %v3593 = vunpack.c.l.b16 %v3220
        %v3594 = vunpack.c.h.b16 %v3220
        %v3595 = vunpack.c.l.b16 %v3221
        %v3596 = vunpack.c.h.b16 %v3221
        %v3597 = vunpack.c.l.b16 %v3222
        %v3598 = vunpack.c.h.b16 %v3222
        %v3599 = vunpack.c.l.b16 %v3223
        %v3600 = vunpack.c.h.b16 %v3223
        %v3601 = vunpack.c.l.b16 %v3224
        %v3602 = vunpack.c.h.b16 %v3224
        %v3603 = vunpack.c.l.b16 %v3225
        %v3604 = vunpack.c.h.b16 %v3225
        %v3605 = vunpack.c.l.b16 %v3226
        %v3606 = vunpack.c.h.b16 %v3226
        %v3607 = vunpack.c.l.b16 %v3227
        %v3608 = vunpack.c.h.b16 %v3227
        %v3609 = vunpack.c.l.b16 %v3228
        %v3610 = vunpack.c.h.b16 %v3228
        %v3611 = vunpack.c.l.b16 %v3229
        %v3612 = vunpack.c.h.b16 %v3229
        %v3613 = vunpack.c.l.b16 %v3230
        %v3614 = vunpack.c.h.b16 %v3230
        %v3615 = vpack.c.b16 %v3363, %v3359
        %v3616 = vpack.c.b16 %v3364, %v3360
        %v3617 = vpack.c.b16 %v3365, %v3361
        %v3618 = vpack.c.b16 %v3366, %v3362
        %v3619 = vpack.c.b16 %v3371, %v3367
        %v3620 = vpack.c.b16 %v3372, %v3368
        %v3621 = vpack.c.b16 %v3373, %v3369
        %v3622 = vpack.c.b16 %v3374, %v3370
        %v3623 = vpack.c.b16 %v3379, %v3375
        %v3624 = vpack.c.b16 %v3380, %v3376
        %v3625 = vpack.c.b16 %v3381, %v3377
        %v3626 = vpack.c.b16 %v3382, %v3378
        %v3627 = vpack.c.b16 %v3387, %v3383
        %v3628 = vpack.c.b16 %v3388, %v3384
        %v3629 = vpack.c.b16 %v3389, %v3385
        %v3630 = vpack.c.b16 %v3390, %v3386
        %v3631 = vpack.c.b16 %v3395, %v3391
        %v3632 = vpack.c.b16 %v3396, %v3392
        %v3633 = vpack.c.b16 %v3397, %v3393
        %v3634 = vpack.c.b16 %v3398, %v3394
        %v3635 = vpack.c.b16 %v3403, %v3399
        %v3636 = vpack.c.b16 %v3404, %v3400
        %v3637 = vpack.c.b16 %v3405, %v3401
        %v3638 = vpack.c.b16 %v3406, %v3402
        %v3639 = vpack.c.b16 %v3411, %v3407
        %v3640 = vpack.c.b16 %v3412, %v3408
        %v3641 = vpack.c.b16 %v3413, %v3409
        %v3642 = vpack.c.b16 %v3414, %v3410
        %v3643 = vpack.c.b16 %v3419, %v3415
        %v3644 = vpack.c.b16 %v3420, %v3416
        %v3645 = vpack.c.b16 %v3421, %v3417
        %v3646 = vpack.c.b16 %v3422, %v3418
        %v3647 = vpack.c.b16 %v3427, %v3423
        %v3648 = vpack.c.b16 %v3428, %v3424
        %v3649 = vpack.c.b16 %v3429, %v3425
        %v3650 = vpack.c.b16 %v3430, %v3426
        %v3651 = vpack.c.b16 %v3435, %v3431
        %v3652 = vpack.c.b16 %v3436, %v3432
        %v3653 = vpack.c.b16 %v3437, %v3433
        %v3654 = vpack.c.b16 %v3438, %v3434
        %v3655 = vpack.c.b16 %v3443, %v3439
        %v3656 = vpack.c.b16 %v3444, %v3440
        %v3657 = vpack.c.b16 %v3445, %v3441
        %v3658 = vpack.c.b16 %v3446, %v3442
        %v3659 = vpack.c.b16 %v3451, %v3447
        %v3660 = vpack.c.b16 %v3452, %v3448
        %v3661 = vpack.c.b16 %v3453, %v3449
        %v3662 = vpack.c.b16 %v3454, %v3450
        %v3663 = vpack.c.b16 %v3459, %v3455
        %v3664 = vpack.c.b16 %v3460, %v3456
        %v3665 = vpack.c.b16 %v3461, %v3457
        %v3666 = vpack.c.b16 %v3462, %v3458
        %v3667 = vpack.c.b16 %v3467, %v3463
        %v3668 = vpack.c.b16 %v3468, %v3464
        %v3669 = vpack.c.b16 %v3469, %v3465
        %v3670 = vpack.c.b16 %v3470, %v3466
        %v3671 = vpack.c.b16 %v3475, %v3471
        %v3672 = vpack.c.b16 %v3476, %v3472
        %v3673 = vpack.c.b16 %v3477, %v3473
        %v3674 = vpack.c.b16 %v3478, %v3474
        %v3675 = vpack.c.b16 %v3483, %v3479
        %v3676 = vpack.c.b16 %v3484, %v3480
        %v3677 = vpack.c.b16 %v3485, %v3481
        %v3678 = vpack.c.b16 %v3486, %v3482
        %v3679 = vpack.c.b16 %v3491, %v3487
        %v3680 = vpack.c.b16 %v3492, %v3488
        %v3681 = vpack.c.b16 %v3493, %v3489
        %v3682 = vpack.c.b16 %v3494, %v3490
        %v3683 = vpack.c.b16 %v3499, %v3495
        %v3684 = vpack.c.b16 %v3500, %v3496
        %v3685 = vpack.c.b16 %v3501, %v3497
        %v3686 = vpack.c.b16 %v3502, %v3498
        %v3687 = vpack.c.b16 %v3507, %v3503
        %v3688 = vpack.c.b16 %v3508, %v3504
        %v3689 = vpack.c.b16 %v3509, %v3505
        %v3690 = vpack.c.b16 %v3510, %v3506
        %v3691 = vpack.c.b16 %v3515, %v3511
        %v3692 = vpack.c.b16 %v3516, %v3512
        %v3693 = vpack.c.b16 %v3517, %v3513
        %v3694 = vpack.c.b16 %v3518, %v3514
        %v3695 = vpack.c.b16 %v3523, %v3519
        %v3696 = vpack.c.b16 %v3524, %v3520
        %v3697 = vpack.c.b16 %v3525, %v3521
        %v3698 = vpack.c.b16 %v3526, %v3522
        %v3699 = vpack.c.b16 %v3531, %v3527
        %v3700 = vpack.c.b16 %v3532, %v3528
        %v3701 = vpack.c.b16 %v3533, %v3529
        %v3702 = vpack.c.b16 %v3534, %v3530
        %v3703 = vpack.c.b16 %v3539, %v3535
        %v3704 = vpack.c.b16 %v3540, %v3536
        %v3705 = vpack.c.b16 %v3541, %v3537
        %v3706 = vpack.c.b16 %v3542, %v3538
        %v3707 = vpack.c.b16 %v3547, %v3543
        %v3708 = vpack.c.b16 %v3548, %v3544
        %v3709 = vpack.c.b16 %v3549, %v3545
        %v3710 = vpack.c.b16 %v3550, %v3546
        %v3711 = vpack.c.b16 %v3555, %v3551
        %v3712 = vpack.c.b16 %v3556, %v3552
        %v3713 = vpack.c.b16 %v3557, %v3553
        %v3714 = vpack.c.b16 %v3558, %v3554
        %v3715 = vpack.c.b16 %v3563, %v3559
        %v3716 = vpack.c.b16 %v3564, %v3560
        %v3717 = vpack.c.b16 %v3565, %v3561
        %v3718 = vpack.c.b16 %v3566, %v3562
        %v3719 = vpack.c.b16 %v3571, %v3567
        %v3720 = vpack.c.b16 %v3572, %v3568
        %v3721 = vpack.c.b16 %v3573, %v3569
        %v3722 = vpack.c.b16 %v3574, %v3570
        %v3723 = vpack.c.b16 %v3579, %v3575
        %v3724 = vpack.c.b16 %v3580, %v3576
        %v3725 = vpack.c.b16 %v3581, %v3577
        %v3726 = vpack.c.b16 %v3582, %v3578
        %v3727 = vpack.c.b16 %v3587, %v3583
        %v3728 = vpack.c.b16 %v3588, %v3584
        %v3729 = vpack.c.b16 %v3589, %v3585
        %v3730 = vpack.c.b16 %v3590, %v3586
        %v3731 = vpack.c.b16 %v3595, %v3591
        %v3732 = vpack.c.b16 %v3596, %v3592
        %v3733 = vpack.c.b16 %v3597, %v3593
        %v3734 = vpack.c.b16 %v3598, %v3594
        %v3735 = vpack.c.b16 %v3603, %v3599
        %v3736 = vpack.c.b16 %v3604, %v3600
        %v3737 = vpack.c.b16 %v3605, %v3601
        %v3738 = vpack.c.b16 %v3606, %v3602
        %v3739 = vpack.c.b16 %v3611, %v3607
        %v3740 = vpack.c.b16 %v3612, %v3608
        %v3741 = vpack.c.b16 %v3613, %v3609
        %v3742 = vpack.c.b16 %v3614, %v3610
        %3871 = vmatprep.subr.bf16.mxu0 %v3616
        %3872 = vmatpush1.bf16.msra.mxu0 %v3615
        %3873 = vmatprep.subr.bf16.mxu0 %v3620
        %3874 = vmatpush1.bf16.msra.mxu0 %v3619
        %3875 = vmatprep.subr.bf16.mxu0 %v3624
        %3876 = vmatpush1.bf16.msra.mxu0 %v3623
        %3877 = vmatprep.subr.bf16.mxu0 %v3628
        %3878 = vmatpush1.bf16.msra.mxu0 %v3627
        %3879 = vmatprep.subr.bf16.mxu0 %v3632
        %3880 = vmatpush1.bf16.msra.mxu0 %v3631
        %3881 = vmatprep.subr.bf16.mxu0 %v3636
        %3882 = vmatpush1.bf16.msra.mxu0 %v3635
        %3883 = vmatprep.subr.bf16.mxu0 %v3640
        %3884 = vmatpush1.bf16.msra.mxu0 %v3639
        %3885 = vmatprep.subr.bf16.mxu0 %v3644
        %3886 = vmatpush1.bf16.msra.mxu0 %v3643
        %3887 = vmatprep.subr.bf16.mxu0 %v3648
        %3888 = vmatpush1.bf16.msra.mxu0 %v3647
        %3889 = vmatprep.subr.bf16.mxu0 %v3652
        %3890 = vmatpush1.bf16.msra.mxu0 %v3651
        %3891 = vmatprep.subr.bf16.mxu0 %v3656
        %3892 = vmatpush1.bf16.msra.mxu0 %v3655
        %3893 = vmatprep.subr.bf16.mxu0 %v3660
        %3894 = vmatpush1.bf16.msra.mxu0 %v3659
        %3895 = vmatprep.subr.bf16.mxu0 %v3664
        %3896 = vmatpush1.bf16.msra.mxu0 %v3663
        %3897 = vmatprep.subr.bf16.mxu0 %v3668
        %3898 = vmatpush1.bf16.msra.mxu0 %v3667
        %3899 = vmatprep.subr.bf16.mxu0 %v3672
        %3900 = vmatpush1.bf16.msra.mxu0 %v3671
        %3901 = vmatprep.subr.bf16.mxu0 %v3676
        %3902 = vmatpush1.bf16.msra.mxu0 %v3675
        %3903 = vmatprep.mubr.bf16.mxu0 %v3099
        %3904 = vmatmul.mubr.bf16.gmra.mrb[0].mxu0 %v3098
        %v3905 = vpop.f32.mrb[0].mxu0
        %v3906 = vadd.f32 0.0, %v3905
        %v3907 = vpop.f32.mrb[0].mxu0
        %v3908 = vadd.f32 0.0, %v3907
        %v3909 = vpop.f32.mrb[0].mxu0
        %v3910 = vpop.f32.mrb[0].mxu0
        %3911 = vdwg.mxu0
        %3912 = vmatprep.subr.bf16.mxu0 %v3680
        %3913 = vmatpush1.bf16.msra.mxu0 %v3679
        %3914 = vmatprep.subr.bf16.mxu0 %v3684
        %3915 = vmatpush1.bf16.msra.mxu0 %v3683
        %3916 = vmatprep.subr.bf16.mxu0 %v3688
        %3917 = vmatpush1.bf16.msra.mxu0 %v3687
        %3918 = vmatprep.subr.bf16.mxu0 %v3692
        %3919 = vmatpush1.bf16.msra.mxu0 %v3691
        %3920 = vmatprep.subr.bf16.mxu0 %v3696
        %3921 = vmatpush1.bf16.msra.mxu0 %v3695
        %3922 = vmatprep.subr.bf16.mxu0 %v3700
        %3923 = vmatpush1.bf16.msra.mxu0 %v3699
        %3924 = vmatprep.subr.bf16.mxu0 %v3704
        %3925 = vmatpush1.bf16.msra.mxu0 %v3703
        %3926 = vmatprep.subr.bf16.mxu0 %v3708
        %3927 = vmatpush1.bf16.msra.mxu0 %v3707
        %3928 = vmatprep.subr.bf16.mxu0 %v3712
        %3929 = vmatpush1.bf16.msra.mxu0 %v3711
        %3930 = vmatprep.subr.bf16.mxu0 %v3716
        %3931 = vmatpush1.bf16.msra.mxu0 %v3715
        %3932 = vmatprep.subr.bf16.mxu0 %v3720
        %3933 = vmatpush1.bf16.msra.mxu0 %v3719
        %3934 = vmatprep.subr.bf16.mxu0 %v3724
        %3935 = vmatpush1.bf16.msra.mxu0 %v3723
        %3936 = vmatprep.subr.bf16.mxu0 %v3728
        %3937 = vmatpush1.bf16.msra.mxu0 %v3727
        %3938 = vmatprep.subr.bf16.mxu0 %v3732
        %3939 = vmatpush1.bf16.msra.mxu0 %v3731
        %3940 = vmatprep.subr.bf16.mxu0 %v3736
        %3941 = vmatpush1.bf16.msra.mxu0 %v3735
        %3942 = vmatprep.subr.bf16.mxu0 %v3740
        %3943 = vmatpush1.bf16.msra.mxu0 %v3739
        %3944 = vmatprep.mubr.bf16.mxu0 %v3101
        %3945 = vmatmul.mubr.bf16.gmra.mrb[0].mxu0 %v3100
        %v3946 = vpop.f32.mrb[0].mxu0
        %v3947 = vadd.f32 %v3906, %v3946
        %v3948 = vpop.f32.mrb[0].mxu0
        %v3949 = vadd.f32 %v3908, %v3948
        %v3950 = vpop.f32.mrb[0].mxu0
        %v3951 = vpop.f32.mrb[0].mxu0
        %3952 = vdwg.mxu0
        %3953 = vmatprep.subr.bf16.mxu0 %v3618
        %3954 = vmatpush1.bf16.msra.mxu0 %v3617
        %3955 = vmatprep.subr.bf16.mxu0 %v3622
        %3956 = vmatpush1.bf16.msra.mxu0 %v3621
        %3957 = vmatprep.subr.bf16.mxu0 %v3626
        %3958 = vmatpush1.bf16.msra.mxu0 %v3625
        %3959 = vmatprep.subr.bf16.mxu0 %v3630
        %3960 = vmatpush1.bf16.msra.mxu0 %v3629
        %3961 = vmatprep.subr.bf16.mxu0 %v3634
        %3962 = vmatpush1.bf16.msra.mxu0 %v3633
        %3963 = vmatprep.subr.bf16.mxu0 %v3638
        %3964 = vmatpush1.bf16.msra.mxu0 %v3637
        %3965 = vmatprep.subr.bf16.mxu0 %v3642
        %3966 = vmatpush1.bf16.msra.mxu0 %v3641
        %3967 = vmatprep.subr.bf16.mxu0 %v3646
        %3968 = vmatpush1.bf16.msra.mxu0 %v3645
        %3969 = vmatprep.subr.bf16.mxu0 %v3650
        %3970 = vmatpush1.bf16.msra.mxu0 %v3649
        %3971 = vmatprep.subr.bf16.mxu0 %v3654
        %3972 = vmatpush1.bf16.msra.mxu0 %v3653
        %3973 = vmatprep.subr.bf16.mxu0 %v3658
        %3974 = vmatpush1.bf16.msra.mxu0 %v3657
        %3975 = vmatprep.subr.bf16.mxu0 %v3662
        %3976 = vmatpush1.bf16.msra.mxu0 %v3661
        %3977 = vmatprep.subr.bf16.mxu0 %v3666
        %3978 = vmatpush1.bf16.msra.mxu0 %v3665
        %3979 = vmatprep.subr.bf16.mxu0 %v3670
        %3980 = vmatpush1.bf16.msra.mxu0 %v3669
        %3981 = vmatprep.subr.bf16.mxu0 %v3674
        %3982 = vmatpush1.bf16.msra.mxu0 %v3673
        %3983 = vmatprep.subr.bf16.mxu0 %v3678
        %3984 = vmatpush1.bf16.msra.mxu0 %v3677
        %3985 = vmatprep.mubr.bf16.mxu0 %v3099
        %3986 = vmatmul.mubr.bf16.gmra.mrb[0].mxu0 %v3098
        %v3987 = vpop.f32.mrb[0].mxu0
        %v3988 = vadd.f32 0.0, %v3987
        %v3989 = vpop.f32.mrb[0].mxu0
        %v3990 = vadd.f32 0.0, %v3989
        %v3991 = vpop.f32.mrb[0].mxu0
        %v3992 = vpop.f32.mrb[0].mxu0
        %3993 = vdwg.mxu0
        %3994 = vmatprep.subr.bf16.mxu0 %v3682
        %3995 = vmatpush1.bf16.msra.mxu0 %v3681
        %3996 = vmatprep.subr.bf16.mxu0 %v3686
        %3997 = vmatpush1.bf16.msra.mxu0 %v3685
        %3998 = vmatprep.subr.bf16.mxu0 %v3690
        %3999 = vmatpush1.bf16.msra.mxu0 %v3689
        %4000 = vmatprep.subr.bf16.mxu0 %v3694
        %4001 = vmatpush1.bf16.msra.mxu0 %v3693
        %4002 = vmatprep.subr.bf16.mxu0 %v3698
        %4003 = vmatpush1.bf16.msra.mxu0 %v3697
        %4004 = vmatprep.subr.bf16.mxu0 %v3702
        %4005 = vmatpush1.bf16.msra.mxu0 %v3701
        %4006 = vmatprep.subr.bf16.mxu0 %v3706
        %4007 = vmatpush1.bf16.msra.mxu0 %v3705
        %4008 = vmatprep.subr.bf16.mxu0 %v3710
        %4009 = vmatpush1.bf16.msra.mxu0 %v3709
        %4010 = vmatprep.subr.bf16.mxu0 %v3714
        %4011 = vmatpush1.bf16.msra.mxu0 %v3713
        %4012 = vmatprep.subr.bf16.mxu0 %v3718
        %4013 = vmatpush1.bf16.msra.mxu0 %v3717
        %4014 = vmatprep.subr.bf16.mxu0 %v3722
        %4015 = vmatpush1.bf16.msra.mxu0 %v3721
        %4016 = vmatprep.subr.bf16.mxu0 %v3726
        %4017 = vmatpush1.bf16.msra.mxu0 %v3725
        %4018 = vmatprep.subr.bf16.mxu0 %v3730
        %4019 = vmatpush1.bf16.msra.mxu0 %v3729
        %4020 = vmatprep.subr.bf16.mxu0 %v3734
        %4021 = vmatpush1.bf16.msra.mxu0 %v3733
        %4022 = vmatprep.subr.bf16.mxu0 %v3738
        %4023 = vmatpush1.bf16.msra.mxu0 %v3737
        %4024 = vmatprep.subr.bf16.mxu0 %v3742
        %4025 = vmatpush1.bf16.msra.mxu0 %v3741
        %4026 = vmatprep.mubr.bf16.mxu0 %v3101
        %4027 = vmatmul.mubr.bf16.gmra.mrb[0].mxu0 %v3100
        %v4028 = vpop.f32.mrb[0].mxu0
        %v4029 = vadd.f32 %v3988, %v4028
        %v4030 = vpop.f32.mrb[0].mxu0
        %v4031 = vadd.f32 %v3990, %v4030
        %v4032 = vpop.f32.mrb[0].mxu0
        %v4033 = vpop.f32.mrb[0].mxu0
        %4034 = vdwg.mxu0
        %v4039 = vcombine.low %v3947, %v3949
        %v4040 = vcombine.low %v4029, %v4031
        %v4042 = vunpack.c.l.s4 1983009808
        %v4043 = vunpack.c.0.s8 %v4042
        %v4044 = vlaneseq
        %v4045 = vshrl.u32 %v4044, 7
        %v4046 = vsub.s32 %v4043, %v4045
        %v4047 = vrot.slane %v4039, %v4046
        %v4049 = vunpack.c.l.s4 1983009808
        %v4050 = vunpack.c.0.s8 %v4049
        %v4051 = vlaneseq
        %v4052 = vshrl.u32 %v4051, 7
        %v4053 = vsub.s32 %v4050, %v4052
        %v4054 = vrot.slane %v4040, %v4053
        %v4055 = vcombine.low %v4047, %v4054
        %v4057 = vadd.f32 %v3102, %v4055
        %4058 = vst [vmem:[#allocation6] sm:$0xff] %v4057
        %p4059 = scmp.eq.s32.totalorder %s27, 2
        // Predicated region
        $region85: #{net_forward.1} parent=55 // pred_check
          %p4060 = pneg %p4059
        $region86: #{net_forward.1} parent=55 // pred_check_branch
          %4062 = sbr.rel (%p4060) target = $region88
        $region87: #{net_forward.1} parent=55 // pred_region
          %v4063 = vld [vmem:[#allocation6] sm:$0xff]
          %v4064 = vld [vmem:[#allocation15] sm:$0xf]
          %v4066 = vlaneseq
          %v4067 = vshrl.u32 %v4066, 7
          %v4068 = vsub.s32 0, %v4067
          %v4069 = vrot.slane %v4064, %v4068
          %v4070 = vlaneseq
          %v4071 = vshrl.u32 %v4070, 7
          %v4072 = vsub.s32 1, %v4071
          %v4073 = vrot.slane %v4064, %v4072
          %v4074 = vlaneseq
          %v4075 = vshrl.u32 %v4074, 7
          %v4076 = vsub.s32 2, %v4075
          %v4077 = vrot.slane %v4064, %v4076
          %v4078 = vlaneseq
          %v4079 = vshrl.u32 %v4078, 7
          %v4080 = vsub.s32 3, %v4079
          %v4081 = vrot.slane %v4064, %v4080
          %v4082 = vcombine.low %v4069, %v4073
          %v4083 = vcombine.low %v4077, %v4081
          %v4085 = vunpack.c.l.s4 1983009808
          %v4086 = vunpack.c.0.s8 %v4085
          %v4087 = vlaneseq
          %v4088 = vshrl.u32 %v4087, 7
          %v4089 = vsub.s32 %v4086, %v4088
          %v4090 = vrot.slane %v4082, %v4089
          %v4092 = vunpack.c.l.s4 1983009808
          %v4093 = vunpack.c.0.s8 %v4092
          %v4094 = vlaneseq
          %v4095 = vshrl.u32 %v4094, 7
          %v4096 = vsub.s32 %v4093, %v4095
          %v4097 = vrot.slane %v4083, %v4096
          %v4098 = vcombine.low %v4090, %v4097
          %v4100 = vadd.f32 %v4063, %v4098
          %v4102 = vcombine.high %v4100, %v4100
          %v4104 = vunpack.c.l.s4 1983009808
          %v4105 = vunpack.c.0.s8 %v4104
          %v4106 = vlaneseq
          %v4107 = vshrl.u32 %v4106, 7
          %v4108 = vsub.s32 %v4105, %v4107
          %v4109 = vrot.slane %v4100, %v4108
          %v4111 = vunpack.c.l.s4 1983009808
          %v4112 = vunpack.c.0.s8 %v4111
          %v4113 = vlaneseq
          %v4114 = vshrl.u32 %v4113, 7
          %v4115 = vsub.s32 %v4112, %v4114
          %v4116 = vrot.slane %v4102, %v4115
          %v4117 = vcombine.high %v4109, %v4109
          %v4118 = vcombine.high %v4116, %v4116
          %vm4123 = vcmask 1041408
          %v4124 = vsel %vm4123, %v4109, -inf
          %v4125 = vsel %vm4123, %v4117, -inf
          %v4126 = vsel %vm4123, %v4116, -inf
          %v4127 = vsel %vm4123, %v4118, -inf
          %v4128 = vmax.f32 %v4124, %v4125
          %v4129 = vmax.f32 %v4126, %v4127
          %v4130 = vmax.f32 %v4128, %v4129
          %4131 = vmax.xlane.f32.xlu0 %v4130
          %v4132 = vpop.xlane.xlu0 %4131
          %v4135 = vunpack.c.l.s4 269488144
          %v4136 = vunpack.c.0.s8 %v4135
          %v4137 = vlaneseq
          %v4138 = vshrl.u32 %v4137, 7
          %v4139 = vsub.s32 %v4136, %v4138
          %v4140 = vrot.slane %v4132, %v4139
          %v4142 = vsub.f32 %v4100, %v4140
          %v4143 = vmul.f32 %v4142, 1.442695
          %v4144 = vpow.pop %v4143
          %v4146 = vcombine.high %v4144, %v4144
          %v4148 = vunpack.c.l.s4 1983009808
          %v4149 = vunpack.c.0.s8 %v4148
          %v4150 = vlaneseq
          %v4151 = vshrl.u32 %v4150, 7
          %v4152 = vsub.s32 %v4149, %v4151
          %v4153 = vrot.slane %v4144, %v4152
          %v4155 = vunpack.c.l.s4 1983009808
          %v4156 = vunpack.c.0.s8 %v4155
          %v4157 = vlaneseq
          %v4158 = vshrl.u32 %v4157, 7
          %v4159 = vsub.s32 %v4156, %v4158
          %v4160 = vrot.slane %v4146, %v4159
          %v4161 = vcombine.high %v4153, %v4153
          %v4162 = vcombine.high %v4160, %v4160
          %v4167 = vsel %vm4123, %v4153, 0.0
          %v4168 = vsel %vm4123, %v4161, 0.0
          %v4169 = vadd.f32 %v4167, %v4168
          %v4170 = vsel %vm4123, %v4160, 0.0
          %v4171 = vadd.f32 %v4169, %v4170
          %v4172 = vsel %vm4123, %v4162, 0.0
          %v4173 = vadd.f32 %v4171, %v4172
          %4174 = vadd.xlane.f32.xlu0 %v4173
          %v4175 = vpop.xlane.xlu0 %4174
          %v4176 = vrcp.pop %v4175
          %v4179 = vunpack.c.l.s4 269488144
          %v4180 = vunpack.c.0.s8 %v4179
          %v4181 = vlaneseq
          %v4182 = vshrl.u32 %v4181, 7
          %v4183 = vsub.s32 %v4180, %v4182
          %v4184 = vrot.slane %v4176, %v4183
          %v4186 = vmul.f32 %v4144, %v4184
          %v4187 = vld [vmem:[%s7] sm:$0xff]
          %v4188 = vld [vmem:[%s7 + $0x8] sm:$0xff]
          %v4189 = vld [vmem:[%s7 + $0x10] sm:$0xff]
          %v4190 = vld [vmem:[%s7 + $0x18] sm:$0xff]
          %v4191 = vld [vmem:[%s7 + $0x20] sm:$0xff]
          %v4192 = vld [vmem:[%s7 + $0x28] sm:$0xff]
          %v4193 = vld [vmem:[%s7 + $0x30] sm:$0xff]
          %v4194 = vld [vmem:[%s7 + $0x38] sm:$0xff]
          %v4195 = vld [vmem:[%s7 + $0x40] sm:$0xff]
          %v4196 = vld [vmem:[%s7 + $0x48] sm:$0xff]
          %v4197 = vld [vmem:[%s7 + $0x50] sm:$0xff]
          %v4198 = vld [vmem:[%s7 + $0x58] sm:$0xff]
          %v4199 = vld [vmem:[%s7 + $0x60] sm:$0xff]
          %v4200 = vld [vmem:[%s7 + $0x68] sm:$0xff]
          %v4201 = vld [vmem:[%s7 + $0x70] sm:$0xff]
          %v4202 = vld [vmem:[%s7 + $0x78] sm:$0xff]
          %v4203 = vld [vmem:[%s7 + $0x80] sm:$0xff]
          %v4204 = vld [vmem:[%s7 + $0x88] sm:$0xff]
          %v4205 = vld [vmem:[%s7 + $0x90] sm:$0xff]
          %v4206 = vld [vmem:[%s7 + $0x98] sm:$0xff]
          %v4207 = vld [vmem:[%s7 + $0xa0] sm:$0xff]
          %v4208 = vld [vmem:[%s7 + $0xa8] sm:$0xff]
          %v4209 = vld [vmem:[%s7 + $0xb0] sm:$0xff]
          %v4210 = vld [vmem:[%s7 + $0xb8] sm:$0xff]
          %v4211 = vld [vmem:[%s7 + $0xc0] sm:$0xff]
          %v4212 = vld [vmem:[%s7 + $0xc8] sm:$0xff]
          %v4213 = vld [vmem:[%s7 + $0xd0] sm:$0xff]
          %v4214 = vld [vmem:[%s7 + $0xd8] sm:$0xff]
          %v4215 = vld [vmem:[%s7 + $0xe0] sm:$0xff]
          %v4216 = vld [vmem:[%s7 + $0xe8] sm:$0xff]
          %v4217 = vld [vmem:[%s7 + $0xf0] sm:$0xff]
          %v4218 = vld [vmem:[%s7 + $0xf8] sm:$0xff]
          %v4219 = vld [vmem:[%s7 + $0x100] sm:$0xff]
          %v4220 = vld [vmem:[%s7 + $0x108] sm:$0xff]
          %v4221 = vld [vmem:[%s7 + $0x110] sm:$0xff]
          %v4222 = vld [vmem:[%s7 + $0x118] sm:$0xff]
          %v4223 = vld [vmem:[%s7 + $0x120] sm:$0xff]
          %v4224 = vld [vmem:[%s7 + $0x128] sm:$0xff]
          %v4225 = vld [vmem:[%s7 + $0x130] sm:$0xff]
          %v4226 = vld [vmem:[%s7 + $0x138] sm:$0xff]
          %v4227 = vld [vmem:[%s7 + $0x140] sm:$0xff]
          %v4228 = vld [vmem:[%s7 + $0x148] sm:$0xff]
          %v4229 = vld [vmem:[%s7 + $0x150] sm:$0xff]
          %v4230 = vld [vmem:[%s7 + $0x158] sm:$0xff]
          %v4231 = vld [vmem:[%s7 + $0x160] sm:$0xff]
          %v4232 = vld [vmem:[%s7 + $0x168] sm:$0xff]
          %v4233 = vld [vmem:[%s7 + $0x170] sm:$0xff]
          %v4234 = vld [vmem:[%s7 + $0x178] sm:$0xff]
          %v4235 = vld [vmem:[%s7 + $0x180] sm:$0xff]
          %v4236 = vld [vmem:[%s7 + $0x188] sm:$0xff]
          %v4237 = vld [vmem:[%s7 + $0x190] sm:$0xff]
          %v4238 = vld [vmem:[%s7 + $0x198] sm:$0xff]
          %v4239 = vld [vmem:[%s7 + $0x1a0] sm:$0xff]
          %v4240 = vld [vmem:[%s7 + $0x1a8] sm:$0xff]
          %v4241 = vld [vmem:[%s7 + $0x1b0] sm:$0xff]
          %v4242 = vld [vmem:[%s7 + $0x1b8] sm:$0xff]
          %v4243 = vld [vmem:[%s7 + $0x1c0] sm:$0xff]
          %v4244 = vld [vmem:[%s7 + $0x1c8] sm:$0xff]
          %v4245 = vld [vmem:[%s7 + $0x1d0] sm:$0xff]
          %v4246 = vld [vmem:[%s7 + $0x1d8] sm:$0xff]
          %v4247 = vld [vmem:[%s7 + $0x1e0] sm:$0xff]
          %v4248 = vld [vmem:[%s7 + $0x1e8] sm:$0xff]
          %v4249 = vld [vmem:[%s7 + $0x1f0] sm:$0xff]
          %v4250 = vld [vmem:[%s7 + $0x1f8] sm:$0xff]
          %v4251 = vld [vmem:[#allocation16] sm:$0x1]
          %v4253 = vlaneseq
          %v4254 = vshrl.u32 %v4253, 7
          %v4255 = vsub.s32 0, %v4254
          %v4256 = vrot.slane %v4251, %v4255
          %v4259 = vcombine.high %v4186, %v4186
          %v4261 = vunpack.c.l.s4 1983009808
          %v4262 = vunpack.c.0.s8 %v4261
          %v4263 = vlaneseq
          %v4264 = vshrl.u32 %v4263, 7
          %v4265 = vsub.s32 %v4262, %v4264
          %v4266 = vrot.slane %v4186, %v4265
          %v4268 = vunpack.c.l.s4 1983009808
          %v4269 = vunpack.c.0.s8 %v4268
          %v4270 = vlaneseq
          %v4271 = vshrl.u32 %v4270, 7
          %v4272 = vsub.s32 %v4269, %v4271
          %v4273 = vrot.slane %v4259, %v4272
          %v4274 = vcombine.high %v4266, %v4266
          %v4275 = vcombine.high %v4273, %v4273
          %4280 = vmatprep.subr.mxu0 0.0
          %4281 = vmatpush1.msra.mxu0 %v4187
          %4282 = vmatprep.subr.mxu0 0.0
          %4283 = vmatpush1.msra.mxu0 %v4188
          %4284 = vmatprep.subr.mxu0 0.0
          %4285 = vmatpush1.msra.mxu0 %v4189
          %4286 = vmatprep.subr.mxu0 0.0
          %4287 = vmatpush1.msra.mxu0 %v4190
          %4288 = vmatprep.subr.mxu0 0.0
          %4289 = vmatpush1.msra.mxu0 %v4191
          %4290 = vmatprep.subr.mxu0 0.0
          %4291 = vmatpush1.msra.mxu0 %v4192
          %4292 = vmatprep.subr.mxu0 0.0
          %4293 = vmatpush1.msra.mxu0 %v4193
          %4294 = vmatprep.subr.mxu0 0.0
          %4295 = vmatpush1.msra.mxu0 %v4194
          %4296 = vmatprep.subr.mxu0 0.0
          %4297 = vmatpush1.msra.mxu0 %v4195
          %4298 = vmatprep.subr.mxu0 0.0
          %4299 = vmatpush1.msra.mxu0 %v4196
          %4300 = vmatprep.subr.mxu0 0.0
          %4301 = vmatpush1.msra.mxu0 %v4197
          %4302 = vmatprep.subr.mxu0 0.0
          %4303 = vmatpush1.msra.mxu0 %v4198
          %4304 = vmatprep.subr.mxu0 0.0
          %4305 = vmatpush1.msra.mxu0 %v4199
          %4306 = vmatprep.subr.mxu0 0.0
          %4307 = vmatpush1.msra.mxu0 %v4200
          %4308 = vmatprep.subr.mxu0 0.0
          %4309 = vmatpush1.msra.mxu0 %v4201
          %4310 = vmatprep.subr.mxu0 0.0
          %4311 = vmatpush1.msra.mxu0 %v4202
          %4312 = vmatprep.subr.mxu0 0.0
          %4313 = vmatpush1.msra.mxu0 %v4203
          %4314 = vmatprep.subr.mxu0 0.0
          %4315 = vmatpush1.msra.mxu0 %v4204
          %4316 = vmatprep.subr.mxu0 0.0
          %4317 = vmatpush1.msra.mxu0 %v4205
          %4318 = vmatprep.subr.mxu0 0.0
          %4319 = vmatpush1.msra.mxu0 %v4206
          %4320 = vmatprep.subr.mxu0 0.0
          %4321 = vmatpush1.msra.mxu0 %v4207
          %4322 = vmatprep.subr.mxu0 0.0
          %4323 = vmatpush1.msra.mxu0 %v4208
          %4324 = vmatprep.subr.mxu0 0.0
          %4325 = vmatpush1.msra.mxu0 %v4209
          %4326 = vmatprep.subr.mxu0 0.0
          %4327 = vmatpush1.msra.mxu0 %v4210
          %4328 = vmatprep.subr.mxu0 0.0
          %4329 = vmatpush1.msra.mxu0 %v4211
          %4330 = vmatprep.subr.mxu0 0.0
          %4331 = vmatpush1.msra.mxu0 %v4212
          %4332 = vmatprep.subr.mxu0 0.0
          %4333 = vmatpush1.msra.mxu0 %v4213
          %4334 = vmatprep.subr.mxu0 0.0
          %4335 = vmatpush1.msra.mxu0 %v4214
          %4336 = vmatprep.subr.mxu0 0.0
          %4337 = vmatpush1.msra.mxu0 %v4215
          %4338 = vmatprep.subr.mxu0 0.0
          %4339 = vmatpush1.msra.mxu0 %v4216
          %4340 = vmatprep.subr.mxu0 0.0
          %4341 = vmatpush1.msra.mxu0 %v4217
          %4342 = vmatprep.subr.mxu0 0.0
          %4343 = vmatpush1.msra.mxu0 %v4218
          %4344 = vmatprep.mubr.f32.mxu0 %v4274
          %4345 = vmatmul.mubr.f32.gmra.mrb[0].mxu0 %v4266
          %v4346 = vpop.f32.mrb[0].mxu0
          %v4347 = vadd.f32 %v4256, %v4346
          %v4348 = vpop.f32.mrb[0].mxu0
          %4349 = vdwg.mxu0
          %4350 = vmatprep.subr.mxu0 0.0
          %4351 = vmatpush1.msra.mxu0 %v4219
          %4352 = vmatprep.subr.mxu0 0.0
          %4353 = vmatpush1.msra.mxu0 %v4220
          %4354 = vmatprep.subr.mxu0 0.0
          %4355 = vmatpush1.msra.mxu0 %v4221
          %4356 = vmatprep.subr.mxu0 0.0
          %4357 = vmatpush1.msra.mxu0 %v4222
          %4358 = vmatprep.subr.mxu0 0.0
          %4359 = vmatpush1.msra.mxu0 %v4223
          %4360 = vmatprep.subr.mxu0 0.0
          %4361 = vmatpush1.msra.mxu0 %v4224
          %4362 = vmatprep.subr.mxu0 0.0
          %4363 = vmatpush1.msra.mxu0 %v4225
          %4364 = vmatprep.subr.mxu0 0.0
          %4365 = vmatpush1.msra.mxu0 %v4226
          %4366 = vmatprep.subr.mxu0 0.0
          %4367 = vmatpush1.msra.mxu0 %v4227
          %4368 = vmatprep.subr.mxu0 0.0
          %4369 = vmatpush1.msra.mxu0 %v4228
          %4370 = vmatprep.subr.mxu0 0.0
          %4371 = vmatpush1.msra.mxu0 %v4229
          %4372 = vmatprep.subr.mxu0 0.0
          %4373 = vmatpush1.msra.mxu0 %v4230
          %4374 = vmatprep.subr.mxu0 0.0
          %4375 = vmatpush1.msra.mxu0 %v4231
          %4376 = vmatprep.subr.mxu0 0.0
          %4377 = vmatpush1.msra.mxu0 %v4232
          %4378 = vmatprep.subr.mxu0 0.0
          %4379 = vmatpush1.msra.mxu0 %v4233
          %4380 = vmatprep.subr.mxu0 0.0
          %4381 = vmatpush1.msra.mxu0 %v4234
          %4382 = vmatprep.subr.mxu0 0.0
          %4383 = vmatpush1.msra.mxu0 %v4235
          %4384 = vmatprep.subr.mxu0 0.0
          %4385 = vmatpush1.msra.mxu0 %v4236
          %4386 = vmatprep.subr.mxu0 0.0
          %4387 = vmatpush1.msra.mxu0 %v4237
          %4388 = vmatprep.subr.mxu0 0.0
          %4389 = vmatpush1.msra.mxu0 %v4238
          %4390 = vmatprep.subr.mxu0 0.0
          %4391 = vmatpush1.msra.mxu0 %v4239
          %4392 = vmatprep.subr.mxu0 0.0
          %4393 = vmatpush1.msra.mxu0 %v4240
          %4394 = vmatprep.subr.mxu0 0.0
          %4395 = vmatpush1.msra.mxu0 %v4241
          %4396 = vmatprep.subr.mxu0 0.0
          %4397 = vmatpush1.msra.mxu0 %v4242
          %4398 = vmatprep.subr.mxu0 0.0
          %4399 = vmatpush1.msra.mxu0 %v4243
          %4400 = vmatprep.subr.mxu0 0.0
          %4401 = vmatpush1.msra.mxu0 %v4244
          %4402 = vmatprep.subr.mxu0 0.0
          %4403 = vmatpush1.msra.mxu0 %v4245
          %4404 = vmatprep.subr.mxu0 0.0
          %4405 = vmatpush1.msra.mxu0 %v4246
          %4406 = vmatprep.subr.mxu0 0.0
          %4407 = vmatpush1.msra.mxu0 %v4247
          %4408 = vmatprep.subr.mxu0 0.0
          %4409 = vmatpush1.msra.mxu0 %v4248
          %4410 = vmatprep.subr.mxu0 0.0
          %4411 = vmatpush1.msra.mxu0 %v4249
          %4412 = vmatprep.subr.mxu0 0.0
          %4413 = vmatpush1.msra.mxu0 %v4250
          %4414 = vmatprep.mubr.f32.mxu0 %v4275
          %4415 = vmatmul.mubr.f32.gmra.mrb[0].mxu0 %v4273
          %v4416 = vpop.f32.mrb[0].mxu0
          %v4417 = vadd.f32 %v4347, %v4416
          %v4418 = vpop.f32.mrb[0].mxu0
          %4419 = vdwg.mxu0
          %vm4420 = vcmask 33792
          %4421 = vst.msk [vmem:[#allocation18] sm:$0x3] %vm4420, %v4417
        $region88: #{net_forward.1} parent=55 // pred_fallthru
          _
        // Predicated region
        $region89: #{net_forward.1} parent=55 // pred_check
          %p4422 = pneg %p234
        $region90: #{net_forward.1} parent=55 // pred_check_branch
          %4424 = sbr.rel (%p4422) target = $region92
        $region91: #{net_forward.1} parent=55 // pred_region
          %s4426 = ssub.s32 32, 32
          %4427 = vsyncadd [#allocation9], %s4426
          %s4429 = sshll.u32 [#allocation18], 4
          %s4430 = int_to_ptr.vmem [resolvable:$true] %s4429
          %4432 = dma.vmem_to_hbm [thread:$0]  %s4430, 32, %s9, [#allocation9]
        $region92: #{net_forward.1} parent=55 // pred_fallthru
          _
        // Predicated region
        $region93: #{net_forward.1} parent=55 // pred_check
          %p4433 = pneg %p234
        $region94: #{net_forward.1} parent=55 // pred_check_branch
          %4435 = sbr.rel (%p4433) target = $region96
        $region95: #{net_forward.1} parent=55 // pred_region
          %4436 = dma.done [#allocation9], 32
        $region96: #{net_forward.1} parent=55 // pred_fallthru
          _
      $region56: #{net_forward.1} parent=5 // pred_fallthru
        _
      %p4437 = scmp.le.s32.totalorder 2, %s22
      // Predicated region
      $region97: #{net_forward.1} parent=5 // pred_check
        %p4438 = pneg %p4437
      $region98: #{net_forward.1} parent=5 // pred_check_branch
        %4440 = sbr.rel (%p4438) target = $region100
      $region99: #{net_forward.1} parent=5 // pred_region
        %s4441 = ssub.s32 %s22, 2
      $region100: #{net_forward.1} parent=5 // pred_fallthru
        _
    $region6: #{net_forward.1} parent=1 // loop_footer
      %s26 = sadd.s32 1, %s22
    $region7: #{net_forward.1} parent=1 // loop_footer_branch
      %21 = sbr.rel target = $region3
    $region8: #{net_forward.1} parent=1 // loop_exit
      _
    %4442 = vsyncpa [#allocation8], 1
    %s4443 = scalar_lea.sflag [#allocation8], 1
    %4444 = vsyncpa %s4443, 1
    %4445 = vsyncpa [#allocation11], 1
    %4446 = vsyncpa [#allocation14], 1
    %s4447 = scalar_lea.sflag [#allocation14], 1
    %4448 = vsyncpa %s4447, 1
    %4449 = vsyncpa [#allocation17], 1
    %4450 = vsyncpa [#allocation9], 1
    %s4451 = scalar_lea.sflag [#allocation9], 1
    %4452 = vsyncpa %s4451, 1

</llo_original>
